<compile_context>
chip_gen: v7x
topology: tpu7x:2x2x1
jax: 0.10.0
libtpu: 0.0.40
codegen_flags: <defaults>
</compile_context>

<pallas_src>
import jax
import jax.numpy as jnp
from jax.experimental import pallas as pl
from jax.experimental.pallas import tpu as pltpu

NUM_FREQ = 12          # multires=12 -> PE with 12 log-sampled freqs 2^0..2^11
PE_LANES = 2 * NUM_FREQ
D_HIDDEN = 128         # SDFNetwork d_hidden
D_SDF_OUT = 6          # SDFNetwork d_out
MLP_HIDDEN = 32        # head MLP hidden width
D_OUT = 4              # head MLP output width (split into 3 + 1)


def _leaky_relu(x):
    # torch.nn.LeakyReLU default negative_slope = 0.01
    return jnp.where(x > 0, x, 0.01 * x)


def _mm(a, w):
    """bf16-operand matmul with f32 accumulation on the MXU."""
    return jnp.dot(a.astype(jnp.bfloat16), w.astype(jnp.bfloat16),
                   preferred_element_type=jnp.float32)


def _naive_model_kernel(z_ref, pe_ref, w0x_ref, w0sc_ref, bsdf_ref,
                        wh_ref, w4_ref, b4_ref,
                        m0_ref, m1_ref, m2_ref, c01_ref, c2_ref,
                        out_ref):
    f32 = jnp.float32
    z = z_ref[...].astype(f32)                         # (tn, 1)

    # --- PE embedding: cos folded into sin via phase (+pi/2), f32 for accuracy
    #     at the large frequencies (2^11 * z).
    freqs = pe_ref[0:1, :]                             # (1, 24) = [f0..f11 | f0..f11]
    phase = pe_ref[1:2, :]                             # (1, 24) = [0 ... 0 | pi/2 ...]
    s24 = jnp.sin(z * freqs + phase)                   # (tn, 24) == [sin | cos]

    # --- SDFNetwork: lin0..lin3 + LeakyReLU, lin4, then Sigmoid (the "field") ---
    h = z * w0x_ref[...] + _mm(s24, w0sc_ref[...]) + bsdf_ref[0:1, :]
    h = _leaky_relu(h)
    h = _leaky_relu(_mm(h, wh_ref[0]) + bsdf_ref[1:2, :])
    h = _leaky_relu(_mm(h, wh_ref[1]) + bsdf_ref[2:3, :])
    h = _leaky_relu(_mm(h, wh_ref[2]) + bsdf_ref[3:4, :])
    sdf = _mm(h, w4_ref[...]) + b4_ref[...]            # (tn, 6)
    rho = jax.nn.sigmoid(sdf)

    # --- head MLP: 6 -> 32 -> 32 -> 4 ---
    h = jnp.maximum(_mm(rho, m0_ref[...]) + c01_ref[0:1, :], 0.0)
    h = jnp.maximum(_mm(h, m1_ref[...]) + c01_ref[1:2, :], 0.0)
    out = _mm(h, m2_ref[...]) + c2_ref[...]            # (tn, 4)

    out_ref[...] = out.astype(out_ref.dtype)


_PARAM_ORDER = ("pe", "w0x", "w0sc", "b_sdf", "w_h", "w4", "b4",
                "m0", "m1", "m2", "c01", "c2")


def _round_up(x, m):
    return ((x + m - 1) // m) * m


def _const_spec(a):
    nd = a.ndim
    return pl.BlockSpec(a.shape, lambda i, _nd=nd: (0,) * _nd)


def naive_model_forward(z, params):
    """Pallas implementation of NaiveModel.forward. Returns (rgb (N,3), sigma (N,1))."""
    n, d_in = z.shape
    assert d_in == 1, "NaiveModel's SDFNetwork is built with d_in=1"

    # Tile selection: single block for tiny batches; otherwise >=2 grid steps so
    # v7x can shard across both TensorCores, capped at 4096 rows per step.
    if n <= 256:
        tile_n = n
        grid_steps = 1
    else:
        grid_steps = max(2, pl.cdiv(n, 4096))
        tile_n = _round_up(pl.cdiv(n, grid_steps), 8)
    n_pad = tile_n * grid_steps

    if n_pad != n:
        z = jnp.pad(z, ((0, n_pad - n), (0, 0)))       # tail rows compute on zeros

    weight_arrays = [params[k] for k in _PARAM_ORDER]
    # All parameters (~110 KiB) stay fully VMEM-resident for every block.
    weight_specs = [_const_spec(a) for a in weight_arrays]

    out = pl.pallas_call(
        _naive_model_kernel,
        out_shape=jax.ShapeDtypeStruct((n_pad, D_OUT), z.dtype),
        grid=(grid_steps,),
        in_specs=[pl.BlockSpec((tile_n, 1), lambda i: (i, 0))] + weight_specs,
        out_specs=pl.BlockSpec((tile_n, D_OUT), lambda i: (i, 0)),
        compiler_params=pltpu.CompilerParams(dimension_semantics=("parallel",)),
    )(z, *weight_arrays)

    out = out[:n]
    # torch.split(out, [3, 1], -1)
    return out[:, :3], out[:, 3:]


def init_params(key):
    """Deterministic parameters mirroring the PyTorch module's layer shapes.
    TODO(synk): torch's orthogonal_/normal_/default Linear inits cannot be
    bit-matched from JAX; shapes are reproduced and values re-initialized
    deterministically with scaled normals."""
    keys = jax.random.split(key, 8)

    def dense(k, fan_in, fan_out, b_scale=0.1):
        kw, kb = jax.random.split(k)
        w = jax.random.normal(kw, (fan_in, fan_out), jnp.float32) / jnp.sqrt(fan_in)
        b = b_scale * jax.random.normal(kb, (1, fan_out), jnp.float32)
        return w, b

    pe_dim = 1 + PE_LANES                               # 25 = include_input + 12*(sin,cos)
    w0, b0 = dense(keys[0], pe_dim, D_HIDDEN)
    w1, b1 = dense(keys[1], D_HIDDEN, D_HIDDEN)
    w2, b2 = dense(keys[2], D_HIDDEN, D_HIDDEN)
    w3, b3 = dense(keys[3], D_HIDDEN, D_HIDDEN)
    w4, b4 = dense(keys[4], D_HIDDEN, D_SDF_OUT)
    m0, c0 = dense(keys[5], D_SDF_OUT, MLP_HIDDEN)
    m1, c1 = dense(keys[6], MLP_HIDDEN, MLP_HIDDEN)
    m2, c2 = dense(keys[7], MLP_HIDDEN, D_OUT)

    freqs = 2.0 ** jnp.arange(NUM_FREQ, dtype=jnp.float32)
    freqs24 = jnp.concatenate([freqs, freqs]).reshape(1, PE_LANES)
    phase24 = jnp.concatenate(
        [jnp.zeros((NUM_FREQ,), jnp.float32),
         jnp.full((NUM_FREQ,), 0.5 * jnp.pi, jnp.float32)]).reshape(1, PE_LANES)

    bf16 = jnp.bfloat16
    return {
        # (2, 24): row 0 = duplicated freq bands, row 1 = phase (0 | pi/2) -> sin/cos fold.
        "pe": jnp.concatenate([freqs24, phase24], axis=0),
        # W0 pre-split by PE feature group: [x | sin(f_k x) | cos(f_k x)].
        "w0x": w0[0:1, :],                                             # f32 (VPU broadcast)
        "w0sc": jnp.concatenate([w0[1:1 + NUM_FREQ, :],
                                 w0[1 + NUM_FREQ:, :]], 0).astype(bf16),   # (24,128)
        "b_sdf": jnp.concatenate([b0, b1, b2, b3], 0),                 # (4,128) f32
        "w_h": jnp.stack([w1, w2, w3], 0).astype(bf16),                # (3,128,128)
        "w4": w4.astype(bf16), "b4": b4,
        "m0": m0.astype(bf16), "m1": m1.astype(bf16), "m2": m2.astype(bf16),
        "c01": jnp.concatenate([c0, c1], 0),                           # (2,32) f32
        "c2": c2,
    }


def naive_model_reference(z, p):
    """Pure-JAX reference with identical (bf16-operand, f32-accumulate) math."""
    freqs, phase = p["pe"][0:1, :], p["pe"][1:2, :]
    s24 = jnp.sin(z * freqs + phase)
    h = z * p["w0x"] + _mm(s24, p["w0sc"]) + p["b_sdf"][0:1, :]
    h = _leaky_relu(h)
    h = _leaky_relu(_mm(h, p["w_h"][0]) + p["b_sdf"][1:2, :])
    h = _leaky_relu(_mm(h, p["w_h"][1]) + p["b_sdf"][2:3, :])
    h = _leaky_relu(_mm(h, p["w_h"][2]) + p["b_sdf"][3:4, :])
    rho = jax.nn.sigmoid(_mm(h, p["w4"]) + p["b4"])
    h = jnp.maximum(_mm(rho, p["m0"]) + p["c01"][0:1, :], 0.0)
    h = jnp.maximum(_mm(h, p["m1"]) + p["c01"][1:2, :], 0.0)
    out = _mm(h, p["m2"]) + p["c2"]
    return out[:, :3], out[:, 3:]


if __name__ == "__main__":
    key = jax.random.PRNGKey(0)
    kz, kz2, kp = jax.random.split(key, 3)
    params = init_params(kp)

    # Small batch: single-block path.
    n = 128
    z = jax.random.normal(kz, (n, 1), dtype=jnp.float32)
    rgb, sigma = jax.block_until_ready(naive_model_forward(z, params))

    assert rgb.shape == (n, 3) and sigma.shape == (n, 1)
    assert rgb.dtype == z.dtype and sigma.dtype == z.dtype
    assert bool(jnp.all(jnp.isfinite(rgb))) and bool(jnp.all(jnp.isfinite(sigma)))
    rgb_ref, sigma_ref = naive_model_reference(z, params)
    assert bool(jnp.allclose(rgb, rgb_ref, atol=1e-2, rtol=1e-2))
    assert bool(jnp.allclose(sigma, sigma_ref, atol=1e-2, rtol=1e-2))

    # Moderate batch: exercises the multi-step grid + tail-padding path.
    n2 = 600
    z2 = jax.random.normal(kz2, (n2, 1), dtype=jnp.float32)
    rgb2, sigma2 = jax.block_until_ready(naive_model_forward(z2, params))
    rgb2_ref, sigma2_ref = naive_model_reference(z2, params)
    assert rgb2.shape == (n2, 3) and sigma2.shape == (n2, 1)
    assert bool(jnp.allclose(rgb2, rgb2_ref, atol=1e-2, rtol=1e-2))
    assert bool(jnp.allclose(sigma2, sigma2_ref, atol=1e-2, rtol=1e-2))

    print("KERNEL_OK")
</pallas_src>

<mosaic_0001>
module attributes {stable_mosaic.version = 11 : i64} {
  func.func @_naive_model_kernel(%arg0: i32, %arg1: memref<128x1xf32, #tpu.memory_space<vmem>>, %arg2: memref<2x24xf32, #tpu.memory_space<vmem>>, %arg3: memref<1x128xf32, #tpu.memory_space<vmem>>, %arg4: memref<24x128xbf16, #tpu.memory_space<vmem>>, %arg5: memref<4x128xf32, #tpu.memory_space<vmem>>, %arg6: memref<3x128x128xbf16, #tpu.memory_space<vmem>>, %arg7: memref<128x6xbf16, #tpu.memory_space<vmem>>, %arg8: memref<1x6xf32, #tpu.memory_space<vmem>>, %arg9: memref<6x32xbf16, #tpu.memory_space<vmem>>, %arg10: memref<32x32xbf16, #tpu.memory_space<vmem>>, %arg11: memref<32x4xbf16, #tpu.memory_space<vmem>>, %arg12: memref<2x32xf32, #tpu.memory_space<vmem>>, %arg13: memref<1x4xf32, #tpu.memory_space<vmem>>, %arg14: memref<128x4xf32, #tpu.memory_space<vmem>>) attributes {dimension_semantics = [#tpu.dimension_semantics<parallel>], iteration_bounds = array<i64: 1>, scalar_prefetch = 0 : i64, scratch_operands = 0 : i64, tpu.core_type = #tpu.core_type<tc>, window_params = [{transform_indices = @transform_0, window_bounds = array<i64: 128, 1>}, {pipeline_mode = #tpu.pipeline_mode<synchronous>, transform_indices = @transform_1, window_bounds = array<i64: 2, 24>}, {pipeline_mode = #tpu.pipeline_mode<synchronous>, transform_indices = @transform_2, window_bounds = array<i64: 1, 128>}, {pipeline_mode = #tpu.pipeline_mode<synchronous>, transform_indices = @transform_3, window_bounds = array<i64: 24, 128>}, {pipeline_mode = #tpu.pipeline_mode<synchronous>, transform_indices = @transform_4, window_bounds = array<i64: 4, 128>}, {pipeline_mode = #tpu.pipeline_mode<synchronous>, transform_indices = @transform_5, window_bounds = array<i64: 3, 128, 128>}, {pipeline_mode = #tpu.pipeline_mode<synchronous>, transform_indices = @transform_6, window_bounds = array<i64: 128, 6>}, {pipeline_mode = #tpu.pipeline_mode<synchronous>, transform_indices = @transform_7, window_bounds = array<i64: 1, 6>}, {pipeline_mode = #tpu.pipeline_mode<synchronous>, transform_indices = @transform_8, window_bounds = array<i64: 6, 32>}, {pipeline_mode = #tpu.pipeline_mode<synchronous>, transform_indices = @transform_9, window_bounds = array<i64: 32, 32>}, {pipeline_mode = #tpu.pipeline_mode<synchronous>, transform_indices = @transform_10, window_bounds = array<i64: 32, 4>}, {pipeline_mode = #tpu.pipeline_mode<synchronous>, transform_indices = @transform_11, window_bounds = array<i64: 2, 32>}, {pipeline_mode = #tpu.pipeline_mode<synchronous>, transform_indices = @transform_12, window_bounds = array<i64: 1, 4>}, {transform_indices = @transform_13, window_bounds = array<i64: 128, 4>}]} {
    %c0 = arith.constant 0 : index
    %c0_0 = arith.constant 0 : index
    %0 = vector.load %arg1[%c0, %c0_0] : memref<128x1xf32, #tpu.memory_space<vmem>>, vector<128x1xf32>
    %c0_1 = arith.constant 0 : index
    %c0_2 = arith.constant 0 : index
    %1 = vector.load %arg2[%c0_1, %c0_2] : memref<2x24xf32, #tpu.memory_space<vmem>>, vector<1x24xf32>
    %c1 = arith.constant 1 : index
    %c0_3 = arith.constant 0 : index
    %2 = vector.load %arg2[%c1, %c0_3] : memref<2x24xf32, #tpu.memory_space<vmem>>, vector<1x24xf32>
    %3 = vector.broadcast %0 : vector<128x1xf32> to vector<128x24xf32>
    %4 = vector.broadcast %1 : vector<1x24xf32> to vector<128x24xf32>
    %5 = arith.mulf %3, %4 : vector<128x24xf32>
    %6 = vector.broadcast %2 : vector<1x24xf32> to vector<128x24xf32>
    %7 = arith.addf %5, %6 : vector<128x24xf32>
    %8 = math.sin %7 : vector<128x24xf32>
    %c0_4 = arith.constant 0 : index
    %c0_5 = arith.constant 0 : index
    %9 = vector.load %arg3[%c0_4, %c0_5] : memref<1x128xf32, #tpu.memory_space<vmem>>, vector<1x128xf32>
    %10 = vector.broadcast %0 : vector<128x1xf32> to vector<128x128xf32>
    %11 = vector.broadcast %9 : vector<1x128xf32> to vector<128x128xf32>
    %12 = arith.mulf %10, %11 : vector<128x128xf32>
    %c0_6 = arith.constant 0 : index
    %c0_7 = arith.constant 0 : index
    %13 = vector.load %arg4[%c0_6, %c0_7] : memref<24x128xbf16, #tpu.memory_space<vmem>>, vector<24x128xbf16>
    %14 = arith.truncf %8 : vector<128x24xf32> to vector<128x24xbf16>
    %cst = arith.constant dense<0.000000e+00> : vector<128x128xf32>
    %15 = tpu.matmul %14, %13, %cst {dimension_numbers = #tpu.dot_dimension_numbers<[1], [0], [0], [1], [0, 0, 1, 1], [], []>} : vector<128x24xbf16>, vector<24x128xbf16>, vector<128x128xf32> -> vector<128x128xf32>
    %16 = arith.addf %12, %15 : vector<128x128xf32>
    %c0_8 = arith.constant 0 : index
    %c0_9 = arith.constant 0 : index
    %17 = vector.load %arg5[%c0_8, %c0_9] : memref<4x128xf32, #tpu.memory_space<vmem>>, vector<1x128xf32>
    %18 = vector.broadcast %17 : vector<1x128xf32> to vector<128x128xf32>
    %19 = arith.addf %16, %18 : vector<128x128xf32>
    %cst_10 = arith.constant 0.000000e+00 : f32
    %20 = vector.broadcast %cst_10 : f32 to vector<128x128xf32>
    %21 = arith.cmpf ogt, %19, %20 : vector<128x128xf32>
    %cst_11 = arith.constant 0.00999999977 : f32
    %22 = vector.broadcast %cst_11 : f32 to vector<128x128xf32>
    %23 = arith.mulf %22, %19 : vector<128x128xf32>
    %24 = arith.select %21, %19, %23 : vector<128x128xi1>, vector<128x128xf32>
    %c0_12 = arith.constant 0 : index
    %c0_13 = arith.constant 0 : index
    %c0_14 = arith.constant 0 : index
    %25 = vector.load %arg6[%c0_12, %c0_13, %c0_14] : memref<3x128x128xbf16, #tpu.memory_space<vmem>>, vector<1x128x128xbf16>
    %26 = vector.shape_cast %25 : vector<1x128x128xbf16> to vector<128x128xbf16>
    %27 = arith.truncf %24 : vector<128x128xf32> to vector<128x128xbf16>
    %cst_15 = arith.constant dense<0.000000e+00> : vector<128x128xf32>
    %28 = tpu.matmul %27, %26, %cst_15 {dimension_numbers = #tpu.dot_dimension_numbers<[1], [0], [0], [1], [0, 0, 1, 1], [], []>} : vector<128x128xbf16>, vector<128x128xbf16>, vector<128x128xf32> -> vector<128x128xf32>
    %c1_16 = arith.constant 1 : index
    %c0_17 = arith.constant 0 : index
    %29 = vector.load %arg5[%c1_16, %c0_17] : memref<4x128xf32, #tpu.memory_space<vmem>>, vector<1x128xf32>
    %30 = vector.broadcast %29 : vector<1x128xf32> to vector<128x128xf32>
    %31 = arith.addf %28, %30 : vector<128x128xf32>
    %cst_18 = arith.constant 0.000000e+00 : f32
    %32 = vector.broadcast %cst_18 : f32 to vector<128x128xf32>
    %33 = arith.cmpf ogt, %31, %32 : vector<128x128xf32>
    %cst_19 = arith.constant 0.00999999977 : f32
    %34 = vector.broadcast %cst_19 : f32 to vector<128x128xf32>
    %35 = arith.mulf %34, %31 : vector<128x128xf32>
    %36 = arith.select %33, %31, %35 : vector<128x128xi1>, vector<128x128xf32>
    %c1_20 = arith.constant 1 : index
    %c0_21 = arith.constant 0 : index
    %c0_22 = arith.constant 0 : index
    %37 = vector.load %arg6[%c1_20, %c0_21, %c0_22] : memref<3x128x128xbf16, #tpu.memory_space<vmem>>, vector<1x128x128xbf16>
    %38 = vector.shape_cast %37 : vector<1x128x128xbf16> to vector<128x128xbf16>
    %39 = arith.truncf %36 : vector<128x128xf32> to vector<128x128xbf16>
    %cst_23 = arith.constant dense<0.000000e+00> : vector<128x128xf32>
    %40 = tpu.matmul %39, %38, %cst_23 {dimension_numbers = #tpu.dot_dimension_numbers<[1], [0], [0], [1], [0, 0, 1, 1], [], []>} : vector<128x128xbf16>, vector<128x128xbf16>, vector<128x128xf32> -> vector<128x128xf32>
    %c2 = arith.constant 2 : index
    %c0_24 = arith.constant 0 : index
    %41 = vector.load %arg5[%c2, %c0_24] : memref<4x128xf32, #tpu.memory_space<vmem>>, vector<1x128xf32>
    %42 = vector.broadcast %41 : vector<1x128xf32> to vector<128x128xf32>
    %43 = arith.addf %40, %42 : vector<128x128xf32>
    %cst_25 = arith.constant 0.000000e+00 : f32
    %44 = vector.broadcast %cst_25 : f32 to vector<128x128xf32>
    %45 = arith.cmpf ogt, %43, %44 : vector<128x128xf32>
    %cst_26 = arith.constant 0.00999999977 : f32
    %46 = vector.broadcast %cst_26 : f32 to vector<128x128xf32>
    %47 = arith.mulf %46, %43 : vector<128x128xf32>
    %48 = arith.select %45, %43, %47 : vector<128x128xi1>, vector<128x128xf32>
    %c2_27 = arith.constant 2 : index
    %c0_28 = arith.constant 0 : index
    %c0_29 = arith.constant 0 : index
    %49 = vector.load %arg6[%c2_27, %c0_28, %c0_29] : memref<3x128x128xbf16, #tpu.memory_space<vmem>>, vector<1x128x128xbf16>
    %50 = vector.shape_cast %49 : vector<1x128x128xbf16> to vector<128x128xbf16>
    %51 = arith.truncf %48 : vector<128x128xf32> to vector<128x128xbf16>
    %cst_30 = arith.constant dense<0.000000e+00> : vector<128x128xf32>
    %52 = tpu.matmul %51, %50, %cst_30 {dimension_numbers = #tpu.dot_dimension_numbers<[1], [0], [0], [1], [0, 0, 1, 1], [], []>} : vector<128x128xbf16>, vector<128x128xbf16>, vector<128x128xf32> -> vector<128x128xf32>
    %c3 = arith.constant 3 : index
    %c0_31 = arith.constant 0 : index
    %53 = vector.load %arg5[%c3, %c0_31] : memref<4x128xf32, #tpu.memory_space<vmem>>, vector<1x128xf32>
    %54 = vector.broadcast %53 : vector<1x128xf32> to vector<128x128xf32>
    %55 = arith.addf %52, %54 : vector<128x128xf32>
    %cst_32 = arith.constant 0.000000e+00 : f32
    %56 = vector.broadcast %cst_32 : f32 to vector<128x128xf32>
    %57 = arith.cmpf ogt, %55, %56 : vector<128x128xf32>
    %cst_33 = arith.constant 0.00999999977 : f32
    %58 = vector.broadcast %cst_33 : f32 to vector<128x128xf32>
    %59 = arith.mulf %58, %55 : vector<128x128xf32>
    %60 = arith.select %57, %55, %59 : vector<128x128xi1>, vector<128x128xf32>
    %c0_34 = arith.constant 0 : index
    %c0_35 = arith.constant 0 : index
    %61 = vector.load %arg7[%c0_34, %c0_35] : memref<128x6xbf16, #tpu.memory_space<vmem>>, vector<128x6xbf16>
    %62 = arith.truncf %60 : vector<128x128xf32> to vector<128x128xbf16>
    %cst_36 = arith.constant dense<0.000000e+00> : vector<128x6xf32>
    %63 = tpu.matmul %62, %61, %cst_36 {dimension_numbers = #tpu.dot_dimension_numbers<[1], [0], [0], [1], [0, 0, 1, 1], [], []>} : vector<128x128xbf16>, vector<128x6xbf16>, vector<128x6xf32> -> vector<128x6xf32>
    %c0_37 = arith.constant 0 : index
    %c0_38 = arith.constant 0 : index
    %64 = vector.load %arg8[%c0_37, %c0_38] : memref<1x6xf32, #tpu.memory_space<vmem>>, vector<1x6xf32>
    %65 = vector.broadcast %64 : vector<1x6xf32> to vector<128x6xf32>
    %66 = arith.addf %63, %65 : vector<128x6xf32>
    %67 = arith.negf %66 : vector<128x6xf32>
    %68 = math.exp %67 : vector<128x6xf32>
    %cst_39 = arith.constant 1.000000e+00 : f32
    %69 = vector.broadcast %cst_39 : f32 to vector<128x6xf32>
    %70 = arith.addf %69, %68 : vector<128x6xf32>
    %71 = arith.divf %69, %70 : vector<128x6xf32>
    %c0_40 = arith.constant 0 : index
    %c0_41 = arith.constant 0 : index
    %72 = vector.load %arg9[%c0_40, %c0_41] : memref<6x32xbf16, #tpu.memory_space<vmem>>, vector<6x32xbf16>
    %73 = arith.truncf %71 : vector<128x6xf32> to vector<128x6xbf16>
    %cst_42 = arith.constant dense<0.000000e+00> : vector<128x32xf32>
    %74 = tpu.matmul %73, %72, %cst_42 {dimension_numbers = #tpu.dot_dimension_numbers<[1], [0], [0], [1], [0, 0, 1, 1], [], []>} : vector<128x6xbf16>, vector<6x32xbf16>, vector<128x32xf32> -> vector<128x32xf32>
    %c0_43 = arith.constant 0 : index
    %c0_44 = arith.constant 0 : index
    %75 = vector.load %arg12[%c0_43, %c0_44] : memref<2x32xf32, #tpu.memory_space<vmem>>, vector<1x32xf32>
    %76 = vector.broadcast %75 : vector<1x32xf32> to vector<128x32xf32>
    %77 = arith.addf %74, %76 : vector<128x32xf32>
    %cst_45 = arith.constant 0.000000e+00 : f32
    %78 = vector.broadcast %cst_45 : f32 to vector<128x32xf32>
    %79 = arith.maximumf %77, %78 : vector<128x32xf32>
    %c0_46 = arith.constant 0 : index
    %c0_47 = arith.constant 0 : index
    %80 = vector.load %arg10[%c0_46, %c0_47] : memref<32x32xbf16, #tpu.memory_space<vmem>>, vector<32x32xbf16>
    %81 = arith.truncf %79 : vector<128x32xf32> to vector<128x32xbf16>
    %cst_48 = arith.constant dense<0.000000e+00> : vector<128x32xf32>
    %82 = tpu.matmul %81, %80, %cst_48 {dimension_numbers = #tpu.dot_dimension_numbers<[1], [0], [0], [1], [0, 0, 1, 1], [], []>} : vector<128x32xbf16>, vector<32x32xbf16>, vector<128x32xf32> -> vector<128x32xf32>
    %c1_49 = arith.constant 1 : index
    %c0_50 = arith.constant 0 : index
    %83 = vector.load %arg12[%c1_49, %c0_50] : memref<2x32xf32, #tpu.memory_space<vmem>>, vector<1x32xf32>
    %84 = vector.broadcast %83 : vector<1x32xf32> to vector<128x32xf32>
    %85 = arith.addf %82, %84 : vector<128x32xf32>
    %cst_51 = arith.constant 0.000000e+00 : f32
    %86 = vector.broadcast %cst_51 : f32 to vector<128x32xf32>
    %87 = arith.maximumf %85, %86 : vector<128x32xf32>
    %c0_52 = arith.constant 0 : index
    %c0_53 = arith.constant 0 : index
    %88 = vector.load %arg11[%c0_52, %c0_53] : memref<32x4xbf16, #tpu.memory_space<vmem>>, vector<32x4xbf16>
    %89 = arith.truncf %87 : vector<128x32xf32> to vector<128x32xbf16>
    %cst_54 = arith.constant dense<0.000000e+00> : vector<128x4xf32>
    %90 = tpu.matmul %89, %88, %cst_54 {dimension_numbers = #tpu.dot_dimension_numbers<[1], [0], [0], [1], [0, 0, 1, 1], [], []>} : vector<128x32xbf16>, vector<32x4xbf16>, vector<128x4xf32> -> vector<128x4xf32>
    %c0_55 = arith.constant 0 : index
    %c0_56 = arith.constant 0 : index
    %91 = vector.load %arg13[%c0_55, %c0_56] : memref<1x4xf32, #tpu.memory_space<vmem>>, vector<1x4xf32>
    %92 = vector.broadcast %91 : vector<1x4xf32> to vector<128x4xf32>
    %93 = arith.addf %90, %92 : vector<128x4xf32>
    %c0_57 = arith.constant 0 : index
    %c0_58 = arith.constant 0 : index
    %94 = vector.load %arg14[%c0_57, %c0_58] : memref<128x4xf32, #tpu.memory_space<vmem>>, vector<128x4xf32>
    tpu.vector_store %arg14[%c0_57, %c0_58], %93 {strides = array<i32>} : memref<128x4xf32, #tpu.memory_space<vmem>>, vector<128x4xf32>,
    return
  }
  func.func @transform_0(%arg0: i32) -> (i32, i32) {
    %c0_i32 = arith.constant 0 : i32
    %c0_i32_0 = arith.constant 0 : i32
    return %arg0, %c0_i32 : i32, i32
  }
  func.func @transform_1(%arg0: i32) -> (i32, i32) {
    %c0_i32 = arith.constant 0 : i32
    %c0_i32_0 = arith.constant 0 : i32
    %c0_i32_1 = arith.constant 0 : i32
    return %c0_i32, %c0_i32_0 : i32, i32
  }
  func.func @transform_2(%arg0: i32) -> (i32, i32) {
    %c0_i32 = arith.constant 0 : i32
    %c0_i32_0 = arith.constant 0 : i32
    %c0_i32_1 = arith.constant 0 : i32
    return %c0_i32, %c0_i32_0 : i32, i32
  }
  func.func @transform_3(%arg0: i32) -> (i32, i32) {
    %c0_i32 = arith.constant 0 : i32
    %c0_i32_0 = arith.constant 0 : i32
    %c0_i32_1 = arith.constant 0 : i32
    return %c0_i32, %c0_i32_0 : i32, i32
  }
  func.func @transform_4(%arg0: i32) -> (i32, i32) {
    %c0_i32 = arith.constant 0 : i32
    %c0_i32_0 = arith.constant 0 : i32
    %c0_i32_1 = arith.constant 0 : i32
    return %c0_i32, %c0_i32_0 : i32, i32
  }
  func.func @transform_5(%arg0: i32) -> (i32, i32, i32) {
    %c0_i32 = arith.constant 0 : i32
    %c0_i32_0 = arith.constant 0 : i32
    %c0_i32_1 = arith.constant 0 : i32
    %c0_i32_2 = arith.constant 0 : i32
    return %c0_i32, %c0_i32_0, %c0_i32_1 : i32, i32, i32
  }
  func.func @transform_6(%arg0: i32) -> (i32, i32) {
    %c0_i32 = arith.constant 0 : i32
    %c0_i32_0 = arith.constant 0 : i32
    %c0_i32_1 = arith.constant 0 : i32
    return %c0_i32, %c0_i32_0 : i32, i32
  }
  func.func @transform_7(%arg0: i32) -> (i32, i32) {
    %c0_i32 = arith.constant 0 : i32
    %c0_i32_0 = arith.constant 0 : i32
    %c0_i32_1 = arith.constant 0 : i32
    return %c0_i32, %c0_i32_0 : i32, i32
  }
  func.func @transform_8(%arg0: i32) -> (i32, i32) {
    %c0_i32 = arith.constant 0 : i32
    %c0_i32_0 = arith.constant 0 : i32
    %c0_i32_1 = arith.constant 0 : i32
    return %c0_i32, %c0_i32_0 : i32, i32
  }
  func.func @transform_9(%arg0: i32) -> (i32, i32) {
    %c0_i32 = arith.constant 0 : i32
    %c0_i32_0 = arith.constant 0 : i32
    %c0_i32_1 = arith.constant 0 : i32
    return %c0_i32, %c0_i32_0 : i32, i32
  }
  func.func @transform_10(%arg0: i32) -> (i32, i32) {
    %c0_i32 = arith.constant 0 : i32
    %c0_i32_0 = arith.constant 0 : i32
    %c0_i32_1 = arith.constant 0 : i32
    return %c0_i32, %c0_i32_0 : i32, i32
  }
  func.func @transform_11(%arg0: i32) -> (i32, i32) {
    %c0_i32 = arith.constant 0 : i32
    %c0_i32_0 = arith.constant 0 : i32
    %c0_i32_1 = arith.constant 0 : i32
    return %c0_i32, %c0_i32_0 : i32, i32
  }
  func.func @transform_12(%arg0: i32) -> (i32, i32) {
    %c0_i32 = arith.constant 0 : i32
    %c0_i32_0 = arith.constant 0 : i32
    %c0_i32_1 = arith.constant 0 : i32
    return %c0_i32, %c0_i32_0 : i32, i32
  }
  func.func @transform_13(%arg0: i32) -> (i32, i32) {
    %c0_i32 = arith.constant 0 : i32
    %c0_i32_0 = arith.constant 0 : i32
    return %arg0, %c0_i32 : i32, i32
  }
}

</mosaic_0001>

<llo_original>
// kernel: tpu_custom_call.1
$region0: #{tpu_custom_call.1}
  #allocation0 [shape = 'u32[]', space=smem, size = 0x4, offset = 0x4, fixed_abs, tag = 'smem constant byte address 0x4 - core index']
  #allocation1 [shape = 'u32[144,128]{1,0:T(1,128)}', space=vmem, size = 0x12000, scoped, tag = 'internal scratch']
  %s0 = inlined_call_operand.vmem [shape: f32[128,1], index: 0, kind: input, shape index: {}]
  %s1 = inlined_call_operand.vmem [shape: f32[2,24], index: 1, kind: input, shape index: {}]
  %s2 = inlined_call_operand.vmem [shape: f32[1,128], index: 2, kind: input, shape index: {}]
  %s3 = inlined_call_operand.vmem [shape: bf16[24,128], index: 3, kind: input, shape index: {}]
  %s4 = inlined_call_operand.vmem [shape: f32[4,128], index: 4, kind: input, shape index: {}]
  %s5 = inlined_call_operand.vmem [shape: bf16[3,128,128], index: 5, kind: input, shape index: {}]
  %s6 = inlined_call_operand.vmem [shape: bf16[128,6], index: 6, kind: input, shape index: {}]
  %s7 = inlined_call_operand.vmem [shape: f32[1,6], index: 7, kind: input, shape index: {}]
  %s8 = inlined_call_operand.vmem [shape: bf16[6,32], index: 8, kind: input, shape index: {}]
  %s9 = inlined_call_operand.vmem [shape: bf16[32,32], index: 9, kind: input, shape index: {}]
  %s10 = inlined_call_operand.vmem [shape: bf16[32,4], index: 10, kind: input, shape index: {}]
  %s11 = inlined_call_operand.vmem [shape: f32[2,32], index: 11, kind: input, shape index: {}]
  %s12 = inlined_call_operand.vmem [shape: f32[1,4], index: 12, kind: input, shape index: {}]
  %s13 = inlined_call_operand.vmem [shape: f32[128,4], index: 13, kind: output, shape index: {}]
  %s14 = sld [smem:[#allocation0]]
  $region62: #{tpu_custom_call.1} parent=0
    _
  %s16 = ssub.s32 1, %s14
  %s17 = scalar_select 0, %s16, %s14
  // Predicated region
  $region2: #{tpu_custom_call.1} parent=0 // pred_check
    _
  $region3: #{tpu_custom_call.1} parent=0 // pred_check_branch
    %19 = sbr.rel (0) target = $region5
  $region4: #{tpu_custom_call.1} parent=0 // pred_region
    _
  $region5: #{tpu_custom_call.1} parent=0 // pred_fallthru
    _
  // Predicated region
  $region6: #{tpu_custom_call.1} parent=0 // pred_check
    _
  $region7: #{tpu_custom_call.1} parent=0 // pred_check_branch
    %21 = sbr.rel (0) target = $region9
  $region8: #{tpu_custom_call.1} parent=0 // pred_region
    _
  $region9: #{tpu_custom_call.1} parent=0 // pred_fallthru
    _
  // Predicated region
  $region10: #{tpu_custom_call.1} parent=0 // pred_check
    _
  $region11: #{tpu_custom_call.1} parent=0 // pred_check_branch
    %23 = sbr.rel (0) target = $region13
  $region12: #{tpu_custom_call.1} parent=0 // pred_region
    _
  $region13: #{tpu_custom_call.1} parent=0 // pred_fallthru
    _
  // Predicated region
  $region14: #{tpu_custom_call.1} parent=0 // pred_check
    _
  $region15: #{tpu_custom_call.1} parent=0 // pred_check_branch
    %25 = sbr.rel (0) target = $region17
  $region16: #{tpu_custom_call.1} parent=0 // pred_region
    _
  $region17: #{tpu_custom_call.1} parent=0 // pred_fallthru
    _
  // Predicated region
  $region18: #{tpu_custom_call.1} parent=0 // pred_check
    _
  $region19: #{tpu_custom_call.1} parent=0 // pred_check_branch
    %27 = sbr.rel (0) target = $region21
  $region20: #{tpu_custom_call.1} parent=0 // pred_region
    _
  $region21: #{tpu_custom_call.1} parent=0 // pred_fallthru
    _
  // Predicated region
  $region22: #{tpu_custom_call.1} parent=0 // pred_check
    _
  $region23: #{tpu_custom_call.1} parent=0 // pred_check_branch
    %29 = sbr.rel (0) target = $region25
  $region24: #{tpu_custom_call.1} parent=0 // pred_region
    _
  $region25: #{tpu_custom_call.1} parent=0 // pred_fallthru
    _
  // Predicated region
  $region26: #{tpu_custom_call.1} parent=0 // pred_check
    _
  $region27: #{tpu_custom_call.1} parent=0 // pred_check_branch
    %31 = sbr.rel (0) target = $region29
  $region28: #{tpu_custom_call.1} parent=0 // pred_region
    _
  $region29: #{tpu_custom_call.1} parent=0 // pred_fallthru
    _
  // Predicated region
  $region30: #{tpu_custom_call.1} parent=0 // pred_check
    _
  $region31: #{tpu_custom_call.1} parent=0 // pred_check_branch
    %33 = sbr.rel (0) target = $region33
  $region32: #{tpu_custom_call.1} parent=0 // pred_region
    _
  $region33: #{tpu_custom_call.1} parent=0 // pred_fallthru
    _
  // Predicated region
  $region34: #{tpu_custom_call.1} parent=0 // pred_check
    _
  $region35: #{tpu_custom_call.1} parent=0 // pred_check_branch
    %35 = sbr.rel (0) target = $region37
  $region36: #{tpu_custom_call.1} parent=0 // pred_region
    _
  $region37: #{tpu_custom_call.1} parent=0 // pred_fallthru
    _
  // Predicated region
  $region38: #{tpu_custom_call.1} parent=0 // pred_check
    _
  $region39: #{tpu_custom_call.1} parent=0 // pred_check_branch
    %37 = sbr.rel (0) target = $region41
  $region40: #{tpu_custom_call.1} parent=0 // pred_region
    _
  $region41: #{tpu_custom_call.1} parent=0 // pred_fallthru
    _
  // Predicated region
  $region42: #{tpu_custom_call.1} parent=0 // pred_check
    _
  $region43: #{tpu_custom_call.1} parent=0 // pred_check_branch
    %39 = sbr.rel (0) target = $region45
  $region44: #{tpu_custom_call.1} parent=0 // pred_region
    _
  $region45: #{tpu_custom_call.1} parent=0 // pred_fallthru
    _
  // Predicated region
  $region46: #{tpu_custom_call.1} parent=0 // pred_check
    _
  $region47: #{tpu_custom_call.1} parent=0 // pred_check_branch
    %41 = sbr.rel (0) target = $region49
  $region48: #{tpu_custom_call.1} parent=0 // pred_region
    _
  $region49: #{tpu_custom_call.1} parent=0 // pred_fallthru
    _
  // Predicated region
  $region50: #{tpu_custom_call.1} parent=0 // pred_check
    _
  $region51: #{tpu_custom_call.1} parent=0 // pred_check_branch
    %43 = sbr.rel (0) target = $region53
  $region52: #{tpu_custom_call.1} parent=0 // pred_region
    _
  $region53: #{tpu_custom_call.1} parent=0 // pred_fallthru
    _
  %v45 = vld [vmem:[%s0] sm:$0xff]
  %v46 = vld [vmem:[%s0 + $0x8] sm:$0xff]
  %v47 = vld [vmem:[%s0 + $0x10] sm:$0xff]
  %v48 = vld [vmem:[%s0 + $0x18] sm:$0xff]
  %v49 = vld [vmem:[%s0 + $0x20] sm:$0xff]
  %v50 = vld [vmem:[%s0 + $0x28] sm:$0xff]
  %v51 = vld [vmem:[%s0 + $0x30] sm:$0xff]
  %v52 = vld [vmem:[%s0 + $0x38] sm:$0xff]
  %v53 = vld [vmem:[%s0 + $0x40] sm:$0xff]
  %v54 = vld [vmem:[%s0 + $0x48] sm:$0xff]
  %v55 = vld [vmem:[%s0 + $0x50] sm:$0xff]
  %v56 = vld [vmem:[%s0 + $0x58] sm:$0xff]
  %v57 = vld [vmem:[%s0 + $0x60] sm:$0xff]
  %v58 = vld [vmem:[%s0 + $0x68] sm:$0xff]
  %v59 = vld [vmem:[%s0 + $0x70] sm:$0xff]
  %v60 = vld [vmem:[%s0 + $0x78] sm:$0xff]
  %v61 = vld [vmem:[%s1] sm:$0x1]
  %v62 = vld [vmem:[%s1 + $0x1] sm:$0x1]
  %64 = vset.pattern.permute.xlu0 0
  %65 = vperm.xlu0 %64, %v45
  %v66 = vpop.permute.xlu0 %65
  %69 = vset.pattern.permute.xlu0 0
  %70 = vperm.xlu0 %69, %v46
  %v71 = vpop.permute.xlu0 %70
  %74 = vset.pattern.permute.xlu0 0
  %75 = vperm.xlu0 %74, %v47
  %v76 = vpop.permute.xlu0 %75
  %79 = vset.pattern.permute.xlu0 0
  %80 = vperm.xlu0 %79, %v48
  %v81 = vpop.permute.xlu0 %80
  %84 = vset.pattern.permute.xlu0 0
  %85 = vperm.xlu0 %84, %v49
  %v86 = vpop.permute.xlu0 %85
  %89 = vset.pattern.permute.xlu0 0
  %90 = vperm.xlu0 %89, %v50
  %v91 = vpop.permute.xlu0 %90
  %94 = vset.pattern.permute.xlu0 0
  %95 = vperm.xlu0 %94, %v51
  %v96 = vpop.permute.xlu0 %95
  %99 = vset.pattern.permute.xlu0 0
  %100 = vperm.xlu0 %99, %v52
  %v101 = vpop.permute.xlu0 %100
  %104 = vset.pattern.permute.xlu0 0
  %105 = vperm.xlu0 %104, %v53
  %v106 = vpop.permute.xlu0 %105
  %109 = vset.pattern.permute.xlu0 0
  %110 = vperm.xlu0 %109, %v54
  %v111 = vpop.permute.xlu0 %110
  %114 = vset.pattern.permute.xlu0 0
  %115 = vperm.xlu0 %114, %v55
  %v116 = vpop.permute.xlu0 %115
  %119 = vset.pattern.permute.xlu0 0
  %120 = vperm.xlu0 %119, %v56
  %v121 = vpop.permute.xlu0 %120
  %124 = vset.pattern.permute.xlu0 0
  %125 = vperm.xlu0 %124, %v57
  %v126 = vpop.permute.xlu0 %125
  %129 = vset.pattern.permute.xlu0 0
  %130 = vperm.xlu0 %129, %v58
  %v131 = vpop.permute.xlu0 %130
  %134 = vset.pattern.permute.xlu0 0
  %135 = vperm.xlu0 %134, %v59
  %v136 = vpop.permute.xlu0 %135
  %139 = vset.pattern.permute.xlu0 0
  %140 = vperm.xlu0 %139, %v60
  %v141 = vpop.permute.xlu0 %140
  %v143 = vlaneseq
  %v144 = vshrl.u32 %v143, 7
  %v145 = vsub.s32 0, %v144
  %v146 = vrot.slane %v61, %v145
  %v147 = vmul.f32 %v66, %v146
  %v148 = vmul.f32 %v71, %v146
  %v149 = vmul.f32 %v76, %v146
  %v150 = vmul.f32 %v81, %v146
  %v151 = vmul.f32 %v86, %v146
  %v152 = vmul.f32 %v91, %v146
  %v153 = vmul.f32 %v96, %v146
  %v154 = vmul.f32 %v101, %v146
  %v155 = vmul.f32 %v106, %v146
  %v156 = vmul.f32 %v111, %v146
  %v157 = vmul.f32 %v116, %v146
  %v158 = vmul.f32 %v121, %v146
  %v159 = vmul.f32 %v126, %v146
  %v160 = vmul.f32 %v131, %v146
  %v161 = vmul.f32 %v136, %v146
  %v162 = vmul.f32 %v141, %v146
  %v163 = vlaneseq
  %v164 = vshrl.u32 %v163, 7
  %v165 = vsub.s32 0, %v164
  %v166 = vrot.slane %v62, %v165
  %v167 = vadd.f32 %v147, %v166
  %v168 = vadd.f32 %v148, %v166
  %v169 = vadd.f32 %v149, %v166
  %v170 = vadd.f32 %v150, %v166
  %v171 = vadd.f32 %v151, %v166
  %v172 = vadd.f32 %v152, %v166
  %v173 = vadd.f32 %v153, %v166
  %v174 = vadd.f32 %v154, %v166
  %v175 = vadd.f32 %v155, %v166
  %v176 = vadd.f32 %v156, %v166
  %v177 = vadd.f32 %v157, %v166
  %v178 = vadd.f32 %v158, %v166
  %v179 = vadd.f32 %v159, %v166
  %v180 = vadd.f32 %v160, %v166
  %v181 = vadd.f32 %v161, %v166
  %v182 = vadd.f32 %v162, %v166
  %v183 = vand.u32 2147483647, %v167
  %vm184 = vcmp.le.f32.partialorder %v183, 0.7853982
  %vm185 = vcmp.lt.s32.totalorder %v167, 0
  %v186 = vand.u32 %v167, 2139095040
  %v187 = vshrl.u32 %v186, 23
  %v188 = vsub.s32 %v187, 127
  %v189 = vand.u32 2147483647, %v167
  %v190 = vand.u32 %v189, 8388607
  %v191 = vor.u32 %v190, 8388608
  %v192 = vsub.s32 0, %v191
  %v193 = vadd.s32 %v188, 1
  %vm194 = vcmp.gt.s32.totalorder %v193, 0
  %v195 = vsel %vm194, %v193, 0
  %v196 = vshrl.u32 %v195, 5
  %v197 = vand.u32 %v195, 31
  %v198 = vsub.s32 32, %v197
  %v199 = vshrl.u32 683565275, %v198
  %v200 = vshll.u32 683565275, %v197
  %v201 = vshrl.u32 2475754826, %v198
  %v202 = vor.u32 %v200, %v201
  %v203 = vshll.u32 2475754826, %v197
  %v204 = vshrl.u32 2131351028, %v198
  %v205 = vor.u32 %v203, %v204
  %v206 = vshll.u32 2131351028, %v197
  %v207 = vshrl.u32 2102212464, %v198
  %v208 = vor.u32 %v206, %v207
  %v209 = vshll.u32 2102212464, %v197
  %v210 = vshrl.u32 920167782, %v198
  %v211 = vor.u32 %v209, %v210
  %v212 = vshll.u32 920167782, %v197
  %v213 = vshrl.u32 1326507024, %v198
  %v214 = vor.u32 %v212, %v213
  %vm215 = vcmp.lt.s32.totalorder %v196, 1
  %vm216 = vcmp.lt.s32.totalorder %v196, 2
  %vm217 = vcmp.lt.s32.totalorder %v196, 3
  %vm218 = vcmp.lt.s32.totalorder %v196, 4
  %v219 = vsel %vm215, %v199, %v202
  %v220 = vsel %vm218, %v208, 2102212464
  %v221 = vsel %vm217, %v205, %v220
  %v222 = vsel %vm216, %v219, %v221
  %v223 = vsel %vm215, %v202, %v205
  %v224 = vsel %vm218, %v211, 920167782
  %v225 = vsel %vm217, %v208, %v224
  %v226 = vsel %vm216, %v223, %v225
  %v227 = vsel %vm215, %v205, %v208
  %v228 = vsel %vm218, %v214, 1326507024
  %v229 = vsel %vm217, %v211, %v228
  %v230 = vsel %vm216, %v227, %v229
  %v231 = vshll.u32 %v191, 8
  %v232 = vmul.u32.u64.compose %v231, %v230
  %v233 = vextract.low.u32 %v232
  %v234 = vextract.high.u32 %v232
  %v235 = vmul.u32.u64.compose %v231, %v226
  %v236 = vextract.low.u32 %v235
  %v237 = vextract.high.u32 %v235
  %v238 = vmul.u32 %v231, %v222
  %v239 = vadd.s32 %v234, %v236
  %vm240 = vc.u32 %v234, %v236
  %v241 = vadd.s32 %v237, 1
  %v242 = vsel %vm240, %v241, %v237
  %v243 = vadd.s32 %v238, %v242
  %v244 = vadd.s32 %v243, 536870912
  %v245 = vshrl.u32 %v244, 30
  %v246 = vshll.u32 %v245, 30
  %v247 = vsub.s32 %v243, %v246
  %vm248 = vcmp.lt.s32.totalorder %v247, 0
  %v249 = vsub.s32 0, %v247
  %v250 = vsel %vm248, %v249, %v247
  %v251 = vclz %v250
  %v252 = vsub.s32 %v251, 2
  %vm253 = vcmp.gt.s32.totalorder 0, %v252
  %v254 = vsel %vm253, 0, %v252
  %v255 = vsub.s32 32, %v254
  %v256 = vshll.u32 %v247, %v254
  %v257 = vshrl.u32 %v239, %v255
  %v258 = vor.u32 %v256, %v257
  %v259 = vsub.s32 4294967266, %v254
  %v260 = vadd.s32 %v259, 127
  %v261 = vshll.u32 %v260, 23
  %v262 = vor.u32 4788187, %v261
  %v263 = vand.u32 2147483647, %v262
  %v265 = vcvt.s32.f32 %v258
  %v266 = vmul.f32 %v265, %v263
  %v267 = vxor.u32 %v266, 2147483648
  %v268 = vsel %vm185, %v267, %v266
  %v269 = vsub.s32 4, %v245
  %v270 = vsel %vm185, %v269, %v245
  %v271 = vsel %vm184, %v167, %v268
  %v272 = vsel %vm184, 0, %v270
  %v273 = vcosq.f32.pop %v271
  %v274 = vsinq.f32.pop %v271
  %vm275 = vweird.f32 %v167
  %v276 = vadd.s32 %v272, 3
  %v277 = vand.u32 %v276, 3
  %vm278 = vcmp.lt.s32.totalorder %v277, 2
  %vm279 = vcmp.eq.s32.totalorder %v277, 0
  %v280 = vxor.u32 %v274, 2147483648
  %v281 = vsel %vm279, %v273, %v280
  %vm282 = vcmp.eq.s32.totalorder %v277, 2
  %v283 = vxor.u32 %v273, 2147483648
  %v284 = vsel %vm282, %v283, %v274
  %v285 = vsel %vm278, %v281, %v284
  %v286 = vsel %vm275, nan, %v285
  %v287 = vand.u32 2147483647, %v168
  %vm288 = vcmp.le.f32.partialorder %v287, 0.7853982
  %vm289 = vcmp.lt.s32.totalorder %v168, 0
  %v290 = vand.u32 %v168, 2139095040
  %v291 = vshrl.u32 %v290, 23
  %v292 = vsub.s32 %v291, 127
  %v293 = vand.u32 2147483647, %v168
  %v294 = vand.u32 %v293, 8388607
  %v295 = vor.u32 %v294, 8388608
  %v296 = vsub.s32 0, %v295
  %v297 = vadd.s32 %v292, 1
  %vm298 = vcmp.gt.s32.totalorder %v297, 0
  %v299 = vsel %vm298, %v297, 0
  %v300 = vshrl.u32 %v299, 5
  %v301 = vand.u32 %v299, 31
  %v302 = vsub.s32 32, %v301
  %v303 = vshrl.u32 683565275, %v302
  %v304 = vshll.u32 683565275, %v301
  %v305 = vshrl.u32 2475754826, %v302
  %v306 = vor.u32 %v304, %v305
  %v307 = vshll.u32 2475754826, %v301
  %v308 = vshrl.u32 2131351028, %v302
  %v309 = vor.u32 %v307, %v308
  %v310 = vshll.u32 2131351028, %v301
  %v311 = vshrl.u32 2102212464, %v302
  %v312 = vor.u32 %v310, %v311
  %v313 = vshll.u32 2102212464, %v301
  %v314 = vshrl.u32 920167782, %v302
  %v315 = vor.u32 %v313, %v314
  %v316 = vshll.u32 920167782, %v301
  %v317 = vshrl.u32 1326507024, %v302
  %v318 = vor.u32 %v316, %v317
  %vm319 = vcmp.lt.s32.totalorder %v300, 1
  %vm320 = vcmp.lt.s32.totalorder %v300, 2
  %vm321 = vcmp.lt.s32.totalorder %v300, 3
  %vm322 = vcmp.lt.s32.totalorder %v300, 4
  %v323 = vsel %vm319, %v303, %v306
  %v324 = vsel %vm322, %v312, 2102212464
  %v325 = vsel %vm321, %v309, %v324
  %v326 = vsel %vm320, %v323, %v325
  %v327 = vsel %vm319, %v306, %v309
  %v328 = vsel %vm322, %v315, 920167782
  %v329 = vsel %vm321, %v312, %v328
  %v330 = vsel %vm320, %v327, %v329
  %v331 = vsel %vm319, %v309, %v312
  %v332 = vsel %vm322, %v318, 1326507024
  %v333 = vsel %vm321, %v315, %v332
  %v334 = vsel %vm320, %v331, %v333
  %v335 = vshll.u32 %v295, 8
  %v336 = vmul.u32.u64.compose %v335, %v334
  %v337 = vextract.low.u32 %v336
  %v338 = vextract.high.u32 %v336
  %v339 = vmul.u32.u64.compose %v335, %v330
  %v340 = vextract.low.u32 %v339
  %v341 = vextract.high.u32 %v339
  %v342 = vmul.u32 %v335, %v326
  %v343 = vadd.s32 %v338, %v340
  %vm344 = vc.u32 %v338, %v340
  %v345 = vadd.s32 %v341, 1
  %v346 = vsel %vm344, %v345, %v341
  %v347 = vadd.s32 %v342, %v346
  %v348 = vadd.s32 %v347, 536870912
  %v349 = vshrl.u32 %v348, 30
  %v350 = vshll.u32 %v349, 30
  %v351 = vsub.s32 %v347, %v350
  %vm352 = vcmp.lt.s32.totalorder %v351, 0
  %v353 = vsub.s32 0, %v351
  %v354 = vsel %vm352, %v353, %v351
  %v355 = vclz %v354
  %v356 = vsub.s32 %v355, 2
  %vm357 = vcmp.gt.s32.totalorder 0, %v356
  %v358 = vsel %vm357, 0, %v356
  %v359 = vsub.s32 32, %v358
  %v360 = vshll.u32 %v351, %v358
  %v361 = vshrl.u32 %v343, %v359
  %v362 = vor.u32 %v360, %v361
  %v363 = vsub.s32 4294967266, %v358
  %v364 = vadd.s32 %v363, 127
  %v365 = vshll.u32 %v364, 23
  %v366 = vor.u32 4788187, %v365
  %v367 = vand.u32 2147483647, %v366
  %v369 = vcvt.s32.f32 %v362
  %v370 = vmul.f32 %v369, %v367
  %v371 = vxor.u32 %v370, 2147483648
  %v372 = vsel %vm289, %v371, %v370
  %v373 = vsub.s32 4, %v349
  %v374 = vsel %vm289, %v373, %v349
  %v375 = vsel %vm288, %v168, %v372
  %v376 = vsel %vm288, 0, %v374
  %v377 = vcosq.f32.pop %v375
  %v378 = vsinq.f32.pop %v375
  %vm379 = vweird.f32 %v168
  %v380 = vadd.s32 %v376, 3
  %v381 = vand.u32 %v380, 3
  %vm382 = vcmp.lt.s32.totalorder %v381, 2
  %vm383 = vcmp.eq.s32.totalorder %v381, 0
  %v384 = vxor.u32 %v378, 2147483648
  %v385 = vsel %vm383, %v377, %v384
  %vm386 = vcmp.eq.s32.totalorder %v381, 2
  %v387 = vxor.u32 %v377, 2147483648
  %v388 = vsel %vm386, %v387, %v378
  %v389 = vsel %vm382, %v385, %v388
  %v390 = vsel %vm379, nan, %v389
  %v391 = vand.u32 2147483647, %v169
  %vm392 = vcmp.le.f32.partialorder %v391, 0.7853982
  %vm393 = vcmp.lt.s32.totalorder %v169, 0
  %v394 = vand.u32 %v169, 2139095040
  %v395 = vshrl.u32 %v394, 23
  %v396 = vsub.s32 %v395, 127
  %v397 = vand.u32 2147483647, %v169
  %v398 = vand.u32 %v397, 8388607
  %v399 = vor.u32 %v398, 8388608
  %v400 = vsub.s32 0, %v399
  %v401 = vadd.s32 %v396, 1
  %vm402 = vcmp.gt.s32.totalorder %v401, 0
  %v403 = vsel %vm402, %v401, 0
  %v404 = vshrl.u32 %v403, 5
  %v405 = vand.u32 %v403, 31
  %v406 = vsub.s32 32, %v405
  %v407 = vshrl.u32 683565275, %v406
  %v408 = vshll.u32 683565275, %v405
  %v409 = vshrl.u32 2475754826, %v406
  %v410 = vor.u32 %v408, %v409
  %v411 = vshll.u32 2475754826, %v405
  %v412 = vshrl.u32 2131351028, %v406
  %v413 = vor.u32 %v411, %v412
  %v414 = vshll.u32 2131351028, %v405
  %v415 = vshrl.u32 2102212464, %v406
  %v416 = vor.u32 %v414, %v415
  %v417 = vshll.u32 2102212464, %v405
  %v418 = vshrl.u32 920167782, %v406
  %v419 = vor.u32 %v417, %v418
  %v420 = vshll.u32 920167782, %v405
  %v421 = vshrl.u32 1326507024, %v406
  %v422 = vor.u32 %v420, %v421
  %vm423 = vcmp.lt.s32.totalorder %v404, 1
  %vm424 = vcmp.lt.s32.totalorder %v404, 2
  %vm425 = vcmp.lt.s32.totalorder %v404, 3
  %vm426 = vcmp.lt.s32.totalorder %v404, 4
  %v427 = vsel %vm423, %v407, %v410
  %v428 = vsel %vm426, %v416, 2102212464
  %v429 = vsel %vm425, %v413, %v428
  %v430 = vsel %vm424, %v427, %v429
  %v431 = vsel %vm423, %v410, %v413
  %v432 = vsel %vm426, %v419, 920167782
  %v433 = vsel %vm425, %v416, %v432
  %v434 = vsel %vm424, %v431, %v433
  %v435 = vsel %vm423, %v413, %v416
  %v436 = vsel %vm426, %v422, 1326507024
  %v437 = vsel %vm425, %v419, %v436
  %v438 = vsel %vm424, %v435, %v437
  %v439 = vshll.u32 %v399, 8
  %v440 = vmul.u32.u64.compose %v439, %v438
  %v441 = vextract.low.u32 %v440
  %v442 = vextract.high.u32 %v440
  %v443 = vmul.u32.u64.compose %v439, %v434
  %v444 = vextract.low.u32 %v443
  %v445 = vextract.high.u32 %v443
  %v446 = vmul.u32 %v439, %v430
  %v447 = vadd.s32 %v442, %v444
  %vm448 = vc.u32 %v442, %v444
  %v449 = vadd.s32 %v445, 1
  %v450 = vsel %vm448, %v449, %v445
  %v451 = vadd.s32 %v446, %v450
  %v452 = vadd.s32 %v451, 536870912
  %v453 = vshrl.u32 %v452, 30
  %v454 = vshll.u32 %v453, 30
  %v455 = vsub.s32 %v451, %v454
  %vm456 = vcmp.lt.s32.totalorder %v455, 0
  %v457 = vsub.s32 0, %v455
  %v458 = vsel %vm456, %v457, %v455
  %v459 = vclz %v458
  %v460 = vsub.s32 %v459, 2
  %vm461 = vcmp.gt.s32.totalorder 0, %v460
  %v462 = vsel %vm461, 0, %v460
  %v463 = vsub.s32 32, %v462
  %v464 = vshll.u32 %v455, %v462
  %v465 = vshrl.u32 %v447, %v463
  %v466 = vor.u32 %v464, %v465
  %v467 = vsub.s32 4294967266, %v462
  %v468 = vadd.s32 %v467, 127
  %v469 = vshll.u32 %v468, 23
  %v470 = vor.u32 4788187, %v469
  %v471 = vand.u32 2147483647, %v470
  %v473 = vcvt.s32.f32 %v466
  %v474 = vmul.f32 %v473, %v471
  %v475 = vxor.u32 %v474, 2147483648
  %v476 = vsel %vm393, %v475, %v474
  %v477 = vsub.s32 4, %v453
  %v478 = vsel %vm393, %v477, %v453
  %v479 = vsel %vm392, %v169, %v476
  %v480 = vsel %vm392, 0, %v478
  %v481 = vcosq.f32.pop %v479
  %v482 = vsinq.f32.pop %v479
  %vm483 = vweird.f32 %v169
  %v484 = vadd.s32 %v480, 3
  %v485 = vand.u32 %v484, 3
  %vm486 = vcmp.lt.s32.totalorder %v485, 2
  %vm487 = vcmp.eq.s32.totalorder %v485, 0
  %v488 = vxor.u32 %v482, 2147483648
  %v489 = vsel %vm487, %v481, %v488
  %vm490 = vcmp.eq.s32.totalorder %v485, 2
  %v491 = vxor.u32 %v481, 2147483648
  %v492 = vsel %vm490, %v491, %v482
  %v493 = vsel %vm486, %v489, %v492
  %v494 = vsel %vm483, nan, %v493
  %v495 = vand.u32 2147483647, %v170
  %vm496 = vcmp.le.f32.partialorder %v495, 0.7853982
  %vm497 = vcmp.lt.s32.totalorder %v170, 0
  %v498 = vand.u32 %v170, 2139095040
  %v499 = vshrl.u32 %v498, 23
  %v500 = vsub.s32 %v499, 127
  %v501 = vand.u32 2147483647, %v170
  %v502 = vand.u32 %v501, 8388607
  %v503 = vor.u32 %v502, 8388608
  %v504 = vsub.s32 0, %v503
  %v505 = vadd.s32 %v500, 1
  %vm506 = vcmp.gt.s32.totalorder %v505, 0
  %v507 = vsel %vm506, %v505, 0
  %v508 = vshrl.u32 %v507, 5
  %v509 = vand.u32 %v507, 31
  %v510 = vsub.s32 32, %v509
  %v511 = vshrl.u32 683565275, %v510
  %v512 = vshll.u32 683565275, %v509
  %v513 = vshrl.u32 2475754826, %v510
  %v514 = vor.u32 %v512, %v513
  %v515 = vshll.u32 2475754826, %v509
  %v516 = vshrl.u32 2131351028, %v510
  %v517 = vor.u32 %v515, %v516
  %v518 = vshll.u32 2131351028, %v509
  %v519 = vshrl.u32 2102212464, %v510
  %v520 = vor.u32 %v518, %v519
  %v521 = vshll.u32 2102212464, %v509
  %v522 = vshrl.u32 920167782, %v510
  %v523 = vor.u32 %v521, %v522
  %v524 = vshll.u32 920167782, %v509
  %v525 = vshrl.u32 1326507024, %v510
  %v526 = vor.u32 %v524, %v525
  %vm527 = vcmp.lt.s32.totalorder %v508, 1
  %vm528 = vcmp.lt.s32.totalorder %v508, 2
  %vm529 = vcmp.lt.s32.totalorder %v508, 3
  %vm530 = vcmp.lt.s32.totalorder %v508, 4
  %v531 = vsel %vm527, %v511, %v514
  %v532 = vsel %vm530, %v520, 2102212464
  %v533 = vsel %vm529, %v517, %v532
  %v534 = vsel %vm528, %v531, %v533
  %v535 = vsel %vm527, %v514, %v517
  %v536 = vsel %vm530, %v523, 920167782
  %v537 = vsel %vm529, %v520, %v536
  %v538 = vsel %vm528, %v535, %v537
  %v539 = vsel %vm527, %v517, %v520
  %v540 = vsel %vm530, %v526, 1326507024
  %v541 = vsel %vm529, %v523, %v540
  %v542 = vsel %vm528, %v539, %v541
  %v543 = vshll.u32 %v503, 8
  %v544 = vmul.u32.u64.compose %v543, %v542
  %v545 = vextract.low.u32 %v544
  %v546 = vextract.high.u32 %v544
  %v547 = vmul.u32.u64.compose %v543, %v538
  %v548 = vextract.low.u32 %v547
  %v549 = vextract.high.u32 %v547
  %v550 = vmul.u32 %v543, %v534
  %v551 = vadd.s32 %v546, %v548
  %vm552 = vc.u32 %v546, %v548
  %v553 = vadd.s32 %v549, 1
  %v554 = vsel %vm552, %v553, %v549
  %v555 = vadd.s32 %v550, %v554
  %v556 = vadd.s32 %v555, 536870912
  %v557 = vshrl.u32 %v556, 30
  %v558 = vshll.u32 %v557, 30
  %v559 = vsub.s32 %v555, %v558
  %vm560 = vcmp.lt.s32.totalorder %v559, 0
  %v561 = vsub.s32 0, %v559
  %v562 = vsel %vm560, %v561, %v559
  %v563 = vclz %v562
  %v564 = vsub.s32 %v563, 2
  %vm565 = vcmp.gt.s32.totalorder 0, %v564
  %v566 = vsel %vm565, 0, %v564
  %v567 = vsub.s32 32, %v566
  %v568 = vshll.u32 %v559, %v566
  %v569 = vshrl.u32 %v551, %v567
  %v570 = vor.u32 %v568, %v569
  %v571 = vsub.s32 4294967266, %v566
  %v572 = vadd.s32 %v571, 127
  %v573 = vshll.u32 %v572, 23
  %v574 = vor.u32 4788187, %v573
  %v575 = vand.u32 2147483647, %v574
  %v577 = vcvt.s32.f32 %v570
  %v578 = vmul.f32 %v577, %v575
  %v579 = vxor.u32 %v578, 2147483648
  %v580 = vsel %vm497, %v579, %v578
  %v581 = vsub.s32 4, %v557
  %v582 = vsel %vm497, %v581, %v557
  %v583 = vsel %vm496, %v170, %v580
  %v584 = vsel %vm496, 0, %v582
  %v585 = vcosq.f32.pop %v583
  %v586 = vsinq.f32.pop %v583
  %vm587 = vweird.f32 %v170
  %v588 = vadd.s32 %v584, 3
  %v589 = vand.u32 %v588, 3
  %vm590 = vcmp.lt.s32.totalorder %v589, 2
  %vm591 = vcmp.eq.s32.totalorder %v589, 0
  %v592 = vxor.u32 %v586, 2147483648
  %v593 = vsel %vm591, %v585, %v592
  %vm594 = vcmp.eq.s32.totalorder %v589, 2
  %v595 = vxor.u32 %v585, 2147483648
  %v596 = vsel %vm594, %v595, %v586
  %v597 = vsel %vm590, %v593, %v596
  %v598 = vsel %vm587, nan, %v597
  %v599 = vand.u32 2147483647, %v171
  %vm600 = vcmp.le.f32.partialorder %v599, 0.7853982
  %vm601 = vcmp.lt.s32.totalorder %v171, 0
  %v602 = vand.u32 %v171, 2139095040
  %v603 = vshrl.u32 %v602, 23
  %v604 = vsub.s32 %v603, 127
  %v605 = vand.u32 2147483647, %v171
  %v606 = vand.u32 %v605, 8388607
  %v607 = vor.u32 %v606, 8388608
  %v608 = vsub.s32 0, %v607
  %v609 = vadd.s32 %v604, 1
  %vm610 = vcmp.gt.s32.totalorder %v609, 0
  %v611 = vsel %vm610, %v609, 0
  %v612 = vshrl.u32 %v611, 5
  %v613 = vand.u32 %v611, 31
  %v614 = vsub.s32 32, %v613
  %v615 = vshrl.u32 683565275, %v614
  %v616 = vshll.u32 683565275, %v613
  %v617 = vshrl.u32 2475754826, %v614
  %v618 = vor.u32 %v616, %v617
  %v619 = vshll.u32 2475754826, %v613
  %v620 = vshrl.u32 2131351028, %v614
  %v621 = vor.u32 %v619, %v620
  %v622 = vshll.u32 2131351028, %v613
  %v623 = vshrl.u32 2102212464, %v614
  %v624 = vor.u32 %v622, %v623
  %v625 = vshll.u32 2102212464, %v613
  %v626 = vshrl.u32 920167782, %v614
  %v627 = vor.u32 %v625, %v626
  %v628 = vshll.u32 920167782, %v613
  %v629 = vshrl.u32 1326507024, %v614
  %v630 = vor.u32 %v628, %v629
  %vm631 = vcmp.lt.s32.totalorder %v612, 1
  %vm632 = vcmp.lt.s32.totalorder %v612, 2
  %vm633 = vcmp.lt.s32.totalorder %v612, 3
  %vm634 = vcmp.lt.s32.totalorder %v612, 4
  %v635 = vsel %vm631, %v615, %v618
  %v636 = vsel %vm634, %v624, 2102212464
  %v637 = vsel %vm633, %v621, %v636
  %v638 = vsel %vm632, %v635, %v637
  %v639 = vsel %vm631, %v618, %v621
  %v640 = vsel %vm634, %v627, 920167782
  %v641 = vsel %vm633, %v624, %v640
  %v642 = vsel %vm632, %v639, %v641
  %v643 = vsel %vm631, %v621, %v624
  %v644 = vsel %vm634, %v630, 1326507024
  %v645 = vsel %vm633, %v627, %v644
  %v646 = vsel %vm632, %v643, %v645
  %v647 = vshll.u32 %v607, 8
  %v648 = vmul.u32.u64.compose %v647, %v646
  %v649 = vextract.low.u32 %v648
  %v650 = vextract.high.u32 %v648
  %v651 = vmul.u32.u64.compose %v647, %v642
  %v652 = vextract.low.u32 %v651
  %v653 = vextract.high.u32 %v651
  %v654 = vmul.u32 %v647, %v638
  %v655 = vadd.s32 %v650, %v652
  %vm656 = vc.u32 %v650, %v652
  %v657 = vadd.s32 %v653, 1
  %v658 = vsel %vm656, %v657, %v653
  %v659 = vadd.s32 %v654, %v658
  %v660 = vadd.s32 %v659, 536870912
  %v661 = vshrl.u32 %v660, 30
  %v662 = vshll.u32 %v661, 30
  %v663 = vsub.s32 %v659, %v662
  %vm664 = vcmp.lt.s32.totalorder %v663, 0
  %v665 = vsub.s32 0, %v663
  %v666 = vsel %vm664, %v665, %v663
  %v667 = vclz %v666
  %v668 = vsub.s32 %v667, 2
  %vm669 = vcmp.gt.s32.totalorder 0, %v668
  %v670 = vsel %vm669, 0, %v668
  %v671 = vsub.s32 32, %v670
  %v672 = vshll.u32 %v663, %v670
  %v673 = vshrl.u32 %v655, %v671
  %v674 = vor.u32 %v672, %v673
  %v675 = vsub.s32 4294967266, %v670
  %v676 = vadd.s32 %v675, 127
  %v677 = vshll.u32 %v676, 23
  %v678 = vor.u32 4788187, %v677
  %v679 = vand.u32 2147483647, %v678
  %v681 = vcvt.s32.f32 %v674
  %v682 = vmul.f32 %v681, %v679
  %v683 = vxor.u32 %v682, 2147483648
  %v684 = vsel %vm601, %v683, %v682
  %v685 = vsub.s32 4, %v661
  %v686 = vsel %vm601, %v685, %v661
  %v687 = vsel %vm600, %v171, %v684
  %v688 = vsel %vm600, 0, %v686
  %v689 = vcosq.f32.pop %v687
  %v690 = vsinq.f32.pop %v687
  %vm691 = vweird.f32 %v171
  %v692 = vadd.s32 %v688, 3
  %v693 = vand.u32 %v692, 3
  %vm694 = vcmp.lt.s32.totalorder %v693, 2
  %vm695 = vcmp.eq.s32.totalorder %v693, 0
  %v696 = vxor.u32 %v690, 2147483648
  %v697 = vsel %vm695, %v689, %v696
  %vm698 = vcmp.eq.s32.totalorder %v693, 2
  %v699 = vxor.u32 %v689, 2147483648
  %v700 = vsel %vm698, %v699, %v690
  %v701 = vsel %vm694, %v697, %v700
  %v702 = vsel %vm691, nan, %v701
  %v703 = vand.u32 2147483647, %v172
  %vm704 = vcmp.le.f32.partialorder %v703, 0.7853982
  %vm705 = vcmp.lt.s32.totalorder %v172, 0
  %v706 = vand.u32 %v172, 2139095040
  %v707 = vshrl.u32 %v706, 23
  %v708 = vsub.s32 %v707, 127
  %v709 = vand.u32 2147483647, %v172
  %v710 = vand.u32 %v709, 8388607
  %v711 = vor.u32 %v710, 8388608
  %v712 = vsub.s32 0, %v711
  %v713 = vadd.s32 %v708, 1
  %vm714 = vcmp.gt.s32.totalorder %v713, 0
  %v715 = vsel %vm714, %v713, 0
  %v716 = vshrl.u32 %v715, 5
  %v717 = vand.u32 %v715, 31
  %v718 = vsub.s32 32, %v717
  %v719 = vshrl.u32 683565275, %v718
  %v720 = vshll.u32 683565275, %v717
  %v721 = vshrl.u32 2475754826, %v718
  %v722 = vor.u32 %v720, %v721
  %v723 = vshll.u32 2475754826, %v717
  %v724 = vshrl.u32 2131351028, %v718
  %v725 = vor.u32 %v723, %v724
  %v726 = vshll.u32 2131351028, %v717
  %v727 = vshrl.u32 2102212464, %v718
  %v728 = vor.u32 %v726, %v727
  %v729 = vshll.u32 2102212464, %v717
  %v730 = vshrl.u32 920167782, %v718
  %v731 = vor.u32 %v729, %v730
  %v732 = vshll.u32 920167782, %v717
  %v733 = vshrl.u32 1326507024, %v718
  %v734 = vor.u32 %v732, %v733
  %vm735 = vcmp.lt.s32.totalorder %v716, 1
  %vm736 = vcmp.lt.s32.totalorder %v716, 2
  %vm737 = vcmp.lt.s32.totalorder %v716, 3
  %vm738 = vcmp.lt.s32.totalorder %v716, 4
  %v739 = vsel %vm735, %v719, %v722
  %v740 = vsel %vm738, %v728, 2102212464
  %v741 = vsel %vm737, %v725, %v740
  %v742 = vsel %vm736, %v739, %v741
  %v743 = vsel %vm735, %v722, %v725
  %v744 = vsel %vm738, %v731, 920167782
  %v745 = vsel %vm737, %v728, %v744
  %v746 = vsel %vm736, %v743, %v745
  %v747 = vsel %vm735, %v725, %v728
  %v748 = vsel %vm738, %v734, 1326507024
  %v749 = vsel %vm737, %v731, %v748
  %v750 = vsel %vm736, %v747, %v749
  %v751 = vshll.u32 %v711, 8
  %v752 = vmul.u32.u64.compose %v751, %v750
  %v753 = vextract.low.u32 %v752
  %v754 = vextract.high.u32 %v752
  %v755 = vmul.u32.u64.compose %v751, %v746
  %v756 = vextract.low.u32 %v755
  %v757 = vextract.high.u32 %v755
  %v758 = vmul.u32 %v751, %v742
  %v759 = vadd.s32 %v754, %v756
  %vm760 = vc.u32 %v754, %v756
  %v761 = vadd.s32 %v757, 1
  %v762 = vsel %vm760, %v761, %v757
  %v763 = vadd.s32 %v758, %v762
  %v764 = vadd.s32 %v763, 536870912
  %v765 = vshrl.u32 %v764, 30
  %v766 = vshll.u32 %v765, 30
  %v767 = vsub.s32 %v763, %v766
  %vm768 = vcmp.lt.s32.totalorder %v767, 0
  %v769 = vsub.s32 0, %v767
  %v770 = vsel %vm768, %v769, %v767
  %v771 = vclz %v770
  %v772 = vsub.s32 %v771, 2
  %vm773 = vcmp.gt.s32.totalorder 0, %v772
  %v774 = vsel %vm773, 0, %v772
  %v775 = vsub.s32 32, %v774
  %v776 = vshll.u32 %v767, %v774
  %v777 = vshrl.u32 %v759, %v775
  %v778 = vor.u32 %v776, %v777
  %v779 = vsub.s32 4294967266, %v774
  %v780 = vadd.s32 %v779, 127
  %v781 = vshll.u32 %v780, 23
  %v782 = vor.u32 4788187, %v781
  %v783 = vand.u32 2147483647, %v782
  %v785 = vcvt.s32.f32 %v778
  %v786 = vmul.f32 %v785, %v783
  %v787 = vxor.u32 %v786, 2147483648
  %v788 = vsel %vm705, %v787, %v786
  %v789 = vsub.s32 4, %v765
  %v790 = vsel %vm705, %v789, %v765
  %v791 = vsel %vm704, %v172, %v788
  %v792 = vsel %vm704, 0, %v790
  %v793 = vcosq.f32.pop %v791
  %v794 = vsinq.f32.pop %v791
  %vm795 = vweird.f32 %v172
  %v796 = vadd.s32 %v792, 3
  %v797 = vand.u32 %v796, 3
  %vm798 = vcmp.lt.s32.totalorder %v797, 2
  %vm799 = vcmp.eq.s32.totalorder %v797, 0
  %v800 = vxor.u32 %v794, 2147483648
  %v801 = vsel %vm799, %v793, %v800
  %vm802 = vcmp.eq.s32.totalorder %v797, 2
  %v803 = vxor.u32 %v793, 2147483648
  %v804 = vsel %vm802, %v803, %v794
  %v805 = vsel %vm798, %v801, %v804
  %v806 = vsel %vm795, nan, %v805
  %v807 = vand.u32 2147483647, %v173
  %vm808 = vcmp.le.f32.partialorder %v807, 0.7853982
  %vm809 = vcmp.lt.s32.totalorder %v173, 0
  %v810 = vand.u32 %v173, 2139095040
  %v811 = vshrl.u32 %v810, 23
  %v812 = vsub.s32 %v811, 127
  %v813 = vand.u32 2147483647, %v173
  %v814 = vand.u32 %v813, 8388607
  %v815 = vor.u32 %v814, 8388608
  %v816 = vsub.s32 0, %v815
  %v817 = vadd.s32 %v812, 1
  %vm818 = vcmp.gt.s32.totalorder %v817, 0
  %v819 = vsel %vm818, %v817, 0
  %v820 = vshrl.u32 %v819, 5
  %v821 = vand.u32 %v819, 31
  %v822 = vsub.s32 32, %v821
  %v823 = vshrl.u32 683565275, %v822
  %v824 = vshll.u32 683565275, %v821
  %v825 = vshrl.u32 2475754826, %v822
  %v826 = vor.u32 %v824, %v825
  %v827 = vshll.u32 2475754826, %v821
  %v828 = vshrl.u32 2131351028, %v822
  %v829 = vor.u32 %v827, %v828
  %v830 = vshll.u32 2131351028, %v821
  %v831 = vshrl.u32 2102212464, %v822
  %v832 = vor.u32 %v830, %v831
  %v833 = vshll.u32 2102212464, %v821
  %v834 = vshrl.u32 920167782, %v822
  %v835 = vor.u32 %v833, %v834
  %v836 = vshll.u32 920167782, %v821
  %v837 = vshrl.u32 1326507024, %v822
  %v838 = vor.u32 %v836, %v837
  %vm839 = vcmp.lt.s32.totalorder %v820, 1
  %vm840 = vcmp.lt.s32.totalorder %v820, 2
  %vm841 = vcmp.lt.s32.totalorder %v820, 3
  %vm842 = vcmp.lt.s32.totalorder %v820, 4
  %v843 = vsel %vm839, %v823, %v826
  %v844 = vsel %vm842, %v832, 2102212464
  %v845 = vsel %vm841, %v829, %v844
  %v846 = vsel %vm840, %v843, %v845
  %v847 = vsel %vm839, %v826, %v829
  %v848 = vsel %vm842, %v835, 920167782
  %v849 = vsel %vm841, %v832, %v848
  %v850 = vsel %vm840, %v847, %v849
  %v851 = vsel %vm839, %v829, %v832
  %v852 = vsel %vm842, %v838, 1326507024
  %v853 = vsel %vm841, %v835, %v852
  %v854 = vsel %vm840, %v851, %v853
  %v855 = vshll.u32 %v815, 8
  %v856 = vmul.u32.u64.compose %v855, %v854
  %v857 = vextract.low.u32 %v856
  %v858 = vextract.high.u32 %v856
  %v859 = vmul.u32.u64.compose %v855, %v850
  %v860 = vextract.low.u32 %v859
  %v861 = vextract.high.u32 %v859
  %v862 = vmul.u32 %v855, %v846
  %v863 = vadd.s32 %v858, %v860
  %vm864 = vc.u32 %v858, %v860
  %v865 = vadd.s32 %v861, 1
  %v866 = vsel %vm864, %v865, %v861
  %v867 = vadd.s32 %v862, %v866
  %v868 = vadd.s32 %v867, 536870912
  %v869 = vshrl.u32 %v868, 30
  %v870 = vshll.u32 %v869, 30
  %v871 = vsub.s32 %v867, %v870
  %vm872 = vcmp.lt.s32.totalorder %v871, 0
  %v873 = vsub.s32 0, %v871
  %v874 = vsel %vm872, %v873, %v871
  %v875 = vclz %v874
  %v876 = vsub.s32 %v875, 2
  %vm877 = vcmp.gt.s32.totalorder 0, %v876
  %v878 = vsel %vm877, 0, %v876
  %v879 = vsub.s32 32, %v878
  %v880 = vshll.u32 %v871, %v878
  %v881 = vshrl.u32 %v863, %v879
  %v882 = vor.u32 %v880, %v881
  %v883 = vsub.s32 4294967266, %v878
  %v884 = vadd.s32 %v883, 127
  %v885 = vshll.u32 %v884, 23
  %v886 = vor.u32 4788187, %v885
  %v887 = vand.u32 2147483647, %v886
  %v889 = vcvt.s32.f32 %v882
  %v890 = vmul.f32 %v889, %v887
  %v891 = vxor.u32 %v890, 2147483648
  %v892 = vsel %vm809, %v891, %v890
  %v893 = vsub.s32 4, %v869
  %v894 = vsel %vm809, %v893, %v869
  %v895 = vsel %vm808, %v173, %v892
  %v896 = vsel %vm808, 0, %v894
  %v897 = vcosq.f32.pop %v895
  %v898 = vsinq.f32.pop %v895
  %vm899 = vweird.f32 %v173
  %v900 = vadd.s32 %v896, 3
  %v901 = vand.u32 %v900, 3
  %vm902 = vcmp.lt.s32.totalorder %v901, 2
  %vm903 = vcmp.eq.s32.totalorder %v901, 0
  %v904 = vxor.u32 %v898, 2147483648
  %v905 = vsel %vm903, %v897, %v904
  %vm906 = vcmp.eq.s32.totalorder %v901, 2
  %v907 = vxor.u32 %v897, 2147483648
  %v908 = vsel %vm906, %v907, %v898
  %v909 = vsel %vm902, %v905, %v908
  %v910 = vsel %vm899, nan, %v909
  %v911 = vand.u32 2147483647, %v174
  %vm912 = vcmp.le.f32.partialorder %v911, 0.7853982
  %vm913 = vcmp.lt.s32.totalorder %v174, 0
  %v914 = vand.u32 %v174, 2139095040
  %v915 = vshrl.u32 %v914, 23
  %v916 = vsub.s32 %v915, 127
  %v917 = vand.u32 2147483647, %v174
  %v918 = vand.u32 %v917, 8388607
  %v919 = vor.u32 %v918, 8388608
  %v920 = vsub.s32 0, %v919
  %v921 = vadd.s32 %v916, 1
  %vm922 = vcmp.gt.s32.totalorder %v921, 0
  %v923 = vsel %vm922, %v921, 0
  %v924 = vshrl.u32 %v923, 5
  %v925 = vand.u32 %v923, 31
  %v926 = vsub.s32 32, %v925
  %v927 = vshrl.u32 683565275, %v926
  %v928 = vshll.u32 683565275, %v925
  %v929 = vshrl.u32 2475754826, %v926
  %v930 = vor.u32 %v928, %v929
  %v931 = vshll.u32 2475754826, %v925
  %v932 = vshrl.u32 2131351028, %v926
  %v933 = vor.u32 %v931, %v932
  %v934 = vshll.u32 2131351028, %v925
  %v935 = vshrl.u32 2102212464, %v926
  %v936 = vor.u32 %v934, %v935
  %v937 = vshll.u32 2102212464, %v925
  %v938 = vshrl.u32 920167782, %v926
  %v939 = vor.u32 %v937, %v938
  %v940 = vshll.u32 920167782, %v925
  %v941 = vshrl.u32 1326507024, %v926
  %v942 = vor.u32 %v940, %v941
  %vm943 = vcmp.lt.s32.totalorder %v924, 1
  %vm944 = vcmp.lt.s32.totalorder %v924, 2
  %vm945 = vcmp.lt.s32.totalorder %v924, 3
  %vm946 = vcmp.lt.s32.totalorder %v924, 4
  %v947 = vsel %vm943, %v927, %v930
  %v948 = vsel %vm946, %v936, 2102212464
  %v949 = vsel %vm945, %v933, %v948
  %v950 = vsel %vm944, %v947, %v949
  %v951 = vsel %vm943, %v930, %v933
  %v952 = vsel %vm946, %v939, 920167782
  %v953 = vsel %vm945, %v936, %v952
  %v954 = vsel %vm944, %v951, %v953
  %v955 = vsel %vm943, %v933, %v936
  %v956 = vsel %vm946, %v942, 1326507024
  %v957 = vsel %vm945, %v939, %v956
  %v958 = vsel %vm944, %v955, %v957
  %v959 = vshll.u32 %v919, 8
  %v960 = vmul.u32.u64.compose %v959, %v958
  %v961 = vextract.low.u32 %v960
  %v962 = vextract.high.u32 %v960
  %v963 = vmul.u32.u64.compose %v959, %v954
  %v964 = vextract.low.u32 %v963
  %v965 = vextract.high.u32 %v963
  %v966 = vmul.u32 %v959, %v950
  %v967 = vadd.s32 %v962, %v964
  %vm968 = vc.u32 %v962, %v964
  %v969 = vadd.s32 %v965, 1
  %v970 = vsel %vm968, %v969, %v965
  %v971 = vadd.s32 %v966, %v970
  %v972 = vadd.s32 %v971, 536870912
  %v973 = vshrl.u32 %v972, 30
  %v974 = vshll.u32 %v973, 30
  %v975 = vsub.s32 %v971, %v974
  %vm976 = vcmp.lt.s32.totalorder %v975, 0
  %v977 = vsub.s32 0, %v975
  %v978 = vsel %vm976, %v977, %v975
  %v979 = vclz %v978
  %v980 = vsub.s32 %v979, 2
  %vm981 = vcmp.gt.s32.totalorder 0, %v980
  %v982 = vsel %vm981, 0, %v980
  %v983 = vsub.s32 32, %v982
  %v984 = vshll.u32 %v975, %v982
  %v985 = vshrl.u32 %v967, %v983
  %v986 = vor.u32 %v984, %v985
  %v987 = vsub.s32 4294967266, %v982
  %v988 = vadd.s32 %v987, 127
  %v989 = vshll.u32 %v988, 23
  %v990 = vor.u32 4788187, %v989
  %v991 = vand.u32 2147483647, %v990
  %v993 = vcvt.s32.f32 %v986
  %v994 = vmul.f32 %v993, %v991
  %v995 = vxor.u32 %v994, 2147483648
  %v996 = vsel %vm913, %v995, %v994
  %v997 = vsub.s32 4, %v973
  %v998 = vsel %vm913, %v997, %v973
  %v999 = vsel %vm912, %v174, %v996
  %v1000 = vsel %vm912, 0, %v998
  %v1001 = vcosq.f32.pop %v999
  %v1002 = vsinq.f32.pop %v999
  %vm1003 = vweird.f32 %v174
  %v1004 = vadd.s32 %v1000, 3
  %v1005 = vand.u32 %v1004, 3
  %vm1006 = vcmp.lt.s32.totalorder %v1005, 2
  %vm1007 = vcmp.eq.s32.totalorder %v1005, 0
  %v1008 = vxor.u32 %v1002, 2147483648
  %v1009 = vsel %vm1007, %v1001, %v1008
  %vm1010 = vcmp.eq.s32.totalorder %v1005, 2
  %v1011 = vxor.u32 %v1001, 2147483648
  %v1012 = vsel %vm1010, %v1011, %v1002
  %v1013 = vsel %vm1006, %v1009, %v1012
  %v1014 = vsel %vm1003, nan, %v1013
  %v1015 = vand.u32 2147483647, %v175
  %vm1016 = vcmp.le.f32.partialorder %v1015, 0.7853982
  %vm1017 = vcmp.lt.s32.totalorder %v175, 0
  %v1018 = vand.u32 %v175, 2139095040
  %v1019 = vshrl.u32 %v1018, 23
  %v1020 = vsub.s32 %v1019, 127
  %v1021 = vand.u32 2147483647, %v175
  %v1022 = vand.u32 %v1021, 8388607
  %v1023 = vor.u32 %v1022, 8388608
  %v1024 = vsub.s32 0, %v1023
  %v1025 = vadd.s32 %v1020, 1
  %vm1026 = vcmp.gt.s32.totalorder %v1025, 0
  %v1027 = vsel %vm1026, %v1025, 0
  %v1028 = vshrl.u32 %v1027, 5
  %v1029 = vand.u32 %v1027, 31
  %v1030 = vsub.s32 32, %v1029
  %v1031 = vshrl.u32 683565275, %v1030
  %v1032 = vshll.u32 683565275, %v1029
  %v1033 = vshrl.u32 2475754826, %v1030
  %v1034 = vor.u32 %v1032, %v1033
  %v1035 = vshll.u32 2475754826, %v1029
  %v1036 = vshrl.u32 2131351028, %v1030
  %v1037 = vor.u32 %v1035, %v1036
  %v1038 = vshll.u32 2131351028, %v1029
  %v1039 = vshrl.u32 2102212464, %v1030
  %v1040 = vor.u32 %v1038, %v1039
  %v1041 = vshll.u32 2102212464, %v1029
  %v1042 = vshrl.u32 920167782, %v1030
  %v1043 = vor.u32 %v1041, %v1042
  %v1044 = vshll.u32 920167782, %v1029
  %v1045 = vshrl.u32 1326507024, %v1030
  %v1046 = vor.u32 %v1044, %v1045
  %vm1047 = vcmp.lt.s32.totalorder %v1028, 1
  %vm1048 = vcmp.lt.s32.totalorder %v1028, 2
  %vm1049 = vcmp.lt.s32.totalorder %v1028, 3
  %vm1050 = vcmp.lt.s32.totalorder %v1028, 4
  %v1051 = vsel %vm1047, %v1031, %v1034
  %v1052 = vsel %vm1050, %v1040, 2102212464
  %v1053 = vsel %vm1049, %v1037, %v1052
  %v1054 = vsel %vm1048, %v1051, %v1053
  %v1055 = vsel %vm1047, %v1034, %v1037
  %v1056 = vsel %vm1050, %v1043, 920167782
  %v1057 = vsel %vm1049, %v1040, %v1056
  %v1058 = vsel %vm1048, %v1055, %v1057
  %v1059 = vsel %vm1047, %v1037, %v1040
  %v1060 = vsel %vm1050, %v1046, 1326507024
  %v1061 = vsel %vm1049, %v1043, %v1060
  %v1062 = vsel %vm1048, %v1059, %v1061
  %v1063 = vshll.u32 %v1023, 8
  %v1064 = vmul.u32.u64.compose %v1063, %v1062
  %v1065 = vextract.low.u32 %v1064
  %v1066 = vextract.high.u32 %v1064
  %v1067 = vmul.u32.u64.compose %v1063, %v1058
  %v1068 = vextract.low.u32 %v1067
  %v1069 = vextract.high.u32 %v1067
  %v1070 = vmul.u32 %v1063, %v1054
  %v1071 = vadd.s32 %v1066, %v1068
  %vm1072 = vc.u32 %v1066, %v1068
  %v1073 = vadd.s32 %v1069, 1
  %v1074 = vsel %vm1072, %v1073, %v1069
  %v1075 = vadd.s32 %v1070, %v1074
  %v1076 = vadd.s32 %v1075, 536870912
  %v1077 = vshrl.u32 %v1076, 30
  %v1078 = vshll.u32 %v1077, 30
  %v1079 = vsub.s32 %v1075, %v1078
  %vm1080 = vcmp.lt.s32.totalorder %v1079, 0
  %v1081 = vsub.s32 0, %v1079
  %v1082 = vsel %vm1080, %v1081, %v1079
  %v1083 = vclz %v1082
  %v1084 = vsub.s32 %v1083, 2
  %vm1085 = vcmp.gt.s32.totalorder 0, %v1084
  %v1086 = vsel %vm1085, 0, %v1084
  %v1087 = vsub.s32 32, %v1086
  %v1088 = vshll.u32 %v1079, %v1086
  %v1089 = vshrl.u32 %v1071, %v1087
  %v1090 = vor.u32 %v1088, %v1089
  %v1091 = vsub.s32 4294967266, %v1086
  %v1092 = vadd.s32 %v1091, 127
  %v1093 = vshll.u32 %v1092, 23
  %v1094 = vor.u32 4788187, %v1093
  %v1095 = vand.u32 2147483647, %v1094
  %v1097 = vcvt.s32.f32 %v1090
  %v1098 = vmul.f32 %v1097, %v1095
  %v1099 = vxor.u32 %v1098, 2147483648
  %v1100 = vsel %vm1017, %v1099, %v1098
  %v1101 = vsub.s32 4, %v1077
  %v1102 = vsel %vm1017, %v1101, %v1077
  %v1103 = vsel %vm1016, %v175, %v1100
  %v1104 = vsel %vm1016, 0, %v1102
  %v1105 = vcosq.f32.pop %v1103
  %v1106 = vsinq.f32.pop %v1103
  %vm1107 = vweird.f32 %v175
  %v1108 = vadd.s32 %v1104, 3
  %v1109 = vand.u32 %v1108, 3
  %vm1110 = vcmp.lt.s32.totalorder %v1109, 2
  %vm1111 = vcmp.eq.s32.totalorder %v1109, 0
  %v1112 = vxor.u32 %v1106, 2147483648
  %v1113 = vsel %vm1111, %v1105, %v1112
  %vm1114 = vcmp.eq.s32.totalorder %v1109, 2
  %v1115 = vxor.u32 %v1105, 2147483648
  %v1116 = vsel %vm1114, %v1115, %v1106
  %v1117 = vsel %vm1110, %v1113, %v1116
  %v1118 = vsel %vm1107, nan, %v1117
  %v1119 = vand.u32 2147483647, %v176
  %vm1120 = vcmp.le.f32.partialorder %v1119, 0.7853982
  %vm1121 = vcmp.lt.s32.totalorder %v176, 0
  %v1122 = vand.u32 %v176, 2139095040
  %v1123 = vshrl.u32 %v1122, 23
  %v1124 = vsub.s32 %v1123, 127
  %v1125 = vand.u32 2147483647, %v176
  %v1126 = vand.u32 %v1125, 8388607
  %v1127 = vor.u32 %v1126, 8388608
  %v1128 = vsub.s32 0, %v1127
  %v1129 = vadd.s32 %v1124, 1
  %vm1130 = vcmp.gt.s32.totalorder %v1129, 0
  %v1131 = vsel %vm1130, %v1129, 0
  %v1132 = vshrl.u32 %v1131, 5
  %v1133 = vand.u32 %v1131, 31
  %v1134 = vsub.s32 32, %v1133
  %v1135 = vshrl.u32 683565275, %v1134
  %v1136 = vshll.u32 683565275, %v1133
  %v1137 = vshrl.u32 2475754826, %v1134
  %v1138 = vor.u32 %v1136, %v1137
  %v1139 = vshll.u32 2475754826, %v1133
  %v1140 = vshrl.u32 2131351028, %v1134
  %v1141 = vor.u32 %v1139, %v1140
  %v1142 = vshll.u32 2131351028, %v1133
  %v1143 = vshrl.u32 2102212464, %v1134
  %v1144 = vor.u32 %v1142, %v1143
  %v1145 = vshll.u32 2102212464, %v1133
  %v1146 = vshrl.u32 920167782, %v1134
  %v1147 = vor.u32 %v1145, %v1146
  %v1148 = vshll.u32 920167782, %v1133
  %v1149 = vshrl.u32 1326507024, %v1134
  %v1150 = vor.u32 %v1148, %v1149
  %vm1151 = vcmp.lt.s32.totalorder %v1132, 1
  %vm1152 = vcmp.lt.s32.totalorder %v1132, 2
  %vm1153 = vcmp.lt.s32.totalorder %v1132, 3
  %vm1154 = vcmp.lt.s32.totalorder %v1132, 4
  %v1155 = vsel %vm1151, %v1135, %v1138
  %v1156 = vsel %vm1154, %v1144, 2102212464
  %v1157 = vsel %vm1153, %v1141, %v1156
  %v1158 = vsel %vm1152, %v1155, %v1157
  %v1159 = vsel %vm1151, %v1138, %v1141
  %v1160 = vsel %vm1154, %v1147, 920167782
  %v1161 = vsel %vm1153, %v1144, %v1160
  %v1162 = vsel %vm1152, %v1159, %v1161
  %v1163 = vsel %vm1151, %v1141, %v1144
  %v1164 = vsel %vm1154, %v1150, 1326507024
  %v1165 = vsel %vm1153, %v1147, %v1164
  %v1166 = vsel %vm1152, %v1163, %v1165
  %v1167 = vshll.u32 %v1127, 8
  %v1168 = vmul.u32.u64.compose %v1167, %v1166
  %v1169 = vextract.low.u32 %v1168
  %v1170 = vextract.high.u32 %v1168
  %v1171 = vmul.u32.u64.compose %v1167, %v1162
  %v1172 = vextract.low.u32 %v1171
  %v1173 = vextract.high.u32 %v1171
  %v1174 = vmul.u32 %v1167, %v1158
  %v1175 = vadd.s32 %v1170, %v1172
  %vm1176 = vc.u32 %v1170, %v1172
  %v1177 = vadd.s32 %v1173, 1
  %v1178 = vsel %vm1176, %v1177, %v1173
  %v1179 = vadd.s32 %v1174, %v1178
  %v1180 = vadd.s32 %v1179, 536870912
  %v1181 = vshrl.u32 %v1180, 30
  %v1182 = vshll.u32 %v1181, 30
  %v1183 = vsub.s32 %v1179, %v1182
  %vm1184 = vcmp.lt.s32.totalorder %v1183, 0
  %v1185 = vsub.s32 0, %v1183
  %v1186 = vsel %vm1184, %v1185, %v1183
  %v1187 = vclz %v1186
  %v1188 = vsub.s32 %v1187, 2
  %vm1189 = vcmp.gt.s32.totalorder 0, %v1188
  %v1190 = vsel %vm1189, 0, %v1188
  %v1191 = vsub.s32 32, %v1190
  %v1192 = vshll.u32 %v1183, %v1190
  %v1193 = vshrl.u32 %v1175, %v1191
  %v1194 = vor.u32 %v1192, %v1193
  %v1195 = vsub.s32 4294967266, %v1190
  %v1196 = vadd.s32 %v1195, 127
  %v1197 = vshll.u32 %v1196, 23
  %v1198 = vor.u32 4788187, %v1197
  %v1199 = vand.u32 2147483647, %v1198
  %v1201 = vcvt.s32.f32 %v1194
  %v1202 = vmul.f32 %v1201, %v1199
  %v1203 = vxor.u32 %v1202, 2147483648
  %v1204 = vsel %vm1121, %v1203, %v1202
  %v1205 = vsub.s32 4, %v1181
  %v1206 = vsel %vm1121, %v1205, %v1181
  %v1207 = vsel %vm1120, %v176, %v1204
  %v1208 = vsel %vm1120, 0, %v1206
  %v1209 = vcosq.f32.pop %v1207
  %v1210 = vsinq.f32.pop %v1207
  %vm1211 = vweird.f32 %v176
  %v1212 = vadd.s32 %v1208, 3
  %v1213 = vand.u32 %v1212, 3
  %vm1214 = vcmp.lt.s32.totalorder %v1213, 2
  %vm1215 = vcmp.eq.s32.totalorder %v1213, 0
  %v1216 = vxor.u32 %v1210, 2147483648
  %v1217 = vsel %vm1215, %v1209, %v1216
  %vm1218 = vcmp.eq.s32.totalorder %v1213, 2
  %v1219 = vxor.u32 %v1209, 2147483648
  %v1220 = vsel %vm1218, %v1219, %v1210
  %v1221 = vsel %vm1214, %v1217, %v1220
  %v1222 = vsel %vm1211, nan, %v1221
  %v1223 = vand.u32 2147483647, %v177
  %vm1224 = vcmp.le.f32.partialorder %v1223, 0.7853982
  %vm1225 = vcmp.lt.s32.totalorder %v177, 0
  %v1226 = vand.u32 %v177, 2139095040
  %v1227 = vshrl.u32 %v1226, 23
  %v1228 = vsub.s32 %v1227, 127
  %v1229 = vand.u32 2147483647, %v177
  %v1230 = vand.u32 %v1229, 8388607
  %v1231 = vor.u32 %v1230, 8388608
  %v1232 = vsub.s32 0, %v1231
  %v1233 = vadd.s32 %v1228, 1
  %vm1234 = vcmp.gt.s32.totalorder %v1233, 0
  %v1235 = vsel %vm1234, %v1233, 0
  %v1236 = vshrl.u32 %v1235, 5
  %v1237 = vand.u32 %v1235, 31
  %v1238 = vsub.s32 32, %v1237
  %v1239 = vshrl.u32 683565275, %v1238
  %v1240 = vshll.u32 683565275, %v1237
  %v1241 = vshrl.u32 2475754826, %v1238
  %v1242 = vor.u32 %v1240, %v1241
  %v1243 = vshll.u32 2475754826, %v1237
  %v1244 = vshrl.u32 2131351028, %v1238
  %v1245 = vor.u32 %v1243, %v1244
  %v1246 = vshll.u32 2131351028, %v1237
  %v1247 = vshrl.u32 2102212464, %v1238
  %v1248 = vor.u32 %v1246, %v1247
  %v1249 = vshll.u32 2102212464, %v1237
  %v1250 = vshrl.u32 920167782, %v1238
  %v1251 = vor.u32 %v1249, %v1250
  %v1252 = vshll.u32 920167782, %v1237
  %v1253 = vshrl.u32 1326507024, %v1238
  %v1254 = vor.u32 %v1252, %v1253
  %vm1255 = vcmp.lt.s32.totalorder %v1236, 1
  %vm1256 = vcmp.lt.s32.totalorder %v1236, 2
  %vm1257 = vcmp.lt.s32.totalorder %v1236, 3
  %vm1258 = vcmp.lt.s32.totalorder %v1236, 4
  %v1259 = vsel %vm1255, %v1239, %v1242
  %v1260 = vsel %vm1258, %v1248, 2102212464
  %v1261 = vsel %vm1257, %v1245, %v1260
  %v1262 = vsel %vm1256, %v1259, %v1261
  %v1263 = vsel %vm1255, %v1242, %v1245
  %v1264 = vsel %vm1258, %v1251, 920167782
  %v1265 = vsel %vm1257, %v1248, %v1264
  %v1266 = vsel %vm1256, %v1263, %v1265
  %v1267 = vsel %vm1255, %v1245, %v1248
  %v1268 = vsel %vm1258, %v1254, 1326507024
  %v1269 = vsel %vm1257, %v1251, %v1268
  %v1270 = vsel %vm1256, %v1267, %v1269
  %v1271 = vshll.u32 %v1231, 8
  %v1272 = vmul.u32.u64.compose %v1271, %v1270
  %v1273 = vextract.low.u32 %v1272
  %v1274 = vextract.high.u32 %v1272
  %v1275 = vmul.u32.u64.compose %v1271, %v1266
  %v1276 = vextract.low.u32 %v1275
  %v1277 = vextract.high.u32 %v1275
  %v1278 = vmul.u32 %v1271, %v1262
  %v1279 = vadd.s32 %v1274, %v1276
  %vm1280 = vc.u32 %v1274, %v1276
  %v1281 = vadd.s32 %v1277, 1
  %v1282 = vsel %vm1280, %v1281, %v1277
  %v1283 = vadd.s32 %v1278, %v1282
  %v1284 = vadd.s32 %v1283, 536870912
  %v1285 = vshrl.u32 %v1284, 30
  %v1286 = vshll.u32 %v1285, 30
  %v1287 = vsub.s32 %v1283, %v1286
  %vm1288 = vcmp.lt.s32.totalorder %v1287, 0
  %v1289 = vsub.s32 0, %v1287
  %v1290 = vsel %vm1288, %v1289, %v1287
  %v1291 = vclz %v1290
  %v1292 = vsub.s32 %v1291, 2
  %vm1293 = vcmp.gt.s32.totalorder 0, %v1292
  %v1294 = vsel %vm1293, 0, %v1292
  %v1295 = vsub.s32 32, %v1294
  %v1296 = vshll.u32 %v1287, %v1294
  %v1297 = vshrl.u32 %v1279, %v1295
  %v1298 = vor.u32 %v1296, %v1297
  %v1299 = vsub.s32 4294967266, %v1294
  %v1300 = vadd.s32 %v1299, 127
  %v1301 = vshll.u32 %v1300, 23
  %v1302 = vor.u32 4788187, %v1301
  %v1303 = vand.u32 2147483647, %v1302
  %v1305 = vcvt.s32.f32 %v1298
  %v1306 = vmul.f32 %v1305, %v1303
  %v1307 = vxor.u32 %v1306, 2147483648
  %v1308 = vsel %vm1225, %v1307, %v1306
  %v1309 = vsub.s32 4, %v1285
  %v1310 = vsel %vm1225, %v1309, %v1285
  %v1311 = vsel %vm1224, %v177, %v1308
  %v1312 = vsel %vm1224, 0, %v1310
  %v1313 = vcosq.f32.pop %v1311
  %v1314 = vsinq.f32.pop %v1311
  %vm1315 = vweird.f32 %v177
  %v1316 = vadd.s32 %v1312, 3
  %v1317 = vand.u32 %v1316, 3
  %vm1318 = vcmp.lt.s32.totalorder %v1317, 2
  %vm1319 = vcmp.eq.s32.totalorder %v1317, 0
  %v1320 = vxor.u32 %v1314, 2147483648
  %v1321 = vsel %vm1319, %v1313, %v1320
  %vm1322 = vcmp.eq.s32.totalorder %v1317, 2
  %v1323 = vxor.u32 %v1313, 2147483648
  %v1324 = vsel %vm1322, %v1323, %v1314
  %v1325 = vsel %vm1318, %v1321, %v1324
  %v1326 = vsel %vm1315, nan, %v1325
  %v1327 = vand.u32 2147483647, %v178
  %vm1328 = vcmp.le.f32.partialorder %v1327, 0.7853982
  %vm1329 = vcmp.lt.s32.totalorder %v178, 0
  %v1330 = vand.u32 %v178, 2139095040
  %v1331 = vshrl.u32 %v1330, 23
  %v1332 = vsub.s32 %v1331, 127
  %v1333 = vand.u32 2147483647, %v178
  %v1334 = vand.u32 %v1333, 8388607
  %v1335 = vor.u32 %v1334, 8388608
  %v1336 = vsub.s32 0, %v1335
  %v1337 = vadd.s32 %v1332, 1
  %vm1338 = vcmp.gt.s32.totalorder %v1337, 0
  %v1339 = vsel %vm1338, %v1337, 0
  %v1340 = vshrl.u32 %v1339, 5
  %v1341 = vand.u32 %v1339, 31
  %v1342 = vsub.s32 32, %v1341
  %v1343 = vshrl.u32 683565275, %v1342
  %v1344 = vshll.u32 683565275, %v1341
  %v1345 = vshrl.u32 2475754826, %v1342
  %v1346 = vor.u32 %v1344, %v1345
  %v1347 = vshll.u32 2475754826, %v1341
  %v1348 = vshrl.u32 2131351028, %v1342
  %v1349 = vor.u32 %v1347, %v1348
  %v1350 = vshll.u32 2131351028, %v1341
  %v1351 = vshrl.u32 2102212464, %v1342
  %v1352 = vor.u32 %v1350, %v1351
  %v1353 = vshll.u32 2102212464, %v1341
  %v1354 = vshrl.u32 920167782, %v1342
  %v1355 = vor.u32 %v1353, %v1354
  %v1356 = vshll.u32 920167782, %v1341
  %v1357 = vshrl.u32 1326507024, %v1342
  %v1358 = vor.u32 %v1356, %v1357
  %vm1359 = vcmp.lt.s32.totalorder %v1340, 1
  %vm1360 = vcmp.lt.s32.totalorder %v1340, 2
  %vm1361 = vcmp.lt.s32.totalorder %v1340, 3
  %vm1362 = vcmp.lt.s32.totalorder %v1340, 4
  %v1363 = vsel %vm1359, %v1343, %v1346
  %v1364 = vsel %vm1362, %v1352, 2102212464
  %v1365 = vsel %vm1361, %v1349, %v1364
  %v1366 = vsel %vm1360, %v1363, %v1365
  %v1367 = vsel %vm1359, %v1346, %v1349
  %v1368 = vsel %vm1362, %v1355, 920167782
  %v1369 = vsel %vm1361, %v1352, %v1368
  %v1370 = vsel %vm1360, %v1367, %v1369
  %v1371 = vsel %vm1359, %v1349, %v1352
  %v1372 = vsel %vm1362, %v1358, 1326507024
  %v1373 = vsel %vm1361, %v1355, %v1372
  %v1374 = vsel %vm1360, %v1371, %v1373
  %v1375 = vshll.u32 %v1335, 8
  %v1376 = vmul.u32.u64.compose %v1375, %v1374
  %v1377 = vextract.low.u32 %v1376
  %v1378 = vextract.high.u32 %v1376
  %v1379 = vmul.u32.u64.compose %v1375, %v1370
  %v1380 = vextract.low.u32 %v1379
  %v1381 = vextract.high.u32 %v1379
  %v1382 = vmul.u32 %v1375, %v1366
  %v1383 = vadd.s32 %v1378, %v1380
  %vm1384 = vc.u32 %v1378, %v1380
  %v1385 = vadd.s32 %v1381, 1
  %v1386 = vsel %vm1384, %v1385, %v1381
  %v1387 = vadd.s32 %v1382, %v1386
  %v1388 = vadd.s32 %v1387, 536870912
  %v1389 = vshrl.u32 %v1388, 30
  %v1390 = vshll.u32 %v1389, 30
  %v1391 = vsub.s32 %v1387, %v1390
  %vm1392 = vcmp.lt.s32.totalorder %v1391, 0
  %v1393 = vsub.s32 0, %v1391
  %v1394 = vsel %vm1392, %v1393, %v1391
  %v1395 = vclz %v1394
  %v1396 = vsub.s32 %v1395, 2
  %vm1397 = vcmp.gt.s32.totalorder 0, %v1396
  %v1398 = vsel %vm1397, 0, %v1396
  %v1399 = vsub.s32 32, %v1398
  %v1400 = vshll.u32 %v1391, %v1398
  %v1401 = vshrl.u32 %v1383, %v1399
  %v1402 = vor.u32 %v1400, %v1401
  %v1403 = vsub.s32 4294967266, %v1398
  %v1404 = vadd.s32 %v1403, 127
  %v1405 = vshll.u32 %v1404, 23
  %v1406 = vor.u32 4788187, %v1405
  %v1407 = vand.u32 2147483647, %v1406
  %v1409 = vcvt.s32.f32 %v1402
  %v1410 = vmul.f32 %v1409, %v1407
  %v1411 = vxor.u32 %v1410, 2147483648
  %v1412 = vsel %vm1329, %v1411, %v1410
  %v1413 = vsub.s32 4, %v1389
  %v1414 = vsel %vm1329, %v1413, %v1389
  %v1415 = vsel %vm1328, %v178, %v1412
  %v1416 = vsel %vm1328, 0, %v1414
  %v1417 = vcosq.f32.pop %v1415
  %v1418 = vsinq.f32.pop %v1415
  %vm1419 = vweird.f32 %v178
  %v1420 = vadd.s32 %v1416, 3
  %v1421 = vand.u32 %v1420, 3
  %vm1422 = vcmp.lt.s32.totalorder %v1421, 2
  %vm1423 = vcmp.eq.s32.totalorder %v1421, 0
  %v1424 = vxor.u32 %v1418, 2147483648
  %v1425 = vsel %vm1423, %v1417, %v1424
  %vm1426 = vcmp.eq.s32.totalorder %v1421, 2
  %v1427 = vxor.u32 %v1417, 2147483648
  %v1428 = vsel %vm1426, %v1427, %v1418
  %v1429 = vsel %vm1422, %v1425, %v1428
  %v1430 = vsel %vm1419, nan, %v1429
  %v1431 = vand.u32 2147483647, %v179
  %vm1432 = vcmp.le.f32.partialorder %v1431, 0.7853982
  %vm1433 = vcmp.lt.s32.totalorder %v179, 0
  %v1434 = vand.u32 %v179, 2139095040
  %v1435 = vshrl.u32 %v1434, 23
  %v1436 = vsub.s32 %v1435, 127
  %v1437 = vand.u32 2147483647, %v179
  %v1438 = vand.u32 %v1437, 8388607
  %v1439 = vor.u32 %v1438, 8388608
  %v1440 = vsub.s32 0, %v1439
  %v1441 = vadd.s32 %v1436, 1
  %vm1442 = vcmp.gt.s32.totalorder %v1441, 0
  %v1443 = vsel %vm1442, %v1441, 0
  %v1444 = vshrl.u32 %v1443, 5
  %v1445 = vand.u32 %v1443, 31
  %v1446 = vsub.s32 32, %v1445
  %v1447 = vshrl.u32 683565275, %v1446
  %v1448 = vshll.u32 683565275, %v1445
  %v1449 = vshrl.u32 2475754826, %v1446
  %v1450 = vor.u32 %v1448, %v1449
  %v1451 = vshll.u32 2475754826, %v1445
  %v1452 = vshrl.u32 2131351028, %v1446
  %v1453 = vor.u32 %v1451, %v1452
  %v1454 = vshll.u32 2131351028, %v1445
  %v1455 = vshrl.u32 2102212464, %v1446
  %v1456 = vor.u32 %v1454, %v1455
  %v1457 = vshll.u32 2102212464, %v1445
  %v1458 = vshrl.u32 920167782, %v1446
  %v1459 = vor.u32 %v1457, %v1458
  %v1460 = vshll.u32 920167782, %v1445
  %v1461 = vshrl.u32 1326507024, %v1446
  %v1462 = vor.u32 %v1460, %v1461
  %vm1463 = vcmp.lt.s32.totalorder %v1444, 1
  %vm1464 = vcmp.lt.s32.totalorder %v1444, 2
  %vm1465 = vcmp.lt.s32.totalorder %v1444, 3
  %vm1466 = vcmp.lt.s32.totalorder %v1444, 4
  %v1467 = vsel %vm1463, %v1447, %v1450
  %v1468 = vsel %vm1466, %v1456, 2102212464
  %v1469 = vsel %vm1465, %v1453, %v1468
  %v1470 = vsel %vm1464, %v1467, %v1469
  %v1471 = vsel %vm1463, %v1450, %v1453
  %v1472 = vsel %vm1466, %v1459, 920167782
  %v1473 = vsel %vm1465, %v1456, %v1472
  %v1474 = vsel %vm1464, %v1471, %v1473
  %v1475 = vsel %vm1463, %v1453, %v1456
  %v1476 = vsel %vm1466, %v1462, 1326507024
  %v1477 = vsel %vm1465, %v1459, %v1476
  %v1478 = vsel %vm1464, %v1475, %v1477
  %v1479 = vshll.u32 %v1439, 8
  %v1480 = vmul.u32.u64.compose %v1479, %v1478
  %v1481 = vextract.low.u32 %v1480
  %v1482 = vextract.high.u32 %v1480
  %v1483 = vmul.u32.u64.compose %v1479, %v1474
  %v1484 = vextract.low.u32 %v1483
  %v1485 = vextract.high.u32 %v1483
  %v1486 = vmul.u32 %v1479, %v1470
  %v1487 = vadd.s32 %v1482, %v1484
  %vm1488 = vc.u32 %v1482, %v1484
  %v1489 = vadd.s32 %v1485, 1
  %v1490 = vsel %vm1488, %v1489, %v1485
  %v1491 = vadd.s32 %v1486, %v1490
  %v1492 = vadd.s32 %v1491, 536870912
  %v1493 = vshrl.u32 %v1492, 30
  %v1494 = vshll.u32 %v1493, 30
  %v1495 = vsub.s32 %v1491, %v1494
  %vm1496 = vcmp.lt.s32.totalorder %v1495, 0
  %v1497 = vsub.s32 0, %v1495
  %v1498 = vsel %vm1496, %v1497, %v1495
  %v1499 = vclz %v1498
  %v1500 = vsub.s32 %v1499, 2
  %vm1501 = vcmp.gt.s32.totalorder 0, %v1500
  %v1502 = vsel %vm1501, 0, %v1500
  %v1503 = vsub.s32 32, %v1502
  %v1504 = vshll.u32 %v1495, %v1502
  %v1505 = vshrl.u32 %v1487, %v1503
  %v1506 = vor.u32 %v1504, %v1505
  %v1507 = vsub.s32 4294967266, %v1502
  %v1508 = vadd.s32 %v1507, 127
  %v1509 = vshll.u32 %v1508, 23
  %v1510 = vor.u32 4788187, %v1509
  %v1511 = vand.u32 2147483647, %v1510
  %v1513 = vcvt.s32.f32 %v1506
  %v1514 = vmul.f32 %v1513, %v1511
  %v1515 = vxor.u32 %v1514, 2147483648
  %v1516 = vsel %vm1433, %v1515, %v1514
  %v1517 = vsub.s32 4, %v1493
  %v1518 = vsel %vm1433, %v1517, %v1493
  %v1519 = vsel %vm1432, %v179, %v1516
  %v1520 = vsel %vm1432, 0, %v1518
  %v1521 = vcosq.f32.pop %v1519
  %v1522 = vsinq.f32.pop %v1519
  %vm1523 = vweird.f32 %v179
  %v1524 = vadd.s32 %v1520, 3
  %v1525 = vand.u32 %v1524, 3
  %vm1526 = vcmp.lt.s32.totalorder %v1525, 2
  %vm1527 = vcmp.eq.s32.totalorder %v1525, 0
  %v1528 = vxor.u32 %v1522, 2147483648
  %v1529 = vsel %vm1527, %v1521, %v1528
  %vm1530 = vcmp.eq.s32.totalorder %v1525, 2
  %v1531 = vxor.u32 %v1521, 2147483648
  %v1532 = vsel %vm1530, %v1531, %v1522
  %v1533 = vsel %vm1526, %v1529, %v1532
  %v1534 = vsel %vm1523, nan, %v1533
  %v1535 = vand.u32 2147483647, %v180
  %vm1536 = vcmp.le.f32.partialorder %v1535, 0.7853982
  %vm1537 = vcmp.lt.s32.totalorder %v180, 0
  %v1538 = vand.u32 %v180, 2139095040
  %v1539 = vshrl.u32 %v1538, 23
  %v1540 = vsub.s32 %v1539, 127
  %v1541 = vand.u32 2147483647, %v180
  %v1542 = vand.u32 %v1541, 8388607
  %v1543 = vor.u32 %v1542, 8388608
  %v1544 = vsub.s32 0, %v1543
  %v1545 = vadd.s32 %v1540, 1
  %vm1546 = vcmp.gt.s32.totalorder %v1545, 0
  %v1547 = vsel %vm1546, %v1545, 0
  %v1548 = vshrl.u32 %v1547, 5
  %v1549 = vand.u32 %v1547, 31
  %v1550 = vsub.s32 32, %v1549
  %v1551 = vshrl.u32 683565275, %v1550
  %v1552 = vshll.u32 683565275, %v1549
  %v1553 = vshrl.u32 2475754826, %v1550
  %v1554 = vor.u32 %v1552, %v1553
  %v1555 = vshll.u32 2475754826, %v1549
  %v1556 = vshrl.u32 2131351028, %v1550
  %v1557 = vor.u32 %v1555, %v1556
  %v1558 = vshll.u32 2131351028, %v1549
  %v1559 = vshrl.u32 2102212464, %v1550
  %v1560 = vor.u32 %v1558, %v1559
  %v1561 = vshll.u32 2102212464, %v1549
  %v1562 = vshrl.u32 920167782, %v1550
  %v1563 = vor.u32 %v1561, %v1562
  %v1564 = vshll.u32 920167782, %v1549
  %v1565 = vshrl.u32 1326507024, %v1550
  %v1566 = vor.u32 %v1564, %v1565
  %vm1567 = vcmp.lt.s32.totalorder %v1548, 1
  %vm1568 = vcmp.lt.s32.totalorder %v1548, 2
  %vm1569 = vcmp.lt.s32.totalorder %v1548, 3
  %vm1570 = vcmp.lt.s32.totalorder %v1548, 4
  %v1571 = vsel %vm1567, %v1551, %v1554
  %v1572 = vsel %vm1570, %v1560, 2102212464
  %v1573 = vsel %vm1569, %v1557, %v1572
  %v1574 = vsel %vm1568, %v1571, %v1573
  %v1575 = vsel %vm1567, %v1554, %v1557
  %v1576 = vsel %vm1570, %v1563, 920167782
  %v1577 = vsel %vm1569, %v1560, %v1576
  %v1578 = vsel %vm1568, %v1575, %v1577
  %v1579 = vsel %vm1567, %v1557, %v1560
  %v1580 = vsel %vm1570, %v1566, 1326507024
  %v1581 = vsel %vm1569, %v1563, %v1580
  %v1582 = vsel %vm1568, %v1579, %v1581
  %v1583 = vshll.u32 %v1543, 8
  %v1584 = vmul.u32.u64.compose %v1583, %v1582
  %v1585 = vextract.low.u32 %v1584
  %v1586 = vextract.high.u32 %v1584
  %v1587 = vmul.u32.u64.compose %v1583, %v1578
  %v1588 = vextract.low.u32 %v1587
  %v1589 = vextract.high.u32 %v1587
  %v1590 = vmul.u32 %v1583, %v1574
  %v1591 = vadd.s32 %v1586, %v1588
  %vm1592 = vc.u32 %v1586, %v1588
  %v1593 = vadd.s32 %v1589, 1
  %v1594 = vsel %vm1592, %v1593, %v1589
  %v1595 = vadd.s32 %v1590, %v1594
  %v1596 = vadd.s32 %v1595, 536870912
  %v1597 = vshrl.u32 %v1596, 30
  %v1598 = vshll.u32 %v1597, 30
  %v1599 = vsub.s32 %v1595, %v1598
  %vm1600 = vcmp.lt.s32.totalorder %v1599, 0
  %v1601 = vsub.s32 0, %v1599
  %v1602 = vsel %vm1600, %v1601, %v1599
  %v1603 = vclz %v1602
  %v1604 = vsub.s32 %v1603, 2
  %vm1605 = vcmp.gt.s32.totalorder 0, %v1604
  %v1606 = vsel %vm1605, 0, %v1604
  %v1607 = vsub.s32 32, %v1606
  %v1608 = vshll.u32 %v1599, %v1606
  %v1609 = vshrl.u32 %v1591, %v1607
  %v1610 = vor.u32 %v1608, %v1609
  %v1611 = vsub.s32 4294967266, %v1606
  %v1612 = vadd.s32 %v1611, 127
  %v1613 = vshll.u32 %v1612, 23
  %v1614 = vor.u32 4788187, %v1613
  %v1615 = vand.u32 2147483647, %v1614
  %v1617 = vcvt.s32.f32 %v1610
  %v1618 = vmul.f32 %v1617, %v1615
  %v1619 = vxor.u32 %v1618, 2147483648
  %v1620 = vsel %vm1537, %v1619, %v1618
  %v1621 = vsub.s32 4, %v1597
  %v1622 = vsel %vm1537, %v1621, %v1597
  %v1623 = vsel %vm1536, %v180, %v1620
  %v1624 = vsel %vm1536, 0, %v1622
  %v1625 = vcosq.f32.pop %v1623
  %v1626 = vsinq.f32.pop %v1623
  %vm1627 = vweird.f32 %v180
  %v1628 = vadd.s32 %v1624, 3
  %v1629 = vand.u32 %v1628, 3
  %vm1630 = vcmp.lt.s32.totalorder %v1629, 2
  %vm1631 = vcmp.eq.s32.totalorder %v1629, 0
  %v1632 = vxor.u32 %v1626, 2147483648
  %v1633 = vsel %vm1631, %v1625, %v1632
  %vm1634 = vcmp.eq.s32.totalorder %v1629, 2
  %v1635 = vxor.u32 %v1625, 2147483648
  %v1636 = vsel %vm1634, %v1635, %v1626
  %v1637 = vsel %vm1630, %v1633, %v1636
  %v1638 = vsel %vm1627, nan, %v1637
  %v1639 = vand.u32 2147483647, %v181
  %vm1640 = vcmp.le.f32.partialorder %v1639, 0.7853982
  %vm1641 = vcmp.lt.s32.totalorder %v181, 0
  %v1642 = vand.u32 %v181, 2139095040
  %v1643 = vshrl.u32 %v1642, 23
  %v1644 = vsub.s32 %v1643, 127
  %v1645 = vand.u32 2147483647, %v181
  %v1646 = vand.u32 %v1645, 8388607
  %v1647 = vor.u32 %v1646, 8388608
  %v1648 = vsub.s32 0, %v1647
  %v1649 = vadd.s32 %v1644, 1
  %vm1650 = vcmp.gt.s32.totalorder %v1649, 0
  %v1651 = vsel %vm1650, %v1649, 0
  %v1652 = vshrl.u32 %v1651, 5
  %v1653 = vand.u32 %v1651, 31
  %v1654 = vsub.s32 32, %v1653
  %v1655 = vshrl.u32 683565275, %v1654
  %v1656 = vshll.u32 683565275, %v1653
  %v1657 = vshrl.u32 2475754826, %v1654
  %v1658 = vor.u32 %v1656, %v1657
  %v1659 = vshll.u32 2475754826, %v1653
  %v1660 = vshrl.u32 2131351028, %v1654
  %v1661 = vor.u32 %v1659, %v1660
  %v1662 = vshll.u32 2131351028, %v1653
  %v1663 = vshrl.u32 2102212464, %v1654
  %v1664 = vor.u32 %v1662, %v1663
  %v1665 = vshll.u32 2102212464, %v1653
  %v1666 = vshrl.u32 920167782, %v1654
  %v1667 = vor.u32 %v1665, %v1666
  %v1668 = vshll.u32 920167782, %v1653
  %v1669 = vshrl.u32 1326507024, %v1654
  %v1670 = vor.u32 %v1668, %v1669
  %vm1671 = vcmp.lt.s32.totalorder %v1652, 1
  %vm1672 = vcmp.lt.s32.totalorder %v1652, 2
  %vm1673 = vcmp.lt.s32.totalorder %v1652, 3
  %vm1674 = vcmp.lt.s32.totalorder %v1652, 4
  %v1675 = vsel %vm1671, %v1655, %v1658
  %v1676 = vsel %vm1674, %v1664, 2102212464
  %v1677 = vsel %vm1673, %v1661, %v1676
  %v1678 = vsel %vm1672, %v1675, %v1677
  %v1679 = vsel %vm1671, %v1658, %v1661
  %v1680 = vsel %vm1674, %v1667, 920167782
  %v1681 = vsel %vm1673, %v1664, %v1680
  %v1682 = vsel %vm1672, %v1679, %v1681
  %v1683 = vsel %vm1671, %v1661, %v1664
  %v1684 = vsel %vm1674, %v1670, 1326507024
  %v1685 = vsel %vm1673, %v1667, %v1684
  %v1686 = vsel %vm1672, %v1683, %v1685
  %v1687 = vshll.u32 %v1647, 8
  %v1688 = vmul.u32.u64.compose %v1687, %v1686
  %v1689 = vextract.low.u32 %v1688
  %v1690 = vextract.high.u32 %v1688
  %v1691 = vmul.u32.u64.compose %v1687, %v1682
  %v1692 = vextract.low.u32 %v1691
  %v1693 = vextract.high.u32 %v1691
  %v1694 = vmul.u32 %v1687, %v1678
  %v1695 = vadd.s32 %v1690, %v1692
  %vm1696 = vc.u32 %v1690, %v1692
  %v1697 = vadd.s32 %v1693, 1
  %v1698 = vsel %vm1696, %v1697, %v1693
  %v1699 = vadd.s32 %v1694, %v1698
  %v1700 = vadd.s32 %v1699, 536870912
  %v1701 = vshrl.u32 %v1700, 30
  %v1702 = vshll.u32 %v1701, 30
  %v1703 = vsub.s32 %v1699, %v1702
  %vm1704 = vcmp.lt.s32.totalorder %v1703, 0
  %v1705 = vsub.s32 0, %v1703
  %v1706 = vsel %vm1704, %v1705, %v1703
  %v1707 = vclz %v1706
  %v1708 = vsub.s32 %v1707, 2
  %vm1709 = vcmp.gt.s32.totalorder 0, %v1708
  %v1710 = vsel %vm1709, 0, %v1708
  %v1711 = vsub.s32 32, %v1710
  %v1712 = vshll.u32 %v1703, %v1710
  %v1713 = vshrl.u32 %v1695, %v1711
  %v1714 = vor.u32 %v1712, %v1713
  %v1715 = vsub.s32 4294967266, %v1710
  %v1716 = vadd.s32 %v1715, 127
  %v1717 = vshll.u32 %v1716, 23
  %v1718 = vor.u32 4788187, %v1717
  %v1719 = vand.u32 2147483647, %v1718
  %v1721 = vcvt.s32.f32 %v1714
  %v1722 = vmul.f32 %v1721, %v1719
  %v1723 = vxor.u32 %v1722, 2147483648
  %v1724 = vsel %vm1641, %v1723, %v1722
  %v1725 = vsub.s32 4, %v1701
  %v1726 = vsel %vm1641, %v1725, %v1701
  %v1727 = vsel %vm1640, %v181, %v1724
  %v1728 = vsel %vm1640, 0, %v1726
  %v1729 = vcosq.f32.pop %v1727
  %v1730 = vsinq.f32.pop %v1727
  %vm1731 = vweird.f32 %v181
  %v1732 = vadd.s32 %v1728, 3
  %v1733 = vand.u32 %v1732, 3
  %vm1734 = vcmp.lt.s32.totalorder %v1733, 2
  %vm1735 = vcmp.eq.s32.totalorder %v1733, 0
  %v1736 = vxor.u32 %v1730, 2147483648
  %v1737 = vsel %vm1735, %v1729, %v1736
  %vm1738 = vcmp.eq.s32.totalorder %v1733, 2
  %v1739 = vxor.u32 %v1729, 2147483648
  %v1740 = vsel %vm1738, %v1739, %v1730
  %v1741 = vsel %vm1734, %v1737, %v1740
  %v1742 = vsel %vm1731, nan, %v1741
  %v1743 = vand.u32 2147483647, %v182
  %vm1744 = vcmp.le.f32.partialorder %v1743, 0.7853982
  %vm1745 = vcmp.lt.s32.totalorder %v182, 0
  %v1746 = vand.u32 %v182, 2139095040
  %v1747 = vshrl.u32 %v1746, 23
  %v1748 = vsub.s32 %v1747, 127
  %v1749 = vand.u32 2147483647, %v182
  %v1750 = vand.u32 %v1749, 8388607
  %v1751 = vor.u32 %v1750, 8388608
  %v1752 = vsub.s32 0, %v1751
  %v1753 = vadd.s32 %v1748, 1
  %vm1754 = vcmp.gt.s32.totalorder %v1753, 0
  %v1755 = vsel %vm1754, %v1753, 0
  %v1756 = vshrl.u32 %v1755, 5
  %v1757 = vand.u32 %v1755, 31
  %v1758 = vsub.s32 32, %v1757
  %v1759 = vshrl.u32 683565275, %v1758
  %v1760 = vshll.u32 683565275, %v1757
  %v1761 = vshrl.u32 2475754826, %v1758
  %v1762 = vor.u32 %v1760, %v1761
  %v1763 = vshll.u32 2475754826, %v1757
  %v1764 = vshrl.u32 2131351028, %v1758
  %v1765 = vor.u32 %v1763, %v1764
  %v1766 = vshll.u32 2131351028, %v1757
  %v1767 = vshrl.u32 2102212464, %v1758
  %v1768 = vor.u32 %v1766, %v1767
  %v1769 = vshll.u32 2102212464, %v1757
  %v1770 = vshrl.u32 920167782, %v1758
  %v1771 = vor.u32 %v1769, %v1770
  %v1772 = vshll.u32 920167782, %v1757
  %v1773 = vshrl.u32 1326507024, %v1758
  %v1774 = vor.u32 %v1772, %v1773
  %vm1775 = vcmp.lt.s32.totalorder %v1756, 1
  %vm1776 = vcmp.lt.s32.totalorder %v1756, 2
  %vm1777 = vcmp.lt.s32.totalorder %v1756, 3
  %vm1778 = vcmp.lt.s32.totalorder %v1756, 4
  %v1779 = vsel %vm1775, %v1759, %v1762
  %v1780 = vsel %vm1778, %v1768, 2102212464
  %v1781 = vsel %vm1777, %v1765, %v1780
  %v1782 = vsel %vm1776, %v1779, %v1781
  %v1783 = vsel %vm1775, %v1762, %v1765
  %v1784 = vsel %vm1778, %v1771, 920167782
  %v1785 = vsel %vm1777, %v1768, %v1784
  %v1786 = vsel %vm1776, %v1783, %v1785
  %v1787 = vsel %vm1775, %v1765, %v1768
  %v1788 = vsel %vm1778, %v1774, 1326507024
  %v1789 = vsel %vm1777, %v1771, %v1788
  %v1790 = vsel %vm1776, %v1787, %v1789
  %v1791 = vshll.u32 %v1751, 8
  %v1792 = vmul.u32.u64.compose %v1791, %v1790
  %v1793 = vextract.low.u32 %v1792
  %v1794 = vextract.high.u32 %v1792
  %v1795 = vmul.u32.u64.compose %v1791, %v1786
  %v1796 = vextract.low.u32 %v1795
  %v1797 = vextract.high.u32 %v1795
  %v1798 = vmul.u32 %v1791, %v1782
  %v1799 = vadd.s32 %v1794, %v1796
  %vm1800 = vc.u32 %v1794, %v1796
  %v1801 = vadd.s32 %v1797, 1
  %v1802 = vsel %vm1800, %v1801, %v1797
  %v1803 = vadd.s32 %v1798, %v1802
  %v1804 = vadd.s32 %v1803, 536870912
  %v1805 = vshrl.u32 %v1804, 30
  %v1806 = vshll.u32 %v1805, 30
  %v1807 = vsub.s32 %v1803, %v1806
  %vm1808 = vcmp.lt.s32.totalorder %v1807, 0
  %v1809 = vsub.s32 0, %v1807
  %v1810 = vsel %vm1808, %v1809, %v1807
  %v1811 = vclz %v1810
  %v1812 = vsub.s32 %v1811, 2
  %vm1813 = vcmp.gt.s32.totalorder 0, %v1812
  %v1814 = vsel %vm1813, 0, %v1812
  %v1815 = vsub.s32 32, %v1814
  %v1816 = vshll.u32 %v1807, %v1814
  %v1817 = vshrl.u32 %v1799, %v1815
  %v1818 = vor.u32 %v1816, %v1817
  %v1819 = vsub.s32 4294967266, %v1814
  %v1820 = vadd.s32 %v1819, 127
  %v1821 = vshll.u32 %v1820, 23
  %v1822 = vor.u32 4788187, %v1821
  %v1823 = vand.u32 2147483647, %v1822
  %v1825 = vcvt.s32.f32 %v1818
  %v1826 = vmul.f32 %v1825, %v1823
  %v1827 = vxor.u32 %v1826, 2147483648
  %v1828 = vsel %vm1745, %v1827, %v1826
  %v1829 = vsub.s32 4, %v1805
  %v1830 = vsel %vm1745, %v1829, %v1805
  %v1831 = vsel %vm1744, %v182, %v1828
  %v1832 = vsel %vm1744, 0, %v1830
  %v1833 = vcosq.f32.pop %v1831
  %v1834 = vsinq.f32.pop %v1831
  %vm1835 = vweird.f32 %v182
  %v1836 = vadd.s32 %v1832, 3
  %v1837 = vand.u32 %v1836, 3
  %vm1838 = vcmp.lt.s32.totalorder %v1837, 2
  %vm1839 = vcmp.eq.s32.totalorder %v1837, 0
  %v1840 = vxor.u32 %v1834, 2147483648
  %v1841 = vsel %vm1839, %v1833, %v1840
  %vm1842 = vcmp.eq.s32.totalorder %v1837, 2
  %v1843 = vxor.u32 %v1833, 2147483648
  %v1844 = vsel %vm1842, %v1843, %v1834
  %v1845 = vsel %vm1838, %v1841, %v1844
  %v1846 = vsel %vm1835, nan, %v1845
  %v1847 = vld [vmem:[%s2] sm:$0x1]
  %v1849 = vlaneseq
  %v1850 = vshrl.u32 %v1849, 7
  %v1851 = vsub.s32 0, %v1850
  %v1852 = vrot.slane %v1847, %v1851
  %v1854 = vmul.f32 %v66, %v1852
  %v1855 = vmul.f32 %v71, %v1852
  %v1856 = vmul.f32 %v76, %v1852
  %v1857 = vmul.f32 %v81, %v1852
  %v1858 = vmul.f32 %v86, %v1852
  %v1859 = vmul.f32 %v91, %v1852
  %v1860 = vmul.f32 %v96, %v1852
  %v1861 = vmul.f32 %v101, %v1852
  %v1862 = vmul.f32 %v106, %v1852
  %v1863 = vmul.f32 %v111, %v1852
  %v1864 = vmul.f32 %v116, %v1852
  %v1865 = vmul.f32 %v121, %v1852
  %v1866 = vmul.f32 %v126, %v1852
  %v1867 = vmul.f32 %v131, %v1852
  %v1868 = vmul.f32 %v136, %v1852
  %v1869 = vmul.f32 %v141, %v1852
  %v1870 = vld [vmem:[%s3] sm:$0xf]
  %v1871 = vld [vmem:[%s3 + $0x4] sm:$0xf]
  %v1872 = vld [vmem:[%s3 + $0x8] sm:$0xf]
  %v1873 = vpack.c.bf16 %v390, %v286
  %v1874 = vpack.c.bf16 %v598, %v494
  %v1875 = vpack.c.bf16 %v806, %v702
  %v1876 = vpack.c.bf16 %v1014, %v910
  %v1877 = vpack.c.bf16 %v1222, %v1118
  %v1878 = vpack.c.bf16 %v1430, %v1326
  %v1879 = vpack.c.bf16 %v1638, %v1534
  %v1880 = vpack.c.bf16 %v1846, %v1742
  %v1884 = vunpack.c.l.b16 %v1870
  %v1885 = vunpack.c.l.b16 %v1871
  %v1886 = vunpack.c.l.b16 %v1872
  %v1887 = vpack.c.b16 %v1885, %v1884
  %v1888 = vpack.c.b16 %v1886, %v1886
  %vm1890 = vcmask 195584
  %v1892 = vsel %vm1890, %v1873, 0
  %v1895 = vsel %vm1890, %v1874, 0
  %v1898 = vsel %vm1890, %v1875, 0
  %v1901 = vsel %vm1890, %v1876, 0
  %v1904 = vsel %vm1890, %v1877, 0
  %v1907 = vsel %vm1890, %v1878, 0
  %v1910 = vsel %vm1890, %v1879, 0
  %v1913 = vsel %vm1890, %v1880, 0
  %vm1915 = vcmask 1043456
  %v1917 = vsel %vm1915, %v1888, 0
  %1919 = vmatprep.subr.bf16.mxu0 0
  %1920 = vmatpush1.bf16.msra.mxu0 %v1887
  %1921 = vmatprep.subr.bf16.mxu0 0
  %1922 = vmatpush1.bf16.msra.mxu0 %v1917
  %1923 = vmatprep.subr.bf16.mxu0 0
  %1924 = vmatpush1.bf16.msra.mxu0 0
  %1925 = vmatprep.subr.bf16.mxu0 0
  %1926 = vmatpush1.bf16.msra.mxu0 0
  %1927 = vmatprep.subr.bf16.mxu0 0
  %1928 = vmatpush1.bf16.msra.mxu0 0
  %1929 = vmatprep.subr.bf16.mxu0 0
  %1930 = vmatpush1.bf16.msra.mxu0 0
  %1931 = vmatprep.subr.bf16.mxu0 0
  %1932 = vmatpush1.bf16.msra.mxu0 0
  %1933 = vmatprep.subr.bf16.mxu0 0
  %1934 = vmatpush1.bf16.msra.mxu0 0
  %1935 = vmatprep.subr.bf16.mxu0 0
  %1936 = vmatpush1.bf16.msra.mxu0 0
  %1937 = vmatprep.subr.bf16.mxu0 0
  %1938 = vmatpush1.bf16.msra.mxu0 0
  %1939 = vmatprep.subr.bf16.mxu0 0
  %1940 = vmatpush1.bf16.msra.mxu0 0
  %1941 = vmatprep.subr.bf16.mxu0 0
  %1942 = vmatpush1.bf16.msra.mxu0 0
  %1943 = vmatprep.subr.bf16.mxu0 0
  %1944 = vmatpush1.bf16.msra.mxu0 0
  %1945 = vmatprep.subr.bf16.mxu0 0
  %1946 = vmatpush1.bf16.msra.mxu0 0
  %1947 = vmatprep.subr.bf16.mxu0 0
  %1948 = vmatpush1.bf16.msra.mxu0 0
  %1949 = vmatprep.subr.bf16.mxu0 0
  %1950 = vmatpush1.bf16.msra.mxu0 0
  %1951 = vmatprep.mubr.bf16.mxu0 0
  %1952 = vmatmul.mubr.bf16.gmra.mrb[0].mxu0 %v1892
  %v1953 = vpop.f32.mrb[0].mxu0
  %v1954 = vadd.f32 0.0, %v1953
  %v1955 = vpop.f32.mrb[0].mxu0
  %v1956 = vpop.f32.mrb[0].mxu0
  %v1957 = vadd.f32 0.0, %v1956
  %v1958 = vpop.f32.mrb[0].mxu0
  %1959 = vmatprep.mubr.bf16.mxu0 0
  %1960 = vmatmul.mubr.bf16.gmra.mrb[0].mxu0 %v1895
  %v1961 = vpop.f32.mrb[0].mxu0
  %v1962 = vadd.f32 0.0, %v1961
  %v1963 = vpop.f32.mrb[0].mxu0
  %v1964 = vpop.f32.mrb[0].mxu0
  %v1965 = vadd.f32 0.0, %v1964
  %v1966 = vpop.f32.mrb[0].mxu0
  %1967 = vmatprep.mubr.bf16.mxu0 0
  %1968 = vmatmul.mubr.bf16.gmra.mrb[0].mxu0 %v1898
  %v1969 = vpop.f32.mrb[0].mxu0
  %v1970 = vadd.f32 0.0, %v1969
  %v1971 = vpop.f32.mrb[0].mxu0
  %v1972 = vpop.f32.mrb[0].mxu0
  %v1973 = vadd.f32 0.0, %v1972
  %v1974 = vpop.f32.mrb[0].mxu0
  %1975 = vmatprep.mubr.bf16.mxu0 0
  %1976 = vmatmul.mubr.bf16.gmra.mrb[0].mxu0 %v1901
  %v1977 = vpop.f32.mrb[0].mxu0
  %v1978 = vadd.f32 0.0, %v1977
  %v1979 = vpop.f32.mrb[0].mxu0
  %v1980 = vpop.f32.mrb[0].mxu0
  %v1981 = vadd.f32 0.0, %v1980
  %v1982 = vpop.f32.mrb[0].mxu0
  %1983 = vmatprep.mubr.bf16.mxu0 0
  %1984 = vmatmul.mubr.bf16.gmra.mrb[0].mxu0 %v1904
  %v1985 = vpop.f32.mrb[0].mxu0
  %v1986 = vadd.f32 0.0, %v1985
  %v1987 = vpop.f32.mrb[0].mxu0
  %v1988 = vpop.f32.mrb[0].mxu0
  %v1989 = vadd.f32 0.0, %v1988
  %v1990 = vpop.f32.mrb[0].mxu0
  %1991 = vmatprep.mubr.bf16.mxu0 0
  %1992 = vmatmul.mubr.bf16.gmra.mrb[0].mxu0 %v1907
  %v1993 = vpop.f32.mrb[0].mxu0
  %v1994 = vadd.f32 0.0, %v1993
  %v1995 = vpop.f32.mrb[0].mxu0
  %v1996 = vpop.f32.mrb[0].mxu0
  %v1997 = vadd.f32 0.0, %v1996
  %v1998 = vpop.f32.mrb[0].mxu0
  %1999 = vmatprep.mubr.bf16.mxu0 0
  %2000 = vmatmul.mubr.bf16.gmra.mrb[0].mxu0 %v1910
  %v2001 = vpop.f32.mrb[0].mxu0
  %v2002 = vadd.f32 0.0, %v2001
  %v2003 = vpop.f32.mrb[0].mxu0
  %v2004 = vpop.f32.mrb[0].mxu0
  %v2005 = vadd.f32 0.0, %v2004
  %v2006 = vpop.f32.mrb[0].mxu0
  %2007 = vmatprep.mubr.bf16.mxu0 0
  %2008 = vmatmul.mubr.bf16.gmra.mrb[0].mxu0 %v1913
  %v2009 = vpop.f32.mrb[0].mxu0
  %v2010 = vadd.f32 0.0, %v2009
  %v2011 = vpop.f32.mrb[0].mxu0
  %v2012 = vpop.f32.mrb[0].mxu0
  %v2013 = vadd.f32 0.0, %v2012
  %v2014 = vpop.f32.mrb[0].mxu0
  %2015 = vdwg.mxu0
  %v2016 = vadd.f32 %v1854, %v1954
  %v2017 = vadd.f32 %v1855, %v1957
  %v2018 = vadd.f32 %v1856, %v1962
  %v2019 = vadd.f32 %v1857, %v1965
  %v2020 = vadd.f32 %v1858, %v1970
  %v2021 = vadd.f32 %v1859, %v1973
  %v2022 = vadd.f32 %v1860, %v1978
  %v2023 = vadd.f32 %v1861, %v1981
  %v2024 = vadd.f32 %v1862, %v1986
  %v2025 = vadd.f32 %v1863, %v1989
  %v2026 = vadd.f32 %v1864, %v1994
  %v2027 = vadd.f32 %v1865, %v1997
  %v2028 = vadd.f32 %v1866, %v2002
  %v2029 = vadd.f32 %v1867, %v2005
  %v2030 = vadd.f32 %v1868, %v2010
  %v2031 = vadd.f32 %v1869, %v2013
  %v2032 = vld [vmem:[%s4] sm:$0x1]
  %v2033 = vlaneseq
  %v2034 = vshrl.u32 %v2033, 7
  %v2035 = vsub.s32 0, %v2034
  %v2036 = vrot.slane %v2032, %v2035
  %v2037 = vadd.f32 %v2016, %v2036
  %v2038 = vadd.f32 %v2017, %v2036
  %v2039 = vadd.f32 %v2018, %v2036
  %v2040 = vadd.f32 %v2019, %v2036
  %v2041 = vadd.f32 %v2020, %v2036
  %v2042 = vadd.f32 %v2021, %v2036
  %v2043 = vadd.f32 %v2022, %v2036
  %v2044 = vadd.f32 %v2023, %v2036
  %v2045 = vadd.f32 %v2024, %v2036
  %v2046 = vadd.f32 %v2025, %v2036
  %v2047 = vadd.f32 %v2026, %v2036
  %v2048 = vadd.f32 %v2027, %v2036
  %v2049 = vadd.f32 %v2028, %v2036
  %v2050 = vadd.f32 %v2029, %v2036
  %v2051 = vadd.f32 %v2030, %v2036
  %v2052 = vadd.f32 %v2031, %v2036
  %vm2053 = vcmp.gt.f32.partialorder %v2037, 0.0
  %vm2054 = vcmp.gt.f32.partialorder %v2038, 0.0
  %vm2055 = vcmp.gt.f32.partialorder %v2039, 0.0
  %vm2056 = vcmp.gt.f32.partialorder %v2040, 0.0
  %vm2057 = vcmp.gt.f32.partialorder %v2041, 0.0
  %vm2058 = vcmp.gt.f32.partialorder %v2042, 0.0
  %vm2059 = vcmp.gt.f32.partialorder %v2043, 0.0
  %vm2060 = vcmp.gt.f32.partialorder %v2044, 0.0
  %vm2061 = vcmp.gt.f32.partialorder %v2045, 0.0
  %vm2062 = vcmp.gt.f32.partialorder %v2046, 0.0
  %vm2063 = vcmp.gt.f32.partialorder %v2047, 0.0
  %vm2064 = vcmp.gt.f32.partialorder %v2048, 0.0
  %vm2065 = vcmp.gt.f32.partialorder %v2049, 0.0
  %vm2066 = vcmp.gt.f32.partialorder %v2050, 0.0
  %vm2067 = vcmp.gt.f32.partialorder %v2051, 0.0
  %vm2068 = vcmp.gt.f32.partialorder %v2052, 0.0
  %v2069 = vmul.f32 %v2037, 0.01
  %v2070 = vmul.f32 %v2038, 0.01
  %v2071 = vmul.f32 %v2039, 0.01
  %v2072 = vmul.f32 %v2040, 0.01
  %v2073 = vmul.f32 %v2041, 0.01
  %v2074 = vmul.f32 %v2042, 0.01
  %v2075 = vmul.f32 %v2043, 0.01
  %v2076 = vmul.f32 %v2044, 0.01
  %v2077 = vmul.f32 %v2045, 0.01
  %v2078 = vmul.f32 %v2046, 0.01
  %v2079 = vmul.f32 %v2047, 0.01
  %v2080 = vmul.f32 %v2048, 0.01
  %v2081 = vmul.f32 %v2049, 0.01
  %v2082 = vmul.f32 %v2050, 0.01
  %v2083 = vmul.f32 %v2051, 0.01
  %v2084 = vmul.f32 %v2052, 0.01
  %v2085 = vsel %vm2053, %v2037, %v2069
  %v2086 = vsel %vm2054, %v2038, %v2070
  %v2087 = vsel %vm2055, %v2039, %v2071
  %v2088 = vsel %vm2056, %v2040, %v2072
  %v2089 = vsel %vm2057, %v2041, %v2073
  %v2090 = vsel %vm2058, %v2042, %v2074
  %v2091 = vsel %vm2059, %v2043, %v2075
  %v2092 = vsel %vm2060, %v2044, %v2076
  %v2093 = vsel %vm2061, %v2045, %v2077
  %v2094 = vsel %vm2062, %v2046, %v2078
  %v2095 = vsel %vm2063, %v2047, %v2079
  %v2096 = vsel %vm2064, %v2048, %v2080
  %v2097 = vsel %vm2065, %v2049, %v2081
  %v2098 = vsel %vm2066, %v2050, %v2082
  %v2099 = vsel %vm2067, %v2051, %v2083
  %v2100 = vsel %vm2068, %v2052, %v2084
  %v2101 = vld [vmem:[%s5] sm:$0xf]
  %v2102 = vld [vmem:[%s5 + $0x4] sm:$0xf]
  %v2103 = vld [vmem:[%s5 + $0x8] sm:$0xf]
  %v2104 = vld [vmem:[%s5 + $0xc] sm:$0xf]
  %v2105 = vld [vmem:[%s5 + $0x10] sm:$0xf]
  %v2106 = vld [vmem:[%s5 + $0x14] sm:$0xf]
  %v2107 = vld [vmem:[%s5 + $0x18] sm:$0xf]
  %v2108 = vld [vmem:[%s5 + $0x1c] sm:$0xf]
  %v2109 = vld [vmem:[%s5 + $0x20] sm:$0xf]
  %v2110 = vld [vmem:[%s5 + $0x24] sm:$0xf]
  %v2111 = vld [vmem:[%s5 + $0x28] sm:$0xf]
  %v2112 = vld [vmem:[%s5 + $0x2c] sm:$0xf]
  %v2113 = vld [vmem:[%s5 + $0x30] sm:$0xf]
  %v2114 = vld [vmem:[%s5 + $0x34] sm:$0xf]
  %v2115 = vld [vmem:[%s5 + $0x38] sm:$0xf]
  %v2116 = vld [vmem:[%s5 + $0x3c] sm:$0xf]
  %v2117 = vpack.c.bf16 %v2086, %v2085
  %v2118 = vpack.c.bf16 %v2088, %v2087
  %v2119 = vpack.c.bf16 %v2090, %v2089
  %v2120 = vpack.c.bf16 %v2092, %v2091
  %v2121 = vpack.c.bf16 %v2094, %v2093
  %v2122 = vpack.c.bf16 %v2096, %v2095
  %v2123 = vpack.c.bf16 %v2098, %v2097
  %v2124 = vpack.c.bf16 %v2100, %v2099
  %v2125 = vld [vmem:[%s4 + $0x1] sm:$0x1]
  %v2126 = vlaneseq
  %v2127 = vshrl.u32 %v2126, 7
  %v2128 = vsub.s32 0, %v2127
  %v2129 = vrot.slane %v2125, %v2128
  %v2146 = vunpack.c.l.b16 %v2101
  %v2147 = vunpack.c.l.b16 %v2102
  %v2148 = vunpack.c.l.b16 %v2103
  %v2149 = vunpack.c.l.b16 %v2104
  %v2150 = vunpack.c.l.b16 %v2105
  %v2151 = vunpack.c.l.b16 %v2106
  %v2152 = vunpack.c.l.b16 %v2107
  %v2153 = vunpack.c.l.b16 %v2108
  %v2154 = vunpack.c.l.b16 %v2109
  %v2155 = vunpack.c.l.b16 %v2110
  %v2156 = vunpack.c.l.b16 %v2111
  %v2157 = vunpack.c.l.b16 %v2112
  %v2158 = vunpack.c.l.b16 %v2113
  %v2159 = vunpack.c.l.b16 %v2114
  %v2160 = vunpack.c.l.b16 %v2115
  %v2161 = vunpack.c.l.b16 %v2116
  %v2162 = vpack.c.b16 %v2147, %v2146
  %v2163 = vpack.c.b16 %v2149, %v2148
  %v2164 = vpack.c.b16 %v2151, %v2150
  %v2165 = vpack.c.b16 %v2153, %v2152
  %v2166 = vpack.c.b16 %v2155, %v2154
  %v2167 = vpack.c.b16 %v2157, %v2156
  %v2168 = vpack.c.b16 %v2159, %v2158
  %v2169 = vpack.c.b16 %v2161, %v2160
  %2178 = vmatprep.subr.bf16.mxu0 0
  %2179 = vmatpush1.bf16.msra.mxu0 %v2162
  %2180 = vmatprep.subr.bf16.mxu0 0
  %2181 = vmatpush1.bf16.msra.mxu0 %v2163
  %2182 = vmatprep.subr.bf16.mxu0 0
  %2183 = vmatpush1.bf16.msra.mxu0 %v2164
  %2184 = vmatprep.subr.bf16.mxu0 0
  %2185 = vmatpush1.bf16.msra.mxu0 %v2165
  %2186 = vmatprep.subr.bf16.mxu0 0
  %2187 = vmatpush1.bf16.msra.mxu0 %v2166
  %2188 = vmatprep.subr.bf16.mxu0 0
  %2189 = vmatpush1.bf16.msra.mxu0 %v2167
  %2190 = vmatprep.subr.bf16.mxu0 0
  %2191 = vmatpush1.bf16.msra.mxu0 %v2168
  %2192 = vmatprep.subr.bf16.mxu0 0
  %2193 = vmatpush1.bf16.msra.mxu0 %v2169
  %2194 = vmatprep.subr.bf16.mxu0 0
  %2195 = vmatpush1.bf16.msra.mxu0 0
  %2196 = vmatprep.subr.bf16.mxu0 0
  %2197 = vmatpush1.bf16.msra.mxu0 0
  %2198 = vmatprep.subr.bf16.mxu0 0
  %2199 = vmatpush1.bf16.msra.mxu0 0
  %2200 = vmatprep.subr.bf16.mxu0 0
  %2201 = vmatpush1.bf16.msra.mxu0 0
  %2202 = vmatprep.subr.bf16.mxu0 0
  %2203 = vmatpush1.bf16.msra.mxu0 0
  %2204 = vmatprep.subr.bf16.mxu0 0
  %2205 = vmatpush1.bf16.msra.mxu0 0
  %2206 = vmatprep.subr.bf16.mxu0 0
  %2207 = vmatpush1.bf16.msra.mxu0 0
  %2208 = vmatprep.subr.bf16.mxu0 0
  %2209 = vmatpush1.bf16.msra.mxu0 0
  %2210 = vmatprep.mubr.bf16.mxu0 0
  %2211 = vmatmul.mubr.bf16.gmra.mrb[0].mxu0 %v2117
  %v2212 = vpop.f32.mrb[0].mxu0
  %v2213 = vadd.f32 %v2129, %v2212
  %v2214 = vpop.f32.mrb[0].mxu0
  %v2215 = vpop.f32.mrb[0].mxu0
  %v2216 = vadd.f32 %v2129, %v2215
  %v2217 = vpop.f32.mrb[0].mxu0
  %2218 = vmatprep.mubr.bf16.mxu0 0
  %2219 = vmatmul.mubr.bf16.gmra.mrb[0].mxu0 %v2118
  %v2220 = vpop.f32.mrb[0].mxu0
  %v2221 = vadd.f32 %v2129, %v2220
  %v2222 = vpop.f32.mrb[0].mxu0
  %v2223 = vpop.f32.mrb[0].mxu0
  %v2224 = vadd.f32 %v2129, %v2223
  %v2225 = vpop.f32.mrb[0].mxu0
  %2226 = vmatprep.mubr.bf16.mxu0 0
  %2227 = vmatmul.mubr.bf16.gmra.mrb[0].mxu0 %v2119
  %v2228 = vpop.f32.mrb[0].mxu0
  %v2229 = vadd.f32 %v2129, %v2228
  %v2230 = vpop.f32.mrb[0].mxu0
  %v2231 = vpop.f32.mrb[0].mxu0
  %v2232 = vadd.f32 %v2129, %v2231
  %v2233 = vpop.f32.mrb[0].mxu0
  %2234 = vmatprep.mubr.bf16.mxu0 0
  %2235 = vmatmul.mubr.bf16.gmra.mrb[0].mxu0 %v2120
  %v2236 = vpop.f32.mrb[0].mxu0
  %v2237 = vadd.f32 %v2129, %v2236
  %v2238 = vpop.f32.mrb[0].mxu0
  %v2239 = vpop.f32.mrb[0].mxu0
  %v2240 = vadd.f32 %v2129, %v2239
  %v2241 = vpop.f32.mrb[0].mxu0
  %2242 = vmatprep.mubr.bf16.mxu0 0
  %2243 = vmatmul.mubr.bf16.gmra.mrb[0].mxu0 %v2121
  %v2244 = vpop.f32.mrb[0].mxu0
  %v2245 = vadd.f32 %v2129, %v2244
  %v2246 = vpop.f32.mrb[0].mxu0
  %v2247 = vpop.f32.mrb[0].mxu0
  %v2248 = vadd.f32 %v2129, %v2247
  %v2249 = vpop.f32.mrb[0].mxu0
  %2250 = vmatprep.mubr.bf16.mxu0 0
  %2251 = vmatmul.mubr.bf16.gmra.mrb[0].mxu0 %v2122
  %v2252 = vpop.f32.mrb[0].mxu0
  %v2253 = vadd.f32 %v2129, %v2252
  %v2254 = vpop.f32.mrb[0].mxu0
  %v2255 = vpop.f32.mrb[0].mxu0
  %v2256 = vadd.f32 %v2129, %v2255
  %v2257 = vpop.f32.mrb[0].mxu0
  %2258 = vmatprep.mubr.bf16.mxu0 0
  %2259 = vmatmul.mubr.bf16.gmra.mrb[0].mxu0 %v2123
  %v2260 = vpop.f32.mrb[0].mxu0
  %v2261 = vadd.f32 %v2129, %v2260
  %v2262 = vpop.f32.mrb[0].mxu0
  %v2263 = vpop.f32.mrb[0].mxu0
  %v2264 = vadd.f32 %v2129, %v2263
  %v2265 = vpop.f32.mrb[0].mxu0
  %2266 = vmatprep.mubr.bf16.mxu0 0
  %2267 = vmatmul.mubr.bf16.gmra.mrb[0].mxu0 %v2124
  %v2268 = vpop.f32.mrb[0].mxu0
  %v2269 = vadd.f32 %v2129, %v2268
  %v2270 = vpop.f32.mrb[0].mxu0
  %v2271 = vpop.f32.mrb[0].mxu0
  %v2272 = vadd.f32 %v2129, %v2271
  %v2273 = vpop.f32.mrb[0].mxu0
  %2274 = vdwg.mxu0
  %vm2275 = vcmp.gt.f32.partialorder %v2213, 0.0
  %vm2276 = vcmp.gt.f32.partialorder %v2216, 0.0
  %vm2277 = vcmp.gt.f32.partialorder %v2221, 0.0
  %vm2278 = vcmp.gt.f32.partialorder %v2224, 0.0
  %vm2279 = vcmp.gt.f32.partialorder %v2229, 0.0
  %vm2280 = vcmp.gt.f32.partialorder %v2232, 0.0
  %vm2281 = vcmp.gt.f32.partialorder %v2237, 0.0
  %vm2282 = vcmp.gt.f32.partialorder %v2240, 0.0
  %vm2283 = vcmp.gt.f32.partialorder %v2245, 0.0
  %vm2284 = vcmp.gt.f32.partialorder %v2248, 0.0
  %vm2285 = vcmp.gt.f32.partialorder %v2253, 0.0
  %vm2286 = vcmp.gt.f32.partialorder %v2256, 0.0
  %vm2287 = vcmp.gt.f32.partialorder %v2261, 0.0
  %vm2288 = vcmp.gt.f32.partialorder %v2264, 0.0
  %vm2289 = vcmp.gt.f32.partialorder %v2269, 0.0
  %vm2290 = vcmp.gt.f32.partialorder %v2272, 0.0
  %v2291 = vmul.f32 %v2213, 0.01
  %v2292 = vmul.f32 %v2216, 0.01
  %v2293 = vmul.f32 %v2221, 0.01
  %v2294 = vmul.f32 %v2224, 0.01
  %v2295 = vmul.f32 %v2229, 0.01
  %v2296 = vmul.f32 %v2232, 0.01
  %v2297 = vmul.f32 %v2237, 0.01
  %v2298 = vmul.f32 %v2240, 0.01
  %v2299 = vmul.f32 %v2245, 0.01
  %v2300 = vmul.f32 %v2248, 0.01
  %v2301 = vmul.f32 %v2253, 0.01
  %v2302 = vmul.f32 %v2256, 0.01
  %v2303 = vmul.f32 %v2261, 0.01
  %v2304 = vmul.f32 %v2264, 0.01
  %v2305 = vmul.f32 %v2269, 0.01
  %v2306 = vmul.f32 %v2272, 0.01
  %v2307 = vsel %vm2275, %v2213, %v2291
  %v2308 = vsel %vm2276, %v2216, %v2292
  %v2309 = vsel %vm2277, %v2221, %v2293
  %v2310 = vsel %vm2278, %v2224, %v2294
  %v2311 = vsel %vm2279, %v2229, %v2295
  %v2312 = vsel %vm2280, %v2232, %v2296
  %v2313 = vsel %vm2281, %v2237, %v2297
  %v2314 = vsel %vm2282, %v2240, %v2298
  %v2315 = vsel %vm2283, %v2245, %v2299
  %v2316 = vsel %vm2284, %v2248, %v2300
  %v2317 = vsel %vm2285, %v2253, %v2301
  %v2318 = vsel %vm2286, %v2256, %v2302
  %v2319 = vsel %vm2287, %v2261, %v2303
  %v2320 = vsel %vm2288, %v2264, %v2304
  %v2321 = vsel %vm2289, %v2269, %v2305
  %v2322 = vsel %vm2290, %v2272, %v2306
  %s2323 = scalar_lea.vmem %s5, 64
  %v2324 = vld [vmem:[%s2323] sm:$0xf]
  %v2325 = vld [vmem:[%s2323 + $0x4] sm:$0xf]
  %v2326 = vld [vmem:[%s2323 + $0x8] sm:$0xf]
  %v2327 = vld [vmem:[%s2323 + $0xc] sm:$0xf]
  %v2328 = vld [vmem:[%s2323 + $0x10] sm:$0xf]
  %v2329 = vld [vmem:[%s2323 + $0x14] sm:$0xf]
  %v2330 = vld [vmem:[%s2323 + $0x18] sm:$0xf]
  %v2331 = vld [vmem:[%s2323 + $0x1c] sm:$0xf]
  %v2332 = vld [vmem:[%s2323 + $0x20] sm:$0xf]
  %v2333 = vld [vmem:[%s2323 + $0x24] sm:$0xf]
  %v2334 = vld [vmem:[%s2323 + $0x28] sm:$0xf]
  %v2335 = vld [vmem:[%s2323 + $0x2c] sm:$0xf]
  %v2336 = vld [vmem:[%s2323 + $0x30] sm:$0xf]
  %v2337 = vld [vmem:[%s2323 + $0x34] sm:$0xf]
  %v2338 = vld [vmem:[%s2323 + $0x38] sm:$0xf]
  %v2339 = vld [vmem:[%s2323 + $0x3c] sm:$0xf]
  %v2340 = vpack.c.bf16 %v2308, %v2307
  %v2341 = vpack.c.bf16 %v2310, %v2309
  %v2342 = vpack.c.bf16 %v2312, %v2311
  %v2343 = vpack.c.bf16 %v2314, %v2313
  %v2344 = vpack.c.bf16 %v2316, %v2315
  %v2345 = vpack.c.bf16 %v2318, %v2317
  %v2346 = vpack.c.bf16 %v2320, %v2319
  %v2347 = vpack.c.bf16 %v2322, %v2321
  %v2348 = vld [vmem:[%s4 + $0x2] sm:$0x1]
  %v2349 = vlaneseq
  %v2350 = vshrl.u32 %v2349, 7
  %v2351 = vsub.s32 0, %v2350
  %v2352 = vrot.slane %v2348, %v2351
  %v2369 = vunpack.c.l.b16 %v2324
  %v2370 = vunpack.c.l.b16 %v2325
  %v2371 = vunpack.c.l.b16 %v2326
  %v2372 = vunpack.c.l.b16 %v2327
  %v2373 = vunpack.c.l.b16 %v2328
  %v2374 = vunpack.c.l.b16 %v2329
  %v2375 = vunpack.c.l.b16 %v2330
  %v2376 = vunpack.c.l.b16 %v2331
  %v2377 = vunpack.c.l.b16 %v2332
  %v2378 = vunpack.c.l.b16 %v2333
  %v2379 = vunpack.c.l.b16 %v2334
  %v2380 = vunpack.c.l.b16 %v2335
  %v2381 = vunpack.c.l.b16 %v2336
  %v2382 = vunpack.c.l.b16 %v2337
  %v2383 = vunpack.c.l.b16 %v2338
  %v2384 = vunpack.c.l.b16 %v2339
  %v2385 = vpack.c.b16 %v2370, %v2369
  %v2386 = vpack.c.b16 %v2372, %v2371
  %v2387 = vpack.c.b16 %v2374, %v2373
  %v2388 = vpack.c.b16 %v2376, %v2375
  %v2389 = vpack.c.b16 %v2378, %v2377
  %v2390 = vpack.c.b16 %v2380, %v2379
  %v2391 = vpack.c.b16 %v2382, %v2381
  %v2392 = vpack.c.b16 %v2384, %v2383
  %2401 = vmatprep.subr.bf16.mxu0 0
  %2402 = vmatpush1.bf16.msra.mxu0 %v2385
  %2403 = vmatprep.subr.bf16.mxu0 0
  %2404 = vmatpush1.bf16.msra.mxu0 %v2386
  %2405 = vmatprep.subr.bf16.mxu0 0
  %2406 = vmatpush1.bf16.msra.mxu0 %v2387
  %2407 = vmatprep.subr.bf16.mxu0 0
  %2408 = vmatpush1.bf16.msra.mxu0 %v2388
  %2409 = vmatprep.subr.bf16.mxu0 0
  %2410 = vmatpush1.bf16.msra.mxu0 %v2389
  %2411 = vmatprep.subr.bf16.mxu0 0
  %2412 = vmatpush1.bf16.msra.mxu0 %v2390
  %2413 = vmatprep.subr.bf16.mxu0 0
  %2414 = vmatpush1.bf16.msra.mxu0 %v2391
  %2415 = vmatprep.subr.bf16.mxu0 0
  %2416 = vmatpush1.bf16.msra.mxu0 %v2392
  %2417 = vmatprep.subr.bf16.mxu0 0
  %2418 = vmatpush1.bf16.msra.mxu0 0
  %2419 = vmatprep.subr.bf16.mxu0 0
  %2420 = vmatpush1.bf16.msra.mxu0 0
  %2421 = vmatprep.subr.bf16.mxu0 0
  %2422 = vmatpush1.bf16.msra.mxu0 0
  %2423 = vmatprep.subr.bf16.mxu0 0
  %2424 = vmatpush1.bf16.msra.mxu0 0
  %2425 = vmatprep.subr.bf16.mxu0 0
  %2426 = vmatpush1.bf16.msra.mxu0 0
  %2427 = vmatprep.subr.bf16.mxu0 0
  %2428 = vmatpush1.bf16.msra.mxu0 0
  %2429 = vmatprep.subr.bf16.mxu0 0
  %2430 = vmatpush1.bf16.msra.mxu0 0
  %2431 = vmatprep.subr.bf16.mxu0 0
  %2432 = vmatpush1.bf16.msra.mxu0 0
  %2433 = vmatprep.mubr.bf16.mxu0 0
  %2434 = vmatmul.mubr.bf16.gmra.mrb[0].mxu0 %v2340
  %v2435 = vpop.f32.mrb[0].mxu0
  %v2436 = vadd.f32 %v2352, %v2435
  %v2437 = vpop.f32.mrb[0].mxu0
  %v2438 = vpop.f32.mrb[0].mxu0
  %v2439 = vadd.f32 %v2352, %v2438
  %v2440 = vpop.f32.mrb[0].mxu0
  %2441 = vmatprep.mubr.bf16.mxu0 0
  %2442 = vmatmul.mubr.bf16.gmra.mrb[0].mxu0 %v2341
  %v2443 = vpop.f32.mrb[0].mxu0
  %v2444 = vadd.f32 %v2352, %v2443
  %v2445 = vpop.f32.mrb[0].mxu0
  %v2446 = vpop.f32.mrb[0].mxu0
  %v2447 = vadd.f32 %v2352, %v2446
  %v2448 = vpop.f32.mrb[0].mxu0
  %2449 = vmatprep.mubr.bf16.mxu0 0
  %2450 = vmatmul.mubr.bf16.gmra.mrb[0].mxu0 %v2342
  %v2451 = vpop.f32.mrb[0].mxu0
  %v2452 = vadd.f32 %v2352, %v2451
  %v2453 = vpop.f32.mrb[0].mxu0
  %v2454 = vpop.f32.mrb[0].mxu0
  %v2455 = vadd.f32 %v2352, %v2454
  %v2456 = vpop.f32.mrb[0].mxu0
  %2457 = vmatprep.mubr.bf16.mxu0 0
  %2458 = vmatmul.mubr.bf16.gmra.mrb[0].mxu0 %v2343
  %v2459 = vpop.f32.mrb[0].mxu0
  %v2460 = vadd.f32 %v2352, %v2459
  %v2461 = vpop.f32.mrb[0].mxu0
  %v2462 = vpop.f32.mrb[0].mxu0
  %v2463 = vadd.f32 %v2352, %v2462
  %v2464 = vpop.f32.mrb[0].mxu0
  %2465 = vmatprep.mubr.bf16.mxu0 0
  %2466 = vmatmul.mubr.bf16.gmra.mrb[0].mxu0 %v2344
  %v2467 = vpop.f32.mrb[0].mxu0
  %v2468 = vadd.f32 %v2352, %v2467
  %v2469 = vpop.f32.mrb[0].mxu0
  %v2470 = vpop.f32.mrb[0].mxu0
  %v2471 = vadd.f32 %v2352, %v2470
  %v2472 = vpop.f32.mrb[0].mxu0
  %2473 = vmatprep.mubr.bf16.mxu0 0
  %2474 = vmatmul.mubr.bf16.gmra.mrb[0].mxu0 %v2345
  %v2475 = vpop.f32.mrb[0].mxu0
  %v2476 = vadd.f32 %v2352, %v2475
  %v2477 = vpop.f32.mrb[0].mxu0
  %v2478 = vpop.f32.mrb[0].mxu0
  %v2479 = vadd.f32 %v2352, %v2478
  %v2480 = vpop.f32.mrb[0].mxu0
  %2481 = vmatprep.mubr.bf16.mxu0 0
  %2482 = vmatmul.mubr.bf16.gmra.mrb[0].mxu0 %v2346
  %v2483 = vpop.f32.mrb[0].mxu0
  %v2484 = vadd.f32 %v2352, %v2483
  %v2485 = vpop.f32.mrb[0].mxu0
  %v2486 = vpop.f32.mrb[0].mxu0
  %v2487 = vadd.f32 %v2352, %v2486
  %v2488 = vpop.f32.mrb[0].mxu0
  %2489 = vmatprep.mubr.bf16.mxu0 0
  %2490 = vmatmul.mubr.bf16.gmra.mrb[0].mxu0 %v2347
  %v2491 = vpop.f32.mrb[0].mxu0
  %v2492 = vadd.f32 %v2352, %v2491
  %v2493 = vpop.f32.mrb[0].mxu0
  %v2494 = vpop.f32.mrb[0].mxu0
  %v2495 = vadd.f32 %v2352, %v2494
  %v2496 = vpop.f32.mrb[0].mxu0
  %2497 = vdwg.mxu0
  %vm2498 = vcmp.gt.f32.partialorder %v2436, 0.0
  %vm2499 = vcmp.gt.f32.partialorder %v2439, 0.0
  %vm2500 = vcmp.gt.f32.partialorder %v2444, 0.0
  %vm2501 = vcmp.gt.f32.partialorder %v2447, 0.0
  %vm2502 = vcmp.gt.f32.partialorder %v2452, 0.0
  %vm2503 = vcmp.gt.f32.partialorder %v2455, 0.0
  %vm2504 = vcmp.gt.f32.partialorder %v2460, 0.0
  %vm2505 = vcmp.gt.f32.partialorder %v2463, 0.0
  %vm2506 = vcmp.gt.f32.partialorder %v2468, 0.0
  %vm2507 = vcmp.gt.f32.partialorder %v2471, 0.0
  %vm2508 = vcmp.gt.f32.partialorder %v2476, 0.0
  %vm2509 = vcmp.gt.f32.partialorder %v2479, 0.0
  %vm2510 = vcmp.gt.f32.partialorder %v2484, 0.0
  %vm2511 = vcmp.gt.f32.partialorder %v2487, 0.0
  %vm2512 = vcmp.gt.f32.partialorder %v2492, 0.0
  %vm2513 = vcmp.gt.f32.partialorder %v2495, 0.0
  %v2514 = vmul.f32 %v2436, 0.01
  %v2515 = vmul.f32 %v2439, 0.01
  %v2516 = vmul.f32 %v2444, 0.01
  %v2517 = vmul.f32 %v2447, 0.01
  %v2518 = vmul.f32 %v2452, 0.01
  %v2519 = vmul.f32 %v2455, 0.01
  %v2520 = vmul.f32 %v2460, 0.01
  %v2521 = vmul.f32 %v2463, 0.01
  %v2522 = vmul.f32 %v2468, 0.01
  %v2523 = vmul.f32 %v2471, 0.01
  %v2524 = vmul.f32 %v2476, 0.01
  %v2525 = vmul.f32 %v2479, 0.01
  %v2526 = vmul.f32 %v2484, 0.01
  %v2527 = vmul.f32 %v2487, 0.01
  %v2528 = vmul.f32 %v2492, 0.01
  %v2529 = vmul.f32 %v2495, 0.01
  %v2530 = vsel %vm2498, %v2436, %v2514
  %v2531 = vsel %vm2499, %v2439, %v2515
  %v2532 = vsel %vm2500, %v2444, %v2516
  %v2533 = vsel %vm2501, %v2447, %v2517
  %v2534 = vsel %vm2502, %v2452, %v2518
  %v2535 = vsel %vm2503, %v2455, %v2519
  %v2536 = vsel %vm2504, %v2460, %v2520
  %v2537 = vsel %vm2505, %v2463, %v2521
  %v2538 = vsel %vm2506, %v2468, %v2522
  %v2539 = vsel %vm2507, %v2471, %v2523
  %v2540 = vsel %vm2508, %v2476, %v2524
  %v2541 = vsel %vm2509, %v2479, %v2525
  %v2542 = vsel %vm2510, %v2484, %v2526
  %v2543 = vsel %vm2511, %v2487, %v2527
  %v2544 = vsel %vm2512, %v2492, %v2528
  %v2545 = vsel %vm2513, %v2495, %v2529
  %s2546 = scalar_lea.vmem %s5, 128
  %v2547 = vld [vmem:[%s2546] sm:$0xf]
  %v2548 = vld [vmem:[%s2546 + $0x4] sm:$0xf]
  %v2549 = vld [vmem:[%s2546 + $0x8] sm:$0xf]
  %v2550 = vld [vmem:[%s2546 + $0xc] sm:$0xf]
  %v2551 = vld [vmem:[%s2546 + $0x10] sm:$0xf]
  %v2552 = vld [vmem:[%s2546 + $0x14] sm:$0xf]
  %v2553 = vld [vmem:[%s2546 + $0x18] sm:$0xf]
  %v2554 = vld [vmem:[%s2546 + $0x1c] sm:$0xf]
  %v2555 = vld [vmem:[%s2546 + $0x20] sm:$0xf]
  %v2556 = vld [vmem:[%s2546 + $0x24] sm:$0xf]
  %v2557 = vld [vmem:[%s2546 + $0x28] sm:$0xf]
  %v2558 = vld [vmem:[%s2546 + $0x2c] sm:$0xf]
  %v2559 = vld [vmem:[%s2546 + $0x30] sm:$0xf]
  %v2560 = vld [vmem:[%s2546 + $0x34] sm:$0xf]
  %v2561 = vld [vmem:[%s2546 + $0x38] sm:$0xf]
  %v2562 = vld [vmem:[%s2546 + $0x3c] sm:$0xf]
  %v2563 = vpack.c.bf16 %v2531, %v2530
  %v2564 = vpack.c.bf16 %v2533, %v2532
  %v2565 = vpack.c.bf16 %v2535, %v2534
  %v2566 = vpack.c.bf16 %v2537, %v2536
  %v2567 = vpack.c.bf16 %v2539, %v2538
  %v2568 = vpack.c.bf16 %v2541, %v2540
  %v2569 = vpack.c.bf16 %v2543, %v2542
  %v2570 = vpack.c.bf16 %v2545, %v2544
  %v2571 = vld [vmem:[%s4 + $0x3] sm:$0x1]
  %v2572 = vlaneseq
  %v2573 = vshrl.u32 %v2572, 7
  %v2574 = vsub.s32 0, %v2573
  %v2575 = vrot.slane %v2571, %v2574
  %v2592 = vunpack.c.l.b16 %v2547
  %v2593 = vunpack.c.l.b16 %v2548
  %v2594 = vunpack.c.l.b16 %v2549
  %v2595 = vunpack.c.l.b16 %v2550
  %v2596 = vunpack.c.l.b16 %v2551
  %v2597 = vunpack.c.l.b16 %v2552
  %v2598 = vunpack.c.l.b16 %v2553
  %v2599 = vunpack.c.l.b16 %v2554
  %v2600 = vunpack.c.l.b16 %v2555
  %v2601 = vunpack.c.l.b16 %v2556
  %v2602 = vunpack.c.l.b16 %v2557
  %v2603 = vunpack.c.l.b16 %v2558
  %v2604 = vunpack.c.l.b16 %v2559
  %v2605 = vunpack.c.l.b16 %v2560
  %v2606 = vunpack.c.l.b16 %v2561
  %v2607 = vunpack.c.l.b16 %v2562
  %v2608 = vpack.c.b16 %v2593, %v2592
  %v2609 = vpack.c.b16 %v2595, %v2594
  %v2610 = vpack.c.b16 %v2597, %v2596
  %v2611 = vpack.c.b16 %v2599, %v2598
  %v2612 = vpack.c.b16 %v2601, %v2600
  %v2613 = vpack.c.b16 %v2603, %v2602
  %v2614 = vpack.c.b16 %v2605, %v2604
  %v2615 = vpack.c.b16 %v2607, %v2606
  %2624 = vmatprep.subr.bf16.mxu0 0
  %2625 = vmatpush1.bf16.msra.mxu0 %v2608
  %2626 = vmatprep.subr.bf16.mxu0 0
  %2627 = vmatpush1.bf16.msra.mxu0 %v2609
  %2628 = vmatprep.subr.bf16.mxu0 0
  %2629 = vmatpush1.bf16.msra.mxu0 %v2610
  %2630 = vmatprep.subr.bf16.mxu0 0
  %2631 = vmatpush1.bf16.msra.mxu0 %v2611
  %2632 = vmatprep.subr.bf16.mxu0 0
  %2633 = vmatpush1.bf16.msra.mxu0 %v2612
  %2634 = vmatprep.subr.bf16.mxu0 0
  %2635 = vmatpush1.bf16.msra.mxu0 %v2613
  %2636 = vmatprep.subr.bf16.mxu0 0
  %2637 = vmatpush1.bf16.msra.mxu0 %v2614
  %2638 = vmatprep.subr.bf16.mxu0 0
  %2639 = vmatpush1.bf16.msra.mxu0 %v2615
  %2640 = vmatprep.subr.bf16.mxu0 0
  %2641 = vmatpush1.bf16.msra.mxu0 0
  %2642 = vmatprep.subr.bf16.mxu0 0
  %2643 = vmatpush1.bf16.msra.mxu0 0
  %2644 = vmatprep.subr.bf16.mxu0 0
  %2645 = vmatpush1.bf16.msra.mxu0 0
  %2646 = vmatprep.subr.bf16.mxu0 0
  %2647 = vmatpush1.bf16.msra.mxu0 0
  %2648 = vmatprep.subr.bf16.mxu0 0
  %2649 = vmatpush1.bf16.msra.mxu0 0
  %2650 = vmatprep.subr.bf16.mxu0 0
  %2651 = vmatpush1.bf16.msra.mxu0 0
  %2652 = vmatprep.subr.bf16.mxu0 0
  %2653 = vmatpush1.bf16.msra.mxu0 0
  %2654 = vmatprep.subr.bf16.mxu0 0
  %2655 = vmatpush1.bf16.msra.mxu0 0
  %2656 = vmatprep.mubr.bf16.mxu0 0
  %2657 = vmatmul.mubr.bf16.gmra.mrb[0].mxu0 %v2563
  %v2658 = vpop.f32.mrb[0].mxu0
  %v2659 = vadd.f32 %v2575, %v2658
  %v2660 = vpop.f32.mrb[0].mxu0
  %v2661 = vpop.f32.mrb[0].mxu0
  %v2662 = vadd.f32 %v2575, %v2661
  %v2663 = vpop.f32.mrb[0].mxu0
  %2664 = vmatprep.mubr.bf16.mxu0 0
  %2665 = vmatmul.mubr.bf16.gmra.mrb[0].mxu0 %v2564
  %v2666 = vpop.f32.mrb[0].mxu0
  %v2667 = vadd.f32 %v2575, %v2666
  %v2668 = vpop.f32.mrb[0].mxu0
  %v2669 = vpop.f32.mrb[0].mxu0
  %v2670 = vadd.f32 %v2575, %v2669
  %v2671 = vpop.f32.mrb[0].mxu0
  %2672 = vmatprep.mubr.bf16.mxu0 0
  %2673 = vmatmul.mubr.bf16.gmra.mrb[0].mxu0 %v2565
  %v2674 = vpop.f32.mrb[0].mxu0
  %v2675 = vadd.f32 %v2575, %v2674
  %v2676 = vpop.f32.mrb[0].mxu0
  %v2677 = vpop.f32.mrb[0].mxu0
  %v2678 = vadd.f32 %v2575, %v2677
  %v2679 = vpop.f32.mrb[0].mxu0
  %2680 = vmatprep.mubr.bf16.mxu0 0
  %2681 = vmatmul.mubr.bf16.gmra.mrb[0].mxu0 %v2566
  %v2682 = vpop.f32.mrb[0].mxu0
  %v2683 = vadd.f32 %v2575, %v2682
  %v2684 = vpop.f32.mrb[0].mxu0
  %v2685 = vpop.f32.mrb[0].mxu0
  %v2686 = vadd.f32 %v2575, %v2685
  %v2687 = vpop.f32.mrb[0].mxu0
  %2688 = vmatprep.mubr.bf16.mxu0 0
  %2689 = vmatmul.mubr.bf16.gmra.mrb[0].mxu0 %v2567
  %v2690 = vpop.f32.mrb[0].mxu0
  %v2691 = vadd.f32 %v2575, %v2690
  %v2692 = vpop.f32.mrb[0].mxu0
  %v2693 = vpop.f32.mrb[0].mxu0
  %v2694 = vadd.f32 %v2575, %v2693
  %v2695 = vpop.f32.mrb[0].mxu0
  %2696 = vmatprep.mubr.bf16.mxu0 0
  %2697 = vmatmul.mubr.bf16.gmra.mrb[0].mxu0 %v2568
  %v2698 = vpop.f32.mrb[0].mxu0
  %v2699 = vadd.f32 %v2575, %v2698
  %v2700 = vpop.f32.mrb[0].mxu0
  %v2701 = vpop.f32.mrb[0].mxu0
  %v2702 = vadd.f32 %v2575, %v2701
  %v2703 = vpop.f32.mrb[0].mxu0
  %2704 = vmatprep.mubr.bf16.mxu0 0
  %2705 = vmatmul.mubr.bf16.gmra.mrb[0].mxu0 %v2569
  %v2706 = vpop.f32.mrb[0].mxu0
  %v2707 = vadd.f32 %v2575, %v2706
  %v2708 = vpop.f32.mrb[0].mxu0
  %v2709 = vpop.f32.mrb[0].mxu0
  %v2710 = vadd.f32 %v2575, %v2709
  %v2711 = vpop.f32.mrb[0].mxu0
  %2712 = vmatprep.mubr.bf16.mxu0 0
  %2713 = vmatmul.mubr.bf16.gmra.mrb[0].mxu0 %v2570
  %v2714 = vpop.f32.mrb[0].mxu0
  %v2715 = vadd.f32 %v2575, %v2714
  %v2716 = vpop.f32.mrb[0].mxu0
  %v2717 = vpop.f32.mrb[0].mxu0
  %v2718 = vadd.f32 %v2575, %v2717
  %v2719 = vpop.f32.mrb[0].mxu0
  %2720 = vdwg.mxu0
  %vm2721 = vcmp.gt.f32.partialorder %v2659, 0.0
  %vm2722 = vcmp.gt.f32.partialorder %v2662, 0.0
  %vm2723 = vcmp.gt.f32.partialorder %v2667, 0.0
  %vm2724 = vcmp.gt.f32.partialorder %v2670, 0.0
  %vm2725 = vcmp.gt.f32.partialorder %v2675, 0.0
  %vm2726 = vcmp.gt.f32.partialorder %v2678, 0.0
  %vm2727 = vcmp.gt.f32.partialorder %v2683, 0.0
  %vm2728 = vcmp.gt.f32.partialorder %v2686, 0.0
  %vm2729 = vcmp.gt.f32.partialorder %v2691, 0.0
  %vm2730 = vcmp.gt.f32.partialorder %v2694, 0.0
  %vm2731 = vcmp.gt.f32.partialorder %v2699, 0.0
  %vm2732 = vcmp.gt.f32.partialorder %v2702, 0.0
  %vm2733 = vcmp.gt.f32.partialorder %v2707, 0.0
  %vm2734 = vcmp.gt.f32.partialorder %v2710, 0.0
  %vm2735 = vcmp.gt.f32.partialorder %v2715, 0.0
  %vm2736 = vcmp.gt.f32.partialorder %v2718, 0.0
  %v2737 = vmul.f32 %v2659, 0.01
  %v2738 = vmul.f32 %v2662, 0.01
  %v2739 = vmul.f32 %v2667, 0.01
  %v2740 = vmul.f32 %v2670, 0.01
  %v2741 = vmul.f32 %v2675, 0.01
  %v2742 = vmul.f32 %v2678, 0.01
  %v2743 = vmul.f32 %v2683, 0.01
  %v2744 = vmul.f32 %v2686, 0.01
  %v2745 = vmul.f32 %v2691, 0.01
  %v2746 = vmul.f32 %v2694, 0.01
  %v2747 = vmul.f32 %v2699, 0.01
  %v2748 = vmul.f32 %v2702, 0.01
  %v2749 = vmul.f32 %v2707, 0.01
  %v2750 = vmul.f32 %v2710, 0.01
  %v2751 = vmul.f32 %v2715, 0.01
  %v2752 = vmul.f32 %v2718, 0.01
  %v2753 = vsel %vm2721, %v2659, %v2737
  %v2754 = vsel %vm2722, %v2662, %v2738
  %v2755 = vsel %vm2723, %v2667, %v2739
  %v2756 = vsel %vm2724, %v2670, %v2740
  %v2757 = vsel %vm2725, %v2675, %v2741
  %v2758 = vsel %vm2726, %v2678, %v2742
  %v2759 = vsel %vm2727, %v2683, %v2743
  %v2760 = vsel %vm2728, %v2686, %v2744
  %v2761 = vsel %vm2729, %v2691, %v2745
  %v2762 = vsel %vm2730, %v2694, %v2746
  %v2763 = vsel %vm2731, %v2699, %v2747
  %v2764 = vsel %vm2732, %v2702, %v2748
  %v2765 = vsel %vm2733, %v2707, %v2749
  %v2766 = vsel %vm2734, %v2710, %v2750
  %v2767 = vsel %vm2735, %v2715, %v2751
  %v2768 = vsel %vm2736, %v2718, %v2752
  %v2769 = vld [vmem:[%s6] sm:$0xf]
  %v2770 = vld [vmem:[%s6 + $0x4] sm:$0xf]
  %v2771 = vld [vmem:[%s6 + $0x8] sm:$0xf]
  %v2772 = vld [vmem:[%s6 + $0xc] sm:$0xf]
  %v2773 = vld [vmem:[%s6 + $0x10] sm:$0xf]
  %v2774 = vld [vmem:[%s6 + $0x14] sm:$0xf]
  %v2775 = vld [vmem:[%s6 + $0x18] sm:$0xf]
  %v2776 = vld [vmem:[%s6 + $0x1c] sm:$0xf]
  %v2777 = vld [vmem:[%s6 + $0x20] sm:$0xf]
  %v2778 = vld [vmem:[%s6 + $0x24] sm:$0xf]
  %v2779 = vld [vmem:[%s6 + $0x28] sm:$0xf]
  %v2780 = vld [vmem:[%s6 + $0x2c] sm:$0xf]
  %v2781 = vld [vmem:[%s6 + $0x30] sm:$0xf]
  %v2782 = vld [vmem:[%s6 + $0x34] sm:$0xf]
  %v2783 = vld [vmem:[%s6 + $0x38] sm:$0xf]
  %v2784 = vld [vmem:[%s6 + $0x3c] sm:$0xf]
  %v2785 = vpack.c.bf16 %v2754, %v2753
  %v2786 = vpack.c.bf16 %v2756, %v2755
  %v2787 = vpack.c.bf16 %v2758, %v2757
  %v2788 = vpack.c.bf16 %v2760, %v2759
  %v2789 = vpack.c.bf16 %v2762, %v2761
  %v2790 = vpack.c.bf16 %v2764, %v2763
  %v2791 = vpack.c.bf16 %v2766, %v2765
  %v2792 = vpack.c.bf16 %v2768, %v2767
  %v2793 = vld [vmem:[%s7] sm:$0x1]
  %v2795 = vlaneseq
  %v2796 = vshrl.u32 %v2795, 7
  %v2797 = vsub.s32 0, %v2796
  %v2798 = vrot.slane %v2793, %v2797
  %v2816 = vunpack.c.l.b16 %v2769
  %v2817 = vunpack.c.l.b16 %v2770
  %v2818 = vunpack.c.l.b16 %v2771
  %v2819 = vunpack.c.l.b16 %v2772
  %v2820 = vunpack.c.l.b16 %v2773
  %v2821 = vunpack.c.l.b16 %v2774
  %v2822 = vunpack.c.l.b16 %v2775
  %v2823 = vunpack.c.l.b16 %v2776
  %v2824 = vunpack.c.l.b16 %v2777
  %v2825 = vunpack.c.l.b16 %v2778
  %v2826 = vunpack.c.l.b16 %v2779
  %v2827 = vunpack.c.l.b16 %v2780
  %v2828 = vunpack.c.l.b16 %v2781
  %v2829 = vunpack.c.l.b16 %v2782
  %v2830 = vunpack.c.l.b16 %v2783
  %v2831 = vunpack.c.l.b16 %v2784
  %v2832 = vpack.c.b16 %v2817, %v2816
  %v2833 = vpack.c.b16 %v2819, %v2818
  %v2834 = vpack.c.b16 %v2821, %v2820
  %v2835 = vpack.c.b16 %v2823, %v2822
  %v2836 = vpack.c.b16 %v2825, %v2824
  %v2837 = vpack.c.b16 %v2827, %v2826
  %v2838 = vpack.c.b16 %v2829, %v2828
  %v2839 = vpack.c.b16 %v2831, %v2830
  %2848 = vmatprep.subr.bf16.mxu0 0
  %2849 = vmatpush1.bf16.msra.mxu0 %v2832
  %2850 = vmatprep.subr.bf16.mxu0 0
  %2851 = vmatpush1.bf16.msra.mxu0 %v2833
  %2852 = vmatprep.subr.bf16.mxu0 0
  %2853 = vmatpush1.bf16.msra.mxu0 %v2834
  %2854 = vmatprep.subr.bf16.mxu0 0
  %2855 = vmatpush1.bf16.msra.mxu0 %v2835
  %2856 = vmatprep.subr.bf16.mxu0 0
  %2857 = vmatpush1.bf16.msra.mxu0 %v2836
  %2858 = vmatprep.subr.bf16.mxu0 0
  %2859 = vmatpush1.bf16.msra.mxu0 %v2837
  %2860 = vmatprep.subr.bf16.mxu0 0
  %2861 = vmatpush1.bf16.msra.mxu0 %v2838
  %2862 = vmatprep.subr.bf16.mxu0 0
  %2863 = vmatpush1.bf16.msra.mxu0 %v2839
  %2864 = vmatprep.subr.bf16.mxu0 0
  %2865 = vmatpush1.bf16.msra.mxu0 0
  %2866 = vmatprep.subr.bf16.mxu0 0
  %2867 = vmatpush1.bf16.msra.mxu0 0
  %2868 = vmatprep.subr.bf16.mxu0 0
  %2869 = vmatpush1.bf16.msra.mxu0 0
  %2870 = vmatprep.subr.bf16.mxu0 0
  %2871 = vmatpush1.bf16.msra.mxu0 0
  %2872 = vmatprep.subr.bf16.mxu0 0
  %2873 = vmatpush1.bf16.msra.mxu0 0
  %2874 = vmatprep.subr.bf16.mxu0 0
  %2875 = vmatpush1.bf16.msra.mxu0 0
  %2876 = vmatprep.subr.bf16.mxu0 0
  %2877 = vmatpush1.bf16.msra.mxu0 0
  %2878 = vmatprep.subr.bf16.mxu0 0
  %2879 = vmatpush1.bf16.msra.mxu0 0
  %2880 = vmatprep.mubr.bf16.mxu0 0
  %2881 = vmatmul.mubr.bf16.gmra.mrb[0].mxu0 %v2785
  %v2882 = vpop.f32.mrb[0].mxu0
  %v2883 = vadd.f32 %v2798, %v2882
  %v2884 = vpop.f32.mrb[0].mxu0
  %v2885 = vpop.f32.mrb[0].mxu0
  %v2886 = vadd.f32 %v2798, %v2885
  %v2887 = vpop.f32.mrb[0].mxu0
  %2888 = vmatprep.mubr.bf16.mxu0 0
  %2889 = vmatmul.mubr.bf16.gmra.mrb[0].mxu0 %v2786
  %v2890 = vpop.f32.mrb[0].mxu0
  %v2891 = vadd.f32 %v2798, %v2890
  %v2892 = vpop.f32.mrb[0].mxu0
  %v2893 = vpop.f32.mrb[0].mxu0
  %v2894 = vadd.f32 %v2798, %v2893
  %v2895 = vpop.f32.mrb[0].mxu0
  %2896 = vmatprep.mubr.bf16.mxu0 0
  %2897 = vmatmul.mubr.bf16.gmra.mrb[0].mxu0 %v2787
  %v2898 = vpop.f32.mrb[0].mxu0
  %v2899 = vadd.f32 %v2798, %v2898
  %v2900 = vpop.f32.mrb[0].mxu0
  %v2901 = vpop.f32.mrb[0].mxu0
  %v2902 = vadd.f32 %v2798, %v2901
  %v2903 = vpop.f32.mrb[0].mxu0
  %2904 = vmatprep.mubr.bf16.mxu0 0
  %2905 = vmatmul.mubr.bf16.gmra.mrb[0].mxu0 %v2788
  %v2906 = vpop.f32.mrb[0].mxu0
  %v2907 = vadd.f32 %v2798, %v2906
  %v2908 = vpop.f32.mrb[0].mxu0
  %v2909 = vpop.f32.mrb[0].mxu0
  %v2910 = vadd.f32 %v2798, %v2909
  %v2911 = vpop.f32.mrb[0].mxu0
  %2912 = vmatprep.mubr.bf16.mxu0 0
  %2913 = vmatmul.mubr.bf16.gmra.mrb[0].mxu0 %v2789
  %v2914 = vpop.f32.mrb[0].mxu0
  %v2915 = vadd.f32 %v2798, %v2914
  %v2916 = vpop.f32.mrb[0].mxu0
  %v2917 = vpop.f32.mrb[0].mxu0
  %v2918 = vadd.f32 %v2798, %v2917
  %v2919 = vpop.f32.mrb[0].mxu0
  %2920 = vmatprep.mubr.bf16.mxu0 0
  %2921 = vmatmul.mubr.bf16.gmra.mrb[0].mxu0 %v2790
  %v2922 = vpop.f32.mrb[0].mxu0
  %v2923 = vadd.f32 %v2798, %v2922
  %v2924 = vpop.f32.mrb[0].mxu0
  %v2925 = vpop.f32.mrb[0].mxu0
  %v2926 = vadd.f32 %v2798, %v2925
  %v2927 = vpop.f32.mrb[0].mxu0
  %2928 = vmatprep.mubr.bf16.mxu0 0
  %2929 = vmatmul.mubr.bf16.gmra.mrb[0].mxu0 %v2791
  %v2930 = vpop.f32.mrb[0].mxu0
  %v2931 = vadd.f32 %v2798, %v2930
  %v2932 = vpop.f32.mrb[0].mxu0
  %v2933 = vpop.f32.mrb[0].mxu0
  %v2934 = vadd.f32 %v2798, %v2933
  %v2935 = vpop.f32.mrb[0].mxu0
  %2936 = vmatprep.mubr.bf16.mxu0 0
  %2937 = vmatmul.mubr.bf16.gmra.mrb[0].mxu0 %v2792
  %v2938 = vpop.f32.mrb[0].mxu0
  %v2939 = vadd.f32 %v2798, %v2938
  %v2940 = vpop.f32.mrb[0].mxu0
  %v2941 = vpop.f32.mrb[0].mxu0
  %v2942 = vadd.f32 %v2798, %v2941
  %v2943 = vpop.f32.mrb[0].mxu0
  %2944 = vdwg.mxu0
  %v2945 = vxor.u32 %v2883, 2147483648
  %v2946 = vxor.u32 %v2886, 2147483648
  %v2947 = vxor.u32 %v2891, 2147483648
  %v2948 = vxor.u32 %v2894, 2147483648
  %v2949 = vxor.u32 %v2899, 2147483648
  %v2950 = vxor.u32 %v2902, 2147483648
  %v2951 = vxor.u32 %v2907, 2147483648
  %v2952 = vxor.u32 %v2910, 2147483648
  %v2953 = vxor.u32 %v2915, 2147483648
  %v2954 = vxor.u32 %v2918, 2147483648
  %v2955 = vxor.u32 %v2923, 2147483648
  %v2956 = vxor.u32 %v2926, 2147483648
  %v2957 = vxor.u32 %v2931, 2147483648
  %v2958 = vxor.u32 %v2934, 2147483648
  %v2959 = vxor.u32 %v2939, 2147483648
  %v2960 = vxor.u32 %v2942, 2147483648
  %v2961 = vmul.f32 %v2945, 1.442695
  %v2962 = vpow.pop %v2961
  %v2963 = vmul.f32 %v2946, 1.442695
  %v2964 = vpow.pop %v2963
  %v2965 = vmul.f32 %v2947, 1.442695
  %v2966 = vpow.pop %v2965
  %v2967 = vmul.f32 %v2948, 1.442695
  %v2968 = vpow.pop %v2967
  %v2969 = vmul.f32 %v2949, 1.442695
  %v2970 = vpow.pop %v2969
  %v2971 = vmul.f32 %v2950, 1.442695
  %v2972 = vpow.pop %v2971
  %v2973 = vmul.f32 %v2951, 1.442695
  %v2974 = vpow.pop %v2973
  %v2975 = vmul.f32 %v2952, 1.442695
  %v2976 = vpow.pop %v2975
  %v2977 = vmul.f32 %v2953, 1.442695
  %v2978 = vpow.pop %v2977
  %v2979 = vmul.f32 %v2954, 1.442695
  %v2980 = vpow.pop %v2979
  %v2981 = vmul.f32 %v2955, 1.442695
  %v2982 = vpow.pop %v2981
  %v2983 = vmul.f32 %v2956, 1.442695
  %v2984 = vpow.pop %v2983
  %v2985 = vmul.f32 %v2957, 1.442695
  %v2986 = vpow.pop %v2985
  %v2987 = vmul.f32 %v2958, 1.442695
  %v2988 = vpow.pop %v2987
  %v2989 = vmul.f32 %v2959, 1.442695
  %v2990 = vpow.pop %v2989
  %v2991 = vmul.f32 %v2960, 1.442695
  %v2992 = vpow.pop %v2991
  %v2993 = vadd.f32 %v2962, 1.0
  %v2994 = vadd.f32 %v2964, 1.0
  %v2995 = vadd.f32 %v2966, 1.0
  %v2996 = vadd.f32 %v2968, 1.0
  %v2997 = vadd.f32 %v2970, 1.0
  %v2998 = vadd.f32 %v2972, 1.0
  %v2999 = vadd.f32 %v2974, 1.0
  %v3000 = vadd.f32 %v2976, 1.0
  %v3001 = vadd.f32 %v2978, 1.0
  %v3002 = vadd.f32 %v2980, 1.0
  %v3003 = vadd.f32 %v2982, 1.0
  %v3004 = vadd.f32 %v2984, 1.0
  %v3005 = vadd.f32 %v2986, 1.0
  %v3006 = vadd.f32 %v2988, 1.0
  %v3007 = vadd.f32 %v2990, 1.0
  %v3008 = vadd.f32 %v2992, 1.0
  %v3009 = vrcp.pop %v2993
  %v3010 = vmul.f32 1.0, %v3009
  %v3011 = vrcp.pop %v2994
  %v3012 = vmul.f32 1.0, %v3011
  %v3013 = vrcp.pop %v2995
  %v3014 = vmul.f32 1.0, %v3013
  %v3015 = vrcp.pop %v2996
  %v3016 = vmul.f32 1.0, %v3015
  %v3017 = vrcp.pop %v2997
  %v3018 = vmul.f32 1.0, %v3017
  %v3019 = vrcp.pop %v2998
  %v3020 = vmul.f32 1.0, %v3019
  %v3021 = vrcp.pop %v2999
  %v3022 = vmul.f32 1.0, %v3021
  %v3023 = vrcp.pop %v3000
  %v3024 = vmul.f32 1.0, %v3023
  %v3025 = vrcp.pop %v3001
  %v3026 = vmul.f32 1.0, %v3025
  %v3027 = vrcp.pop %v3002
  %v3028 = vmul.f32 1.0, %v3027
  %v3029 = vrcp.pop %v3003
  %v3030 = vmul.f32 1.0, %v3029
  %v3031 = vrcp.pop %v3004
  %v3032 = vmul.f32 1.0, %v3031
  %v3033 = vrcp.pop %v3005
  %v3034 = vmul.f32 1.0, %v3033
  %v3035 = vrcp.pop %v3006
  %v3036 = vmul.f32 1.0, %v3035
  %v3037 = vrcp.pop %v3007
  %v3038 = vmul.f32 1.0, %v3037
  %v3039 = vrcp.pop %v3008
  %v3040 = vmul.f32 1.0, %v3039
  %v3041 = vld [vmem:[%s8] sm:$0x7]
  %v3042 = vpack.c.bf16 %v3012, %v3010
  %v3043 = vpack.c.bf16 %v3016, %v3014
  %v3044 = vpack.c.bf16 %v3020, %v3018
  %v3045 = vpack.c.bf16 %v3024, %v3022
  %v3046 = vpack.c.bf16 %v3028, %v3026
  %v3047 = vpack.c.bf16 %v3032, %v3030
  %v3048 = vpack.c.bf16 %v3036, %v3034
  %v3049 = vpack.c.bf16 %v3040, %v3038
  %v3050 = vld [vmem:[%s11] sm:$0x1]
  %v3051 = vlaneseq
  %v3052 = vshrl.u32 %v3051, 7
  %v3053 = vsub.s32 0, %v3052
  %v3054 = vrot.slane %v3050, %v3053
  %vm3055 = vcmask 48128
  %v3057 = vsel %vm3055, %v3042, 0
  %v3060 = vsel %vm3055, %v3043, 0
  %v3063 = vsel %vm3055, %v3044, 0
  %v3066 = vsel %vm3055, %v3045, 0
  %v3069 = vsel %vm3055, %v3046, 0
  %v3072 = vsel %vm3055, %v3047, 0
  %v3075 = vsel %vm3055, %v3048, 0
  %v3078 = vsel %vm3055, %v3049, 0
  %vm3080 = vcmask 1042432
  %v3082 = vsel %vm3080, %v3041, 0
  %3084 = vmatprep.subr.bf16.mxu0 0
  %3085 = vmatpush1.bf16.msra.mxu0 %v3082
  %3086 = vmatprep.subr.bf16.mxu0 0
  %3087 = vmatpush1.bf16.msra.mxu0 0
  %3088 = vmatprep.subr.bf16.mxu0 0
  %3089 = vmatpush1.bf16.msra.mxu0 0
  %3090 = vmatprep.subr.bf16.mxu0 0
  %3091 = vmatpush1.bf16.msra.mxu0 0
  %3092 = vmatprep.subr.bf16.mxu0 0
  %3093 = vmatpush1.bf16.msra.mxu0 0
  %3094 = vmatprep.subr.bf16.mxu0 0
  %3095 = vmatpush1.bf16.msra.mxu0 0
  %3096 = vmatprep.subr.bf16.mxu0 0
  %3097 = vmatpush1.bf16.msra.mxu0 0
  %3098 = vmatprep.subr.bf16.mxu0 0
  %3099 = vmatpush1.bf16.msra.mxu0 0
  %3100 = vmatprep.subr.bf16.mxu0 0
  %3101 = vmatpush1.bf16.msra.mxu0 0
  %3102 = vmatprep.subr.bf16.mxu0 0
  %3103 = vmatpush1.bf16.msra.mxu0 0
  %3104 = vmatprep.subr.bf16.mxu0 0
  %3105 = vmatpush1.bf16.msra.mxu0 0
  %3106 = vmatprep.subr.bf16.mxu0 0
  %3107 = vmatpush1.bf16.msra.mxu0 0
  %3108 = vmatprep.subr.bf16.mxu0 0
  %3109 = vmatpush1.bf16.msra.mxu0 0
  %3110 = vmatprep.subr.bf16.mxu0 0
  %3111 = vmatpush1.bf16.msra.mxu0 0
  %3112 = vmatprep.subr.bf16.mxu0 0
  %3113 = vmatpush1.bf16.msra.mxu0 0
  %3114 = vmatprep.subr.bf16.mxu0 0
  %3115 = vmatpush1.bf16.msra.mxu0 0
  %3116 = vmatprep.mubr.bf16.mxu0 0
  %3117 = vmatmul.mubr.bf16.gmra.mrb[0].mxu0 %v3057
  %v3118 = vpop.f32.mrb[0].mxu0
  %v3119 = vadd.f32 %v3054, %v3118
  %v3120 = vpop.f32.mrb[0].mxu0
  %v3121 = vpop.f32.mrb[0].mxu0
  %v3122 = vadd.f32 %v3054, %v3121
  %v3123 = vpop.f32.mrb[0].mxu0
  %3124 = vmatprep.mubr.bf16.mxu0 0
  %3125 = vmatmul.mubr.bf16.gmra.mrb[0].mxu0 %v3060
  %v3126 = vpop.f32.mrb[0].mxu0
  %v3127 = vadd.f32 %v3054, %v3126
  %v3128 = vpop.f32.mrb[0].mxu0
  %v3129 = vpop.f32.mrb[0].mxu0
  %v3130 = vadd.f32 %v3054, %v3129
  %v3131 = vpop.f32.mrb[0].mxu0
  %3132 = vmatprep.mubr.bf16.mxu0 0
  %3133 = vmatmul.mubr.bf16.gmra.mrb[0].mxu0 %v3063
  %v3134 = vpop.f32.mrb[0].mxu0
  %v3135 = vadd.f32 %v3054, %v3134
  %v3136 = vpop.f32.mrb[0].mxu0
  %v3137 = vpop.f32.mrb[0].mxu0
  %v3138 = vadd.f32 %v3054, %v3137
  %v3139 = vpop.f32.mrb[0].mxu0
  %3140 = vmatprep.mubr.bf16.mxu0 0
  %3141 = vmatmul.mubr.bf16.gmra.mrb[0].mxu0 %v3066
  %v3142 = vpop.f32.mrb[0].mxu0
  %v3143 = vadd.f32 %v3054, %v3142
  %v3144 = vpop.f32.mrb[0].mxu0
  %v3145 = vpop.f32.mrb[0].mxu0
  %v3146 = vadd.f32 %v3054, %v3145
  %v3147 = vpop.f32.mrb[0].mxu0
  %3148 = vmatprep.mubr.bf16.mxu0 0
  %3149 = vmatmul.mubr.bf16.gmra.mrb[0].mxu0 %v3069
  %v3150 = vpop.f32.mrb[0].mxu0
  %v3151 = vadd.f32 %v3054, %v3150
  %v3152 = vpop.f32.mrb[0].mxu0
  %v3153 = vpop.f32.mrb[0].mxu0
  %v3154 = vadd.f32 %v3054, %v3153
  %v3155 = vpop.f32.mrb[0].mxu0
  %3156 = vmatprep.mubr.bf16.mxu0 0
  %3157 = vmatmul.mubr.bf16.gmra.mrb[0].mxu0 %v3072
  %v3158 = vpop.f32.mrb[0].mxu0
  %v3159 = vadd.f32 %v3054, %v3158
  %v3160 = vpop.f32.mrb[0].mxu0
  %v3161 = vpop.f32.mrb[0].mxu0
  %v3162 = vadd.f32 %v3054, %v3161
  %v3163 = vpop.f32.mrb[0].mxu0
  %3164 = vmatprep.mubr.bf16.mxu0 0
  %3165 = vmatmul.mubr.bf16.gmra.mrb[0].mxu0 %v3075
  %v3166 = vpop.f32.mrb[0].mxu0
  %v3167 = vadd.f32 %v3054, %v3166
  %v3168 = vpop.f32.mrb[0].mxu0
  %v3169 = vpop.f32.mrb[0].mxu0
  %v3170 = vadd.f32 %v3054, %v3169
  %v3171 = vpop.f32.mrb[0].mxu0
  %3172 = vmatprep.mubr.bf16.mxu0 0
  %3173 = vmatmul.mubr.bf16.gmra.mrb[0].mxu0 %v3078
  %v3174 = vpop.f32.mrb[0].mxu0
  %v3175 = vadd.f32 %v3054, %v3174
  %v3176 = vpop.f32.mrb[0].mxu0
  %v3177 = vpop.f32.mrb[0].mxu0
  %v3178 = vadd.f32 %v3054, %v3177
  %v3179 = vpop.f32.mrb[0].mxu0
  %3180 = vdwg.mxu0
  %v3181 = vmax.f32 %v3119, 0.0
  %v3182 = vmax.f32 %v3122, 0.0
  %v3183 = vmax.f32 %v3127, 0.0
  %v3184 = vmax.f32 %v3130, 0.0
  %v3185 = vmax.f32 %v3135, 0.0
  %v3186 = vmax.f32 %v3138, 0.0
  %v3187 = vmax.f32 %v3143, 0.0
  %v3188 = vmax.f32 %v3146, 0.0
  %v3189 = vmax.f32 %v3151, 0.0
  %v3190 = vmax.f32 %v3154, 0.0
  %v3191 = vmax.f32 %v3159, 0.0
  %v3192 = vmax.f32 %v3162, 0.0
  %v3193 = vmax.f32 %v3167, 0.0
  %v3194 = vmax.f32 %v3170, 0.0
  %v3195 = vmax.f32 %v3175, 0.0
  %v3196 = vmax.f32 %v3178, 0.0
  %v3197 = vld [vmem:[%s9] sm:$0xf]
  %v3198 = vld [vmem:[%s9 + $0x4] sm:$0xf]
  %v3199 = vld [vmem:[%s9 + $0x8] sm:$0xf]
  %v3200 = vld [vmem:[%s9 + $0xc] sm:$0xf]
  %v3201 = vpack.c.bf16 %v3182, %v3181
  %v3202 = vpack.c.bf16 %v3184, %v3183
  %v3203 = vpack.c.bf16 %v3186, %v3185
  %v3204 = vpack.c.bf16 %v3188, %v3187
  %v3205 = vpack.c.bf16 %v3190, %v3189
  %v3206 = vpack.c.bf16 %v3192, %v3191
  %v3207 = vpack.c.bf16 %v3194, %v3193
  %v3208 = vpack.c.bf16 %v3196, %v3195
  %v3209 = vld [vmem:[%s11 + $0x1] sm:$0x1]
  %v3210 = vlaneseq
  %v3211 = vshrl.u32 %v3210, 7
  %v3212 = vsub.s32 0, %v3211
  %v3213 = vrot.slane %v3209, %v3212
  %v3218 = vunpack.c.l.b16 %v3197
  %v3219 = vunpack.c.l.b16 %v3198
  %v3220 = vunpack.c.l.b16 %v3199
  %v3221 = vunpack.c.l.b16 %v3200
  %v3222 = vpack.c.b16 %v3219, %v3218
  %v3223 = vpack.c.b16 %v3221, %v3220
  %vm3226 = vcmask 261120
  %v3228 = vsel %vm3226, %v3201, 0
  %v3231 = vsel %vm3226, %v3202, 0
  %v3234 = vsel %vm3226, %v3203, 0
  %v3237 = vsel %vm3226, %v3204, 0
  %v3240 = vsel %vm3226, %v3205, 0
  %v3243 = vsel %vm3226, %v3206, 0
  %v3246 = vsel %vm3226, %v3207, 0
  %v3249 = vsel %vm3226, %v3208, 0
  %3251 = vmatprep.subr.bf16.mxu0 0
  %3252 = vmatpush1.bf16.msra.mxu0 %v3222
  %3253 = vmatprep.subr.bf16.mxu0 0
  %3254 = vmatpush1.bf16.msra.mxu0 %v3223
  %3255 = vmatprep.subr.bf16.mxu0 0
  %3256 = vmatpush1.bf16.msra.mxu0 0
  %3257 = vmatprep.subr.bf16.mxu0 0
  %3258 = vmatpush1.bf16.msra.mxu0 0
  %3259 = vmatprep.subr.bf16.mxu0 0
  %3260 = vmatpush1.bf16.msra.mxu0 0
  %3261 = vmatprep.subr.bf16.mxu0 0
  %3262 = vmatpush1.bf16.msra.mxu0 0
  %3263 = vmatprep.subr.bf16.mxu0 0
  %3264 = vmatpush1.bf16.msra.mxu0 0
  %3265 = vmatprep.subr.bf16.mxu0 0
  %3266 = vmatpush1.bf16.msra.mxu0 0
  %3267 = vmatprep.subr.bf16.mxu0 0
  %3268 = vmatpush1.bf16.msra.mxu0 0
  %3269 = vmatprep.subr.bf16.mxu0 0
  %3270 = vmatpush1.bf16.msra.mxu0 0
  %3271 = vmatprep.subr.bf16.mxu0 0
  %3272 = vmatpush1.bf16.msra.mxu0 0
  %3273 = vmatprep.subr.bf16.mxu0 0
  %3274 = vmatpush1.bf16.msra.mxu0 0
  %3275 = vmatprep.subr.bf16.mxu0 0
  %3276 = vmatpush1.bf16.msra.mxu0 0
  %3277 = vmatprep.subr.bf16.mxu0 0
  %3278 = vmatpush1.bf16.msra.mxu0 0
  %3279 = vmatprep.subr.bf16.mxu0 0
  %3280 = vmatpush1.bf16.msra.mxu0 0
  %3281 = vmatprep.subr.bf16.mxu0 0
  %3282 = vmatpush1.bf16.msra.mxu0 0
  %3283 = vmatprep.mubr.bf16.mxu0 0
  %3284 = vmatmul.mubr.bf16.gmra.mrb[0].mxu0 %v3228
  %v3285 = vpop.f32.mrb[0].mxu0
  %v3286 = vadd.f32 %v3213, %v3285
  %v3287 = vpop.f32.mrb[0].mxu0
  %v3288 = vpop.f32.mrb[0].mxu0
  %v3289 = vadd.f32 %v3213, %v3288
  %v3290 = vpop.f32.mrb[0].mxu0
  %3291 = vmatprep.mubr.bf16.mxu0 0
  %3292 = vmatmul.mubr.bf16.gmra.mrb[0].mxu0 %v3231
  %v3293 = vpop.f32.mrb[0].mxu0
  %v3294 = vadd.f32 %v3213, %v3293
  %v3295 = vpop.f32.mrb[0].mxu0
  %v3296 = vpop.f32.mrb[0].mxu0
  %v3297 = vadd.f32 %v3213, %v3296
  %v3298 = vpop.f32.mrb[0].mxu0
  %3299 = vmatprep.mubr.bf16.mxu0 0
  %3300 = vmatmul.mubr.bf16.gmra.mrb[0].mxu0 %v3234
  %v3301 = vpop.f32.mrb[0].mxu0
  %v3302 = vadd.f32 %v3213, %v3301
  %v3303 = vpop.f32.mrb[0].mxu0
  %v3304 = vpop.f32.mrb[0].mxu0
  %v3305 = vadd.f32 %v3213, %v3304
  %v3306 = vpop.f32.mrb[0].mxu0
  %3307 = vmatprep.mubr.bf16.mxu0 0
  %3308 = vmatmul.mubr.bf16.gmra.mrb[0].mxu0 %v3237
  %v3309 = vpop.f32.mrb[0].mxu0
  %v3310 = vadd.f32 %v3213, %v3309
  %v3311 = vpop.f32.mrb[0].mxu0
  %v3312 = vpop.f32.mrb[0].mxu0
  %v3313 = vadd.f32 %v3213, %v3312
  %v3314 = vpop.f32.mrb[0].mxu0
  %3315 = vmatprep.mubr.bf16.mxu0 0
  %3316 = vmatmul.mubr.bf16.gmra.mrb[0].mxu0 %v3240
  %v3317 = vpop.f32.mrb[0].mxu0
  %v3318 = vadd.f32 %v3213, %v3317
  %v3319 = vpop.f32.mrb[0].mxu0
  %v3320 = vpop.f32.mrb[0].mxu0
  %v3321 = vadd.f32 %v3213, %v3320
  %v3322 = vpop.f32.mrb[0].mxu0
  %3323 = vmatprep.mubr.bf16.mxu0 0
  %3324 = vmatmul.mubr.bf16.gmra.mrb[0].mxu0 %v3243
  %v3325 = vpop.f32.mrb[0].mxu0
  %v3326 = vadd.f32 %v3213, %v3325
  %v3327 = vpop.f32.mrb[0].mxu0
  %v3328 = vpop.f32.mrb[0].mxu0
  %v3329 = vadd.f32 %v3213, %v3328
  %v3330 = vpop.f32.mrb[0].mxu0
  %3331 = vmatprep.mubr.bf16.mxu0 0
  %3332 = vmatmul.mubr.bf16.gmra.mrb[0].mxu0 %v3246
  %v3333 = vpop.f32.mrb[0].mxu0
  %v3334 = vadd.f32 %v3213, %v3333
  %v3335 = vpop.f32.mrb[0].mxu0
  %v3336 = vpop.f32.mrb[0].mxu0
  %v3337 = vadd.f32 %v3213, %v3336
  %v3338 = vpop.f32.mrb[0].mxu0
  %3339 = vmatprep.mubr.bf16.mxu0 0
  %3340 = vmatmul.mubr.bf16.gmra.mrb[0].mxu0 %v3249
  %v3341 = vpop.f32.mrb[0].mxu0
  %v3342 = vadd.f32 %v3213, %v3341
  %v3343 = vpop.f32.mrb[0].mxu0
  %v3344 = vpop.f32.mrb[0].mxu0
  %v3345 = vadd.f32 %v3213, %v3344
  %v3346 = vpop.f32.mrb[0].mxu0
  %3347 = vdwg.mxu0
  %v3348 = vmax.f32 %v3286, 0.0
  %v3349 = vmax.f32 %v3289, 0.0
  %v3350 = vmax.f32 %v3294, 0.0
  %v3351 = vmax.f32 %v3297, 0.0
  %v3352 = vmax.f32 %v3302, 0.0
  %v3353 = vmax.f32 %v3305, 0.0
  %v3354 = vmax.f32 %v3310, 0.0
  %v3355 = vmax.f32 %v3313, 0.0
  %v3356 = vmax.f32 %v3318, 0.0
  %v3357 = vmax.f32 %v3321, 0.0
  %v3358 = vmax.f32 %v3326, 0.0
  %v3359 = vmax.f32 %v3329, 0.0
  %v3360 = vmax.f32 %v3334, 0.0
  %v3361 = vmax.f32 %v3337, 0.0
  %v3362 = vmax.f32 %v3342, 0.0
  %v3363 = vmax.f32 %v3345, 0.0
  %v3364 = vld [vmem:[%s10] sm:$0xf]
  %v3365 = vld [vmem:[%s10 + $0x4] sm:$0xf]
  %v3366 = vld [vmem:[%s10 + $0x8] sm:$0xf]
  %v3367 = vld [vmem:[%s10 + $0xc] sm:$0xf]
  %v3368 = vpack.c.bf16 %v3349, %v3348
  %v3369 = vpack.c.bf16 %v3351, %v3350
  %v3370 = vpack.c.bf16 %v3353, %v3352
  %v3371 = vpack.c.bf16 %v3355, %v3354
  %v3372 = vpack.c.bf16 %v3357, %v3356
  %v3373 = vpack.c.bf16 %v3359, %v3358
  %v3374 = vpack.c.bf16 %v3361, %v3360
  %v3375 = vpack.c.bf16 %v3363, %v3362
  %v3376 = vld [vmem:[%s12] sm:$0x1]
  %v3378 = vlaneseq
  %v3379 = vshrl.u32 %v3378, 7
  %v3380 = vsub.s32 0, %v3379
  %v3381 = vrot.slane %v3376, %v3380
  %v3387 = vunpack.c.l.b16 %v3364
  %v3388 = vunpack.c.l.b16 %v3365
  %v3389 = vunpack.c.l.b16 %v3366
  %v3390 = vunpack.c.l.b16 %v3367
  %v3391 = vpack.c.b16 %v3388, %v3387
  %v3392 = vpack.c.b16 %v3390, %v3389
  %v3396 = vsel %vm3226, %v3368, 0
  %v3399 = vsel %vm3226, %v3369, 0
  %v3402 = vsel %vm3226, %v3370, 0
  %v3405 = vsel %vm3226, %v3371, 0
  %v3408 = vsel %vm3226, %v3372, 0
  %v3411 = vsel %vm3226, %v3373, 0
  %v3414 = vsel %vm3226, %v3374, 0
  %v3417 = vsel %vm3226, %v3375, 0
  %3419 = vmatprep.subr.bf16.mxu0 0
  %3420 = vmatpush1.bf16.msra.mxu0 %v3391
  %3421 = vmatprep.subr.bf16.mxu0 0
  %3422 = vmatpush1.bf16.msra.mxu0 %v3392
  %3423 = vmatprep.subr.bf16.mxu0 0
  %3424 = vmatpush1.bf16.msra.mxu0 0
  %3425 = vmatprep.subr.bf16.mxu0 0
  %3426 = vmatpush1.bf16.msra.mxu0 0
  %3427 = vmatprep.subr.bf16.mxu0 0
  %3428 = vmatpush1.bf16.msra.mxu0 0
  %3429 = vmatprep.subr.bf16.mxu0 0
  %3430 = vmatpush1.bf16.msra.mxu0 0
  %3431 = vmatprep.subr.bf16.mxu0 0
  %3432 = vmatpush1.bf16.msra.mxu0 0
  %3433 = vmatprep.subr.bf16.mxu0 0
  %3434 = vmatpush1.bf16.msra.mxu0 0
  %3435 = vmatprep.subr.bf16.mxu0 0
  %3436 = vmatpush1.bf16.msra.mxu0 0
  %3437 = vmatprep.subr.bf16.mxu0 0
  %3438 = vmatpush1.bf16.msra.mxu0 0
  %3439 = vmatprep.subr.bf16.mxu0 0
  %3440 = vmatpush1.bf16.msra.mxu0 0
  %3441 = vmatprep.subr.bf16.mxu0 0
  %3442 = vmatpush1.bf16.msra.mxu0 0
  %3443 = vmatprep.subr.bf16.mxu0 0
  %3444 = vmatpush1.bf16.msra.mxu0 0
  %3445 = vmatprep.subr.bf16.mxu0 0
  %3446 = vmatpush1.bf16.msra.mxu0 0
  %3447 = vmatprep.subr.bf16.mxu0 0
  %3448 = vmatpush1.bf16.msra.mxu0 0
  %3449 = vmatprep.subr.bf16.mxu0 0
  %3450 = vmatpush1.bf16.msra.mxu0 0
  %3451 = vmatprep.mubr.bf16.mxu0 0
  %3452 = vmatmul.mubr.bf16.gmra.mrb[0].mxu0 %v3396
  %v3453 = vpop.f32.mrb[0].mxu0
  %v3454 = vadd.f32 %v3381, %v3453
  %v3455 = vpop.f32.mrb[0].mxu0
  %v3456 = vpop.f32.mrb[0].mxu0
  %v3457 = vadd.f32 %v3381, %v3456
  %v3458 = vpop.f32.mrb[0].mxu0
  %3459 = vmatprep.mubr.bf16.mxu0 0
  %3460 = vmatmul.mubr.bf16.gmra.mrb[0].mxu0 %v3399
  %v3461 = vpop.f32.mrb[0].mxu0
  %v3462 = vadd.f32 %v3381, %v3461
  %v3463 = vpop.f32.mrb[0].mxu0
  %v3464 = vpop.f32.mrb[0].mxu0
  %v3465 = vadd.f32 %v3381, %v3464
  %v3466 = vpop.f32.mrb[0].mxu0
  %3467 = vmatprep.mubr.bf16.mxu0 0
  %3468 = vmatmul.mubr.bf16.gmra.mrb[0].mxu0 %v3402
  %v3469 = vpop.f32.mrb[0].mxu0
  %v3470 = vadd.f32 %v3381, %v3469
  %v3471 = vpop.f32.mrb[0].mxu0
  %v3472 = vpop.f32.mrb[0].mxu0
  %v3473 = vadd.f32 %v3381, %v3472
  %v3474 = vpop.f32.mrb[0].mxu0
  %3475 = vmatprep.mubr.bf16.mxu0 0
  %3476 = vmatmul.mubr.bf16.gmra.mrb[0].mxu0 %v3405
  %v3477 = vpop.f32.mrb[0].mxu0
  %v3478 = vadd.f32 %v3381, %v3477
  %v3479 = vpop.f32.mrb[0].mxu0
  %v3480 = vpop.f32.mrb[0].mxu0
  %v3481 = vadd.f32 %v3381, %v3480
  %v3482 = vpop.f32.mrb[0].mxu0
  %3483 = vmatprep.mubr.bf16.mxu0 0
  %3484 = vmatmul.mubr.bf16.gmra.mrb[0].mxu0 %v3408
  %v3485 = vpop.f32.mrb[0].mxu0
  %v3486 = vadd.f32 %v3381, %v3485
  %v3487 = vpop.f32.mrb[0].mxu0
  %v3488 = vpop.f32.mrb[0].mxu0
  %v3489 = vadd.f32 %v3381, %v3488
  %v3490 = vpop.f32.mrb[0].mxu0
  %3491 = vmatprep.mubr.bf16.mxu0 0
  %3492 = vmatmul.mubr.bf16.gmra.mrb[0].mxu0 %v3411
  %v3493 = vpop.f32.mrb[0].mxu0
  %v3494 = vadd.f32 %v3381, %v3493
  %v3495 = vpop.f32.mrb[0].mxu0
  %v3496 = vpop.f32.mrb[0].mxu0
  %v3497 = vadd.f32 %v3381, %v3496
  %v3498 = vpop.f32.mrb[0].mxu0
  %3499 = vmatprep.mubr.bf16.mxu0 0
  %3500 = vmatmul.mubr.bf16.gmra.mrb[0].mxu0 %v3414
  %v3501 = vpop.f32.mrb[0].mxu0
  %v3502 = vadd.f32 %v3381, %v3501
  %v3503 = vpop.f32.mrb[0].mxu0
  %v3504 = vpop.f32.mrb[0].mxu0
  %v3505 = vadd.f32 %v3381, %v3504
  %v3506 = vpop.f32.mrb[0].mxu0
  %3507 = vmatprep.mubr.bf16.mxu0 0
  %3508 = vmatmul.mubr.bf16.gmra.mrb[0].mxu0 %v3417
  %v3509 = vpop.f32.mrb[0].mxu0
  %v3510 = vadd.f32 %v3381, %v3509
  %v3511 = vpop.f32.mrb[0].mxu0
  %v3512 = vpop.f32.mrb[0].mxu0
  %v3513 = vadd.f32 %v3381, %v3512
  %v3514 = vpop.f32.mrb[0].mxu0
  %3515 = vdwg.mxu0
  %vm3516 = vcmask 31744
  %3517 = vst.msk [vmem:[%s13] sm:$0xff] %vm3516, %v3454
  %3518 = vst.msk [vmem:[%s13 + $0x8] sm:$0xff] %vm3516, %v3457
  %3519 = vst.msk [vmem:[%s13 + $0x10] sm:$0xff] %vm3516, %v3462
  %3520 = vst.msk [vmem:[%s13 + $0x18] sm:$0xff] %vm3516, %v3465
  %3521 = vst.msk [vmem:[%s13 + $0x20] sm:$0xff] %vm3516, %v3470
  %3522 = vst.msk [vmem:[%s13 + $0x28] sm:$0xff] %vm3516, %v3473
  %3523 = vst.msk [vmem:[%s13 + $0x30] sm:$0xff] %vm3516, %v3478
  %3524 = vst.msk [vmem:[%s13 + $0x38] sm:$0xff] %vm3516, %v3481
  %3525 = vst.msk [vmem:[%s13 + $0x40] sm:$0xff] %vm3516, %v3486
  %3526 = vst.msk [vmem:[%s13 + $0x48] sm:$0xff] %vm3516, %v3489
  %3527 = vst.msk [vmem:[%s13 + $0x50] sm:$0xff] %vm3516, %v3494
  %3528 = vst.msk [vmem:[%s13 + $0x58] sm:$0xff] %vm3516, %v3497
  %3529 = vst.msk [vmem:[%s13 + $0x60] sm:$0xff] %vm3516, %v3502
  %3530 = vst.msk [vmem:[%s13 + $0x68] sm:$0xff] %vm3516, %v3505
  %3531 = vst.msk [vmem:[%s13 + $0x70] sm:$0xff] %vm3516, %v3510
  %3532 = vst.msk [vmem:[%s13 + $0x78] sm:$0xff] %vm3516, %v3513
  // Predicated region
  $region54: #{tpu_custom_call.1} parent=0 // pred_check
    _
  $region55: #{tpu_custom_call.1} parent=0 // pred_check_branch
    %3534 = sbr.rel (0) target = $region57
  $region56: #{tpu_custom_call.1} parent=0 // pred_region
    _
  $region57: #{tpu_custom_call.1} parent=0 // pred_fallthru
    _
  // Predicated region
  $region58: #{tpu_custom_call.1} parent=0 // pred_check
    _
  $region59: #{tpu_custom_call.1} parent=0 // pred_check_branch
    %3536 = sbr.rel (0) target = $region61
  $region60: #{tpu_custom_call.1} parent=0 // pred_region
    _
  $region61: #{tpu_custom_call.1} parent=0 // pred_fallthru
    _

</llo_original>
